<compile_context>
chip_gen: v7x
topology: tpu7x:2x2x1
jax: 0.10.0
libtpu: 0.0.40
codegen_flags: <defaults>
</compile_context>

<pallas_src>
from collections import namedtuple

import jax
import jax.numpy as jnp
from jax.experimental import pallas as pl
from jax.experimental.pallas import tpu as pltpu

# ----------------------------- configuration --------------------------------
IMG = 16          # input spatial size (H = W = 16)
CIN = 3           # input channels (RGB)
FEAT = 16         # backbone feature channels
MID = 16          # RPN mid channels (== FEAT, required by the fused conv path)
A = 3             # anchors per location (3 ratios, 1 scale)
NCLS = 3          # n_class including background (2 fg classes + bg)
HID = 64          # RoI head hidden size
R = 128           # number of RoIs kept (original sampling count)
POOL = 7          # RoI pooling output size
RPN_SIGMA = 3.0
ROI_SIGMA = 1.0

HW = IMG * IMG                  # 256 pixels (lane dimension in kernel A)
PADL = 128                      # lane halo on each side of the shift scratch
PDIM = POOL * POOL * FEAT       # 784 pooled features per RoI

LossTuple = namedtuple(
    "LossTuple",
    ["rpn_loc_loss", "rpn_cls_loss", "roi_loc_loss", "roi_cls_loss", "total_loss"],
)


def _vmem_spec():
    return pl.BlockSpec(memory_space=pltpu.MemorySpace.VMEM)


# ----------------------------- Pallas kernels --------------------------------


def _backbone_rpn_kernel(x_ref, w_ref, b_ref, t_ref, feat_ref, rpn_ref, pad_ref):
    """Fused backbone (conv1->conv2->rpn_conv) + RPN head + RPN losses.

    Layout: activations are (C=16, HW=256) f32/bf16 (lane-dense).
    w_ref: (64, 144) bf16  rows [0:16]=conv1.T, [16:32]=conv2.T,
                                [32:48]=rpn_conv.T, [48:64]=rpn_head.T (padded)
    b_ref: (16, 4)  f32    col k = bias column of stage k
    t_ref: (32, 256) f32   rows 0:3 pos3, 3:6 valid3, 6:18 pos12,
                                 18:30 gt_loc12, 30:32 w-boundary masks
    """
    # Zero only the two 128-lane halo bands of the bf16 shift scratch.
    pad_ref[:, :PADL] = jnp.zeros((FEAT, PADL), jnp.bfloat16)
    pad_ref[:, PADL + HW:] = jnp.zeros((FEAT, PADL), jnp.bfloat16)

    t = t_ref[...]                                    # (32, HW) f32
    bias = b_ref[...]                                 # (16, 4)  f32
    m0 = t[30:31, :].astype(jnp.bfloat16)             # kw=0 validity (1, HW)
    m2 = t[31:32, :].astype(jnp.bfloat16)             # kw=2 validity (1, HW)

    def conv3x3_relu(src_bf, w_rows, b_col):
        """3x3 'same' conv on a (C, HW) bf16 map -> (C, HW) f32 after ReLU.

        One im2col matmul per conv: the 9 shifted taps are stacked along
        sublanes (aligned) into a (9*FEAT, HW) bf16 operand; a single MXU
        matmul against the (FEAT, 9*FEAT) transposed weights does the rest.
        """
        pad_ref[:, PADL:PADL + HW] = src_bf           # aligned 256-lane store
        pad = pad_ref[...]                            # (FEAT, HW + 2*PADL) bf16
        taps = []
        for kh in range(3):
            for kw in range(3):
                off = (kh - 1) * IMG + (kw - 1)
                tap = pad[:, PADL + off:PADL + off + HW]
                if kw == 0:
                    tap = tap * m0
                elif kw == 2:
                    tap = tap * m2
                taps.append(tap)
        cols = jnp.concatenate(taps, axis=0)          # (9*FEAT, HW) bf16
        acc = jnp.dot(w_rows, cols, preferred_element_type=jnp.float32)
        return jnp.maximum(acc + b_col, 0.0)          # (FEAT, HW) f32

    h1 = conv3x3_relu(x_ref[...], w_ref[0:FEAT, :], bias[:, 0:1])
    feat = conv3x3_relu(h1.astype(jnp.bfloat16), w_ref[FEAT:2 * FEAT, :], bias[:, 1:2])
    feat_bf = feat.astype(jnp.bfloat16)
    feat_ref[...] = feat_bf                           # lane-dense bf16 output
    mid = conv3x3_relu(feat_bf, w_ref[2 * FEAT:3 * FEAT, :], bias[:, 2:3])

    # Fused RPN head: rows 0:A = fg-bg logits, rows A:5A = loc, row 5A = pad.
    head = jnp.dot(w_ref[3 * FEAT:4 * FEAT, 0:MID], mid.astype(jnp.bfloat16),
                   preferred_element_type=jnp.float32) + bias[:, 3:4]
    rpn_ref[...] = head                               # (16, 256) f32 lane-dense

    # ---- RPN losses -------------------------------------------------------
    d = head[0:A, :]                                  # (3, HW) fg - bg logits
    loc = head[A:5 * A, :]                            # (12, HW)
    pos3 = t[0:A, :]
    valid3 = t[A:2 * A, :]
    pos12 = t[2 * A:6 * A, :]
    gtloc = t[6 * A:10 * A, :]
    n_valid = jnp.maximum(jnp.sum(valid3), 1.0)

    # 2-class softmax CE == logistic loss on the folded fg-bg logit.
    sp = jnp.maximum(d, 0.0) + jnp.log(1.0 + jnp.exp(-jnp.abs(d)))
    rpn_cls_loss = jnp.sum(valid3 * (sp - pos3 * d)) / n_valid

    sigma2 = RPN_SIGMA * RPN_SIGMA
    diff = pos12 * (loc - gtloc)
    adiff = jnp.abs(diff)
    flag = (adiff < (1.0 / sigma2)).astype(jnp.float32)
    sl1 = flag * 0.5 * sigma2 * diff * diff + (1.0 - flag) * (adiff - 0.5 / sigma2)
    rpn_loc_loss = jnp.sum(sl1) / n_valid

    # Pack both scalars into the unused last row with a single vector store.
    lane = jax.lax.broadcasted_iota(jnp.int32, (1, 2), 1)
    rpn_ref[5 * A:5 * A + 1, 0:2] = jnp.where(lane == 0, rpn_loc_loss, rpn_cls_loss)


def fused_backbone_rpn(x_chw, wslab, bslab, targets):
    return pl.pallas_call(
        _backbone_rpn_kernel,
        out_shape=(jax.ShapeDtypeStruct((FEAT, HW), jnp.bfloat16),   # feat (C, HW)
                   jax.ShapeDtypeStruct((FEAT, HW), jnp.float32)),   # rpn + losses
        in_specs=[_vmem_spec()] * 4,
        out_specs=(_vmem_spec(), _vmem_spec()),
        scratch_shapes=[pltpu.VMEM((FEAT, HW + 2 * PADL), jnp.bfloat16)],
    )(x_chw, wslab, bslab, targets)


def _roi_head_loss_kernel(pooled_ref, w_ref, b_ref, t_ref, loss_ref):
    """Fused RoI head (fc1 -> fc2 -> cls/loc heads) + RoI losses.

    w_ref: (PDIM + 256, 128) bf16  rows [0:784]=fc1, [784:912]=fc2, [912:1040]=head
    b_ref: (3, 128) f32            rows = fc1_b, fc2_b, head_b (zero padded)
    t_ref: (R, 8) f32              cols 0:3 onehot, 3:7 gt_loc, 7:8 pos mask
    """
    bias = b_ref[...]
    f1 = jnp.maximum(
        jnp.dot(pooled_ref[...], w_ref[0:PDIM, :],
                preferred_element_type=jnp.float32) + bias[0:1, :], 0.0)
    f2 = jnp.maximum(
        jnp.dot(f1.astype(jnp.bfloat16), w_ref[PDIM:PDIM + 128, :],
                preferred_element_type=jnp.float32) + bias[1:2, :], 0.0)
    head = jnp.dot(f2.astype(jnp.bfloat16), w_ref[PDIM + 128:PDIM + 256, :],
                   preferred_element_type=jnp.float32) + bias[2:3, :]   # (R, 128)

    t = t_ref[...]
    onehot = t[:, 0:NCLS]
    gtloc = t[:, NCLS:NCLS + 4]
    pos = t[:, NCLS + 4:NCLS + 5]

    # RoI classification loss (softmax CE over NCLS, mean over R).
    cls = head[:, 0:NCLS]
    m = jnp.max(cls, axis=-1, keepdims=True)
    z = cls - m
    lse = jnp.log(jnp.sum(jnp.exp(z), axis=-1, keepdims=True))
    correct = jnp.sum(z * onehot, axis=-1, keepdims=True)
    roi_cls_loss = jnp.sum(lse - correct) / float(R)

    # Select the loc prediction of the assigned class via the one-hot mask.
    sel = jnp.zeros((R, 4), jnp.float32)
    for c in range(NCLS):
        sel = sel + onehot[:, c:c + 1] * head[:, NCLS + 4 * c:NCLS + 4 * (c + 1)]

    sigma2 = ROI_SIGMA * ROI_SIGMA
    diff = pos * (sel - gtloc)
    adiff = jnp.abs(diff)
    flag = (adiff < (1.0 / sigma2)).astype(jnp.float32)
    sl1 = flag * 0.5 * sigma2 * diff * diff + (1.0 - flag) * (adiff - 0.5 / sigma2)
    roi_loc_loss = jnp.sum(sl1) / float(R)

    lane = jax.lax.broadcasted_iota(jnp.int32, (1, 2), 1)
    loss_ref[...] = jnp.where(lane == 0, roi_loc_loss, roi_cls_loss)


def fused_roi_head(pooled, wslab, bslab, targets):
    return pl.pallas_call(
        _roi_head_loss_kernel,
        out_shape=jax.ShapeDtypeStruct((1, 2), jnp.float32),
        in_specs=[_vmem_spec()] * 4,
        out_specs=_vmem_spec(),
    )(pooled, wslab, bslab, targets)


# ----------------------------- plain-JAX glue --------------------------------


def pairwise_iou(a, b):
    tl = jnp.maximum(a[:, None, :2], b[None, :, :2])
    br = jnp.minimum(a[:, None, 2:], b[None, :, 2:])
    wh = jnp.clip(br - tl, 0.0)
    inter = wh[..., 0] * wh[..., 1]
    area_a = jnp.prod(jnp.clip(a[:, 2:] - a[:, :2], 0.0), axis=1)
    area_b = jnp.prod(jnp.clip(b[:, 2:] - b[:, :2], 0.0), axis=1)
    return inter / (area_a[:, None] + area_b[None, :] - inter + 1e-6)


def bbox2loc(src, dst):
    eps = 1e-6
    sw = jnp.maximum(src[:, 2] - src[:, 0], eps)
    sh = jnp.maximum(src[:, 3] - src[:, 1], eps)
    sx = src[:, 0] + 0.5 * sw
    sy = src[:, 1] + 0.5 * sh
    dw = jnp.maximum(dst[:, 2] - dst[:, 0], eps)
    dh = jnp.maximum(dst[:, 3] - dst[:, 1], eps)
    dx = dst[:, 0] + 0.5 * dw
    dy = dst[:, 1] + 0.5 * dh
    return jnp.stack(
        [(dx - sx) / sw, (dy - sy) / sh, jnp.log(dw / sw), jnp.log(dh / sh)], axis=1)


def loc2bbox(src, loc):
    sw = src[:, 2] - src[:, 0]
    sh = src[:, 3] - src[:, 1]
    sx = src[:, 0] + 0.5 * sw
    sy = src[:, 1] + 0.5 * sh
    dx, dy = loc[:, 0], loc[:, 1]
    dw = jnp.clip(loc[:, 2], -4.0, 4.0)
    dh = jnp.clip(loc[:, 3], -4.0, 4.0)
    cx = dx * sw + sx
    cy = dy * sh + sy
    w = jnp.exp(dw) * sw
    h = jnp.exp(dh) * sh
    return jnp.stack([cx - 0.5 * w, cy - 0.5 * h, cx + 0.5 * w, cy + 0.5 * h], axis=1)


def generate_anchors(H, W, stride=1.0, scale=4.0, ratios=(0.5, 1.0, 2.0)):
    sizes = []
    for r in ratios:
        h = scale * (r ** 0.5)
        w = scale / (r ** 0.5)
        sizes.append((w, h))
    sizes = jnp.asarray(sizes, jnp.float32)
    ys, xs = jnp.meshgrid(jnp.arange(H, dtype=jnp.float32),
                          jnp.arange(W, dtype=jnp.float32), indexing="ij")
    cx = (xs + 0.5) * stride
    cy = (ys + 0.5) * stride
    ctr = jnp.stack([cx, cy], axis=-1)
    ctr = jnp.broadcast_to(ctr[:, :, None, :], (H, W, sizes.shape[0], 2))
    wh = jnp.broadcast_to(sizes[None, None, :, :], (H, W, sizes.shape[0], 2))
    boxes = jnp.concatenate([ctr - 0.5 * wh, ctr + 0.5 * wh], axis=-1)
    return boxes.reshape(-1, 4)                          # (H*W*A, 4) xyxy


# ----------------------------- parameters ------------------------------------


def init_params(key):
    ks = jax.random.split(key, 9)
    w = lambda k, s: 0.05 * jax.random.normal(k, s, jnp.float32)
    return {
        "conv1_w": w(ks[0], (3, 3, CIN, FEAT)), "conv1_b": jnp.zeros((FEAT,), jnp.float32),
        "conv2_w": w(ks[1], (3, 3, FEAT, FEAT)), "conv2_b": jnp.zeros((FEAT,), jnp.float32),
        "rpn_conv_w": w(ks[2], (3, 3, FEAT, MID)), "rpn_conv_b": jnp.zeros((MID,), jnp.float32),
        "rpn_score_w": w(ks[3], (MID, 2 * A)), "rpn_score_b": jnp.zeros((2 * A,), jnp.float32),
        "rpn_loc_w": w(ks[4], (MID, 4 * A)), "rpn_loc_b": jnp.zeros((4 * A,), jnp.float32),
        "fc1_w": w(ks[5], (PDIM, HID)), "fc1_b": jnp.zeros((HID,), jnp.float32),
        "fc2_w": w(ks[6], (HID, HID)), "fc2_b": jnp.zeros((HID,), jnp.float32),
        "roi_cls_w": w(ks[7], (HID, NCLS)), "roi_cls_b": jnp.zeros((NCLS,), jnp.float32),
        "roi_loc_w": w(ks[8], (HID, 4 * NCLS)), "roi_loc_b": jnp.zeros((4 * NCLS,), jnp.float32),
    }


def prepare_params(p):
    """Pack / pad / bf16-cast the weights into the slabs the two kernels expect."""

    def conv_wT(w, cin):
        # (3,3,cin,FEAT) -> (FEAT, 9*FEAT): row = cout, col = (kh*3+kw)*FEAT + cin.
        w_t = jnp.transpose(w.astype(jnp.float32), (3, 0, 1, 2))        # (co,kh,kw,ci)
        w_p = jnp.zeros((FEAT, 3, 3, FEAT), jnp.float32).at[:, :, :, :cin].set(w_t)
        return w_p.reshape(FEAT, 9 * FEAT)

    # Fold the 2-way RPN score head into a single fg-bg logit (cols 0::2 = bg,
    # 1::2 = fg by this init's convention) and fuse with the loc head.
    w_d = p["rpn_score_w"][:, 1::2] - p["rpn_score_w"][:, 0::2]         # (MID, A)
    b_d = p["rpn_score_b"][1::2] - p["rpn_score_b"][0::2]               # (A,)
    head = jnp.concatenate([w_d, p["rpn_loc_w"]], axis=1)               # (MID, 5A)
    head_T = jnp.zeros((FEAT, 9 * FEAT), jnp.float32).at[:5 * A, :MID].set(head.T)

    wslab_a = jnp.concatenate(
        [conv_wT(p["conv1_w"], CIN), conv_wT(p["conv2_w"], FEAT),
         conv_wT(p["rpn_conv_w"], FEAT), head_T], axis=0).astype(jnp.bfloat16)

    head_b = jnp.concatenate([b_d, p["rpn_loc_b"], jnp.zeros((1,), jnp.float32)])
    bslab_a = jnp.stack([p["conv1_b"], p["conv2_b"], p["rpn_conv_b"], head_b], axis=1)

    # Per-pixel w-boundary validity masks for the kw=0 / kw=2 conv taps.
    w_idx = jnp.arange(HW) % IMG
    wmask = jnp.stack([(w_idx >= 1).astype(jnp.float32),
                       (w_idx <= IMG - 2).astype(jnp.float32)], axis=0)  # (2, HW)

    # RoI head slab: fc1 / fc2 / cls+loc heads, padded to 128 lanes / 128 K.
    fc1 = jnp.zeros((PDIM, 128), jnp.float32).at[:, :HID].set(p["fc1_w"])
    fc2 = jnp.zeros((128, 128), jnp.float32).at[:HID, :HID].set(p["fc2_w"])
    rhead = jnp.concatenate([p["roi_cls_w"], p["roi_loc_w"]], axis=1)    # (HID, 15)
    rheadp = jnp.zeros((128, 128), jnp.float32).at[:HID, :5 * NCLS].set(rhead)
    wslab_b = jnp.concatenate([fc1, fc2, rheadp], axis=0).astype(jnp.bfloat16)

    rhead_b = jnp.concatenate([p["roi_cls_b"], p["roi_loc_b"]])
    bslab_b = jnp.zeros((3, 128), jnp.float32)
    bslab_b = (bslab_b.at[0, :HID].set(p["fc1_b"])
                      .at[1, :HID].set(p["fc2_b"])
                      .at[2, :5 * NCLS].set(rhead_b))

    return {"anchors": generate_anchors(IMG, IMG), "wmask": wmask,
            "wslab_a": wslab_a, "bslab_a": bslab_a,
            "wslab_b": wslab_b, "bslab_b": bslab_b}


# ----------------------------- forward ---------------------------------------


@jax.jit
def _faster_rcnn_forward(prepped, x, gt_boxes, labels):
    H = W = IMG

    # Backbone input in channel-major (C, HW) layout, channels zero-padded to FEAT.
    x_chw = jnp.zeros((FEAT, HW), jnp.float32).at[:CIN, :].set(
        x[0].astype(jnp.float32).reshape(CIN, HW)).astype(jnp.bfloat16)

    gt = gt_boxes[0].astype(jnp.float32)                                # (K, 4)
    gt_lab = labels[0].astype(jnp.int32)                                # (K,)
    anchors = prepped["anchors"]                                        # (HW*A, 4)

    # ---- AnchorTargetCreator (glue) ----------------------------------------
    # TODO(synk): no 256-anchor random pos/neg subsampling, no out-of-image filter.
    ious = pairwise_iou(anchors, gt)
    max_iou = jnp.max(ious, axis=1)
    argmax = jnp.argmax(ious, axis=1)
    gt_max = jnp.max(ious, axis=0)
    anc_label = -jnp.ones((anchors.shape[0],), jnp.int32)
    anc_label = jnp.where(max_iou < 0.3, 0, anc_label)
    is_gt_argmax = jnp.any((ious >= (gt_max[None, :] - 1e-6)) & (gt_max[None, :] > 0.0), axis=1)
    anc_label = jnp.where(is_gt_argmax, 1, anc_label)
    anc_label = jnp.where(max_iou >= 0.7, 1, anc_label)
    gt_anchor_loc = bbox2loc(anchors, gt[argmax])                       # (HW*A, 4)

    lab3 = anc_label.reshape(HW, A).T                                   # (A, HW)
    pos3 = (lab3 == 1).astype(jnp.float32)
    valid3 = (lab3 >= 0).astype(jnp.float32)
    pos12 = jnp.repeat(pos3, 4, axis=0)                                 # (4A, HW)
    gtloc12 = gt_anchor_loc.reshape(HW, A, 4).transpose(1, 2, 0).reshape(4 * A, HW)
    targets_a = jnp.concatenate([pos3, valid3, pos12, gtloc12, prepped["wmask"]], axis=0)

    # ---- fused Pallas kernel A: backbone + RPN + RPN losses ----------------
    feat_bf, rpn_plus = fused_backbone_rpn(
        x_chw, prepped["wslab_a"], prepped["bslab_a"], targets_a)
    rpn_loc_loss = rpn_plus[5 * A, 0]
    rpn_cls_loss = rpn_plus[5 * A, 1]

    rpn_t = rpn_plus[:5 * A, :].T                                       # (HW, 15)
    d_score = rpn_t[:, :A].reshape(HW * A)                              # fg - bg logit
    rpn_loc = rpn_t[:, A:].reshape(HW * A, 4)

    # ---- ProposalCreator (glue) ---------------------------------------------
    # TODO(synk): NMS has no clean Pallas equivalent; rank by the fg-bg logit
    #             (monotonic in the softmax fg probability) and keep the top R.
    rois_all = loc2bbox(anchors, rpn_loc)
    rois_all = jnp.stack(
        [jnp.clip(rois_all[:, 0], 0.0, W), jnp.clip(rois_all[:, 1], 0.0, H),
         jnp.clip(rois_all[:, 2], 0.0, W), jnp.clip(rois_all[:, 3], 0.0, H)], axis=1)
    _, top_idx = jax.lax.top_k(d_score, R)
    rois = rois_all[top_idx]
    rois = jnp.stack(
        [rois[:, 0], rois[:, 1],
         jnp.maximum(rois[:, 2], rois[:, 0] + 1.0),
         jnp.maximum(rois[:, 3], rois[:, 1] + 1.0)], axis=1)

    # ---- ProposalTargetCreator (glue) ---------------------------------------
    # TODO(synk): no random fg/bg balancing of the 128 sampled RoIs.
    ious_r = pairwise_iou(rois, gt)
    max_iou_r = jnp.max(ious_r, axis=1)
    argmax_r = jnp.argmax(ious_r, axis=1)
    roi_label = jnp.where(max_iou_r >= 0.5, gt_lab[argmax_r] + 1, 0).astype(jnp.int32)
    gt_roi_loc = bbox2loc(rois, gt[argmax_r])
    loc_std = jnp.asarray([0.1, 0.1, 0.2, 0.2], jnp.float32)
    gt_roi_loc = gt_roi_loc / loc_std[None, :]

    # ---- RoI pooling (nearest-neighbour 7x7 sampling, glue) ------------------
    # TODO(synk): data-dependent gather kept in XLA; an in-kernel scalar-prefetch
    #             gather would need a 49*R-step scalar loop for marginal gain.
    feat_chw = feat_bf.reshape(FEAT, H, W)

    def grid_coords(lo, hi, limit):
        tt = (jnp.arange(POOL, dtype=jnp.float32) + 0.5) / POOL
        c = lo[:, None] + tt[None, :] * (hi - lo)[:, None]
        return jnp.clip(jnp.floor(c).astype(jnp.int32), 0, limit - 1)

    xs = grid_coords(rois[:, 0], rois[:, 2], W)                         # (R, 7)
    ys = grid_coords(rois[:, 1], rois[:, 3], H)                         # (R, 7)
    gathered = feat_chw[:, ys[:, :, None], xs[:, None, :]]              # (FEAT, R, 7, 7)
    pooled = jnp.transpose(gathered, (1, 0, 2, 3)).reshape(R, PDIM)     # (R, 784) bf16

    onehot = (roi_label[:, None] == jnp.arange(NCLS, dtype=jnp.int32)[None, :]).astype(jnp.float32)
    roi_pos = (roi_label > 0).astype(jnp.float32)[:, None]
    targets_b = jnp.concatenate([onehot, gt_roi_loc, roi_pos], axis=1)  # (R, 8)

    # ---- fused Pallas kernel B: RoI head + RoI losses ------------------------
    loss_b = fused_roi_head(
        pooled, prepped["wslab_b"], prepped["bslab_b"], targets_b)
    roi_loc_loss = loss_b[0, 0]
    roi_cls_loss = loss_b[0, 1]

    total = rpn_loc_loss + rpn_cls_loss + roi_loc_loss + roi_cls_loss
    return LossTuple(rpn_loc_loss, rpn_cls_loss, roi_loc_loss, roi_cls_loss, total)


class FasterRcnn:
    """Minimal Faster R-CNN that returns the training losses (LossTuple)."""

    def __init__(self, params):
        self.params = params
        self.prepped = prepare_params(params)

    def __call__(self, x, gt_boxes, labels):
        return _faster_rcnn_forward(self.prepped, x, gt_boxes, labels)


class FasterRcnnTrainer:
    """JAX/Pallas port of the PyTorch FasterRcnnTrainer wrapper (forward only)."""

    def __init__(self, faster_rcnn):
        self.faster_rcnn = faster_rcnn
        # TODO(synk): get_optimizer / train_step / scale_lr / save / load are
        #             PyTorch training infrastructure, not forward compute.

    def forward(self, x, gt_boxes, labels):
        return self.faster_rcnn(x, gt_boxes, labels)

    __call__ = forward


# ----------------------------- main ------------------------------------------

if __name__ == "__main__":
    key = jax.random.PRNGKey(0)
    k_x, k_p = jax.random.split(key)

    x = jax.random.normal(k_x, (1, CIN, IMG, IMG), jnp.float32)          # NCHW
    gt_boxes = jnp.asarray([[[2.0, 3.0, 9.0, 11.0],
                             [6.0, 5.0, 14.0, 13.0]]], jnp.float32)      # (1, 2, 4) xyxy
    labels = jnp.asarray([[0, 1]], jnp.int32)                            # (1, 2)

    params = init_params(k_p)
    trainer = FasterRcnnTrainer(FasterRcnn(params))

    losses = trainer.forward(x, gt_boxes, labels)
    jax.block_until_ready(losses.total_loss)

    assert bool(jnp.isfinite(losses.total_loss)), "non-finite total loss"
    print("KERNEL_OK")
</pallas_src>

<mosaic_0001>
module attributes {stable_mosaic.version = 11 : i64} {
  func.func @_backbone_rpn_kernel(%arg0: memref<16x256xbf16, #tpu.memory_space<vmem>>, %arg1: memref<64x144xbf16, #tpu.memory_space<vmem>>, %arg2: memref<16x4xf32, #tpu.memory_space<vmem>>, %arg3: memref<32x256xf32, #tpu.memory_space<vmem>>, %arg4: memref<16x256xbf16, #tpu.memory_space<vmem>>, %arg5: memref<16x256xf32, #tpu.memory_space<vmem>>, %arg6: memref<16x512xbf16, #tpu.memory_space<vmem>>) attributes {dimension_semantics = [], scalar_prefetch = 0 : i64, scratch_operands = 1 : i64, tpu.core_type = #tpu.core_type<tc>} {
    %cst = arith.constant 0.000000e+00 : bf16
    %0 = vector.broadcast %cst : bf16 to vector<16x128xbf16>
    %c0 = arith.constant 0 : index
    %c0_0 = arith.constant 0 : index
    %1 = vector.load %arg6[%c0, %c0_0] : memref<16x512xbf16, #tpu.memory_space<vmem>>, vector<16x128xbf16>
    tpu.vector_store %arg6[%c0, %c0_0], %0 {strides = array<i32>} : memref<16x512xbf16, #tpu.memory_space<vmem>>, vector<16x128xbf16>,
    %cst_1 = arith.constant 0.000000e+00 : bf16
    %2 = vector.broadcast %cst_1 : bf16 to vector<16x128xbf16>
    %c0_2 = arith.constant 0 : index
    %c384 = arith.constant 384 : index
    %3 = vector.load %arg6[%c0_2, %c384] : memref<16x512xbf16, #tpu.memory_space<vmem>>, vector<16x128xbf16>
    tpu.vector_store %arg6[%c0_2, %c384], %2 {strides = array<i32>} : memref<16x512xbf16, #tpu.memory_space<vmem>>, vector<16x128xbf16>,
    %c0_3 = arith.constant 0 : index
    %c0_4 = arith.constant 0 : index
    %4 = vector.load %arg3[%c0_3, %c0_4] : memref<32x256xf32, #tpu.memory_space<vmem>>, vector<32x256xf32>
    %c0_5 = arith.constant 0 : index
    %c0_6 = arith.constant 0 : index
    %5 = vector.load %arg2[%c0_5, %c0_6] : memref<16x4xf32, #tpu.memory_space<vmem>>, vector<16x4xf32>
    %6 = vector.extract_strided_slice %4 {offsets = [30, 0], sizes = [1, 256], strides = [1, 1]} : vector<32x256xf32> to vector<1x256xf32>
    %7 = arith.truncf %6 : vector<1x256xf32> to vector<1x256xbf16>
    %8 = vector.extract_strided_slice %4 {offsets = [31, 0], sizes = [1, 256], strides = [1, 1]} : vector<32x256xf32> to vector<1x256xf32>
    %9 = arith.truncf %8 : vector<1x256xf32> to vector<1x256xbf16>
    %c0_7 = arith.constant 0 : index
    %c0_8 = arith.constant 0 : index
    %10 = vector.load %arg0[%c0_7, %c0_8] : memref<16x256xbf16, #tpu.memory_space<vmem>>, vector<16x256xbf16>
    %c0_9 = arith.constant 0 : index
    %c0_10 = arith.constant 0 : index
    %11 = vector.load %arg1[%c0_9, %c0_10] : memref<64x144xbf16, #tpu.memory_space<vmem>>, vector<16x144xbf16>
    %12 = vector.extract_strided_slice %5 {offsets = [0, 0], sizes = [16, 1], strides = [1, 1]} : vector<16x4xf32> to vector<16x1xf32>
    %c0_11 = arith.constant 0 : index
    %c128 = arith.constant 128 : index
    %13 = vector.load %arg6[%c0_11, %c128] : memref<16x512xbf16, #tpu.memory_space<vmem>>, vector<16x256xbf16>
    tpu.vector_store %arg6[%c0_11, %c128], %10 {strides = array<i32>} : memref<16x512xbf16, #tpu.memory_space<vmem>>, vector<16x256xbf16>,
    %c0_12 = arith.constant 0 : index
    %c0_13 = arith.constant 0 : index
    %14 = vector.load %arg6[%c0_12, %c0_13] : memref<16x512xbf16, #tpu.memory_space<vmem>>, vector<16x512xbf16>
    %15 = vector.extract_strided_slice %14 {offsets = [0, 111], sizes = [16, 256], strides = [1, 1]} : vector<16x512xbf16> to vector<16x256xbf16>
    %16 = vector.broadcast %7 : vector<1x256xbf16> to vector<16x256xbf16>
    %17 = arith.mulf %15, %16 : vector<16x256xbf16>
    %18 = vector.extract_strided_slice %14 {offsets = [0, 112], sizes = [16, 256], strides = [1, 1]} : vector<16x512xbf16> to vector<16x256xbf16>
    %19 = vector.extract_strided_slice %14 {offsets = [0, 113], sizes = [16, 256], strides = [1, 1]} : vector<16x512xbf16> to vector<16x256xbf16>
    %20 = vector.broadcast %9 : vector<1x256xbf16> to vector<16x256xbf16>
    %21 = arith.mulf %19, %20 : vector<16x256xbf16>
    %22 = vector.extract_strided_slice %14 {offsets = [0, 127], sizes = [16, 256], strides = [1, 1]} : vector<16x512xbf16> to vector<16x256xbf16>
    %23 = vector.broadcast %7 : vector<1x256xbf16> to vector<16x256xbf16>
    %24 = arith.mulf %22, %23 : vector<16x256xbf16>
    %25 = vector.extract_strided_slice %14 {offsets = [0, 128], sizes = [16, 256], strides = [1, 1]} : vector<16x512xbf16> to vector<16x256xbf16>
    %26 = vector.extract_strided_slice %14 {offsets = [0, 129], sizes = [16, 256], strides = [1, 1]} : vector<16x512xbf16> to vector<16x256xbf16>
    %27 = vector.broadcast %9 : vector<1x256xbf16> to vector<16x256xbf16>
    %28 = arith.mulf %26, %27 : vector<16x256xbf16>
    %29 = vector.extract_strided_slice %14 {offsets = [0, 143], sizes = [16, 256], strides = [1, 1]} : vector<16x512xbf16> to vector<16x256xbf16>
    %30 = vector.broadcast %7 : vector<1x256xbf16> to vector<16x256xbf16>
    %31 = arith.mulf %29, %30 : vector<16x256xbf16>
    %32 = vector.extract_strided_slice %14 {offsets = [0, 144], sizes = [16, 256], strides = [1, 1]} : vector<16x512xbf16> to vector<16x256xbf16>
    %33 = vector.extract_strided_slice %14 {offsets = [0, 145], sizes = [16, 256], strides = [1, 1]} : vector<16x512xbf16> to vector<16x256xbf16>
    %34 = vector.broadcast %9 : vector<1x256xbf16> to vector<16x256xbf16>
    %35 = arith.mulf %33, %34 : vector<16x256xbf16>
    %36 = tpu.concatenate %17, %18, %21, %24, %25, %28, %31, %32, %35 in 0 : vector<16x256xbf16>, vector<16x256xbf16>, vector<16x256xbf16>, vector<16x256xbf16>, vector<16x256xbf16>, vector<16x256xbf16>, vector<16x256xbf16>, vector<16x256xbf16>, vector<16x256xbf16> -> vector<144x256xbf16>
    %cst_14 = arith.constant dense<0.000000e+00> : vector<16x256xf32>
    %37 = tpu.matmul %11, %36, %cst_14 {dimension_numbers = #tpu.dot_dimension_numbers<[1], [0], [0], [1], [0, 0, 1, 1], [], []>} : vector<16x144xbf16>, vector<144x256xbf16>, vector<16x256xf32> -> vector<16x256xf32>
    %38 = vector.broadcast %12 : vector<16x1xf32> to vector<16x256xf32>
    %39 = arith.addf %37, %38 : vector<16x256xf32>
    %cst_15 = arith.constant 0.000000e+00 : f32
    %40 = vector.broadcast %cst_15 : f32 to vector<16x256xf32>
    %41 = arith.maximumf %39, %40 : vector<16x256xf32>
    %42 = arith.truncf %41 : vector<16x256xf32> to vector<16x256xbf16>
    %c16 = arith.constant 16 : index
    %c0_16 = arith.constant 0 : index
    %43 = vector.load %arg1[%c16, %c0_16] : memref<64x144xbf16, #tpu.memory_space<vmem>>, vector<16x144xbf16>
    %44 = vector.extract_strided_slice %5 {offsets = [0, 1], sizes = [16, 1], strides = [1, 1]} : vector<16x4xf32> to vector<16x1xf32>
    %c0_17 = arith.constant 0 : index
    %c128_18 = arith.constant 128 : index
    %45 = vector.load %arg6[%c0_17, %c128_18] : memref<16x512xbf16, #tpu.memory_space<vmem>>, vector<16x256xbf16>
    tpu.vector_store %arg6[%c0_17, %c128_18], %42 {strides = array<i32>} : memref<16x512xbf16, #tpu.memory_space<vmem>>, vector<16x256xbf16>,
    %c0_19 = arith.constant 0 : index
    %c0_20 = arith.constant 0 : index
    %46 = vector.load %arg6[%c0_19, %c0_20] : memref<16x512xbf16, #tpu.memory_space<vmem>>, vector<16x512xbf16>
    %47 = vector.extract_strided_slice %46 {offsets = [0, 111], sizes = [16, 256], strides = [1, 1]} : vector<16x512xbf16> to vector<16x256xbf16>
    %48 = vector.broadcast %7 : vector<1x256xbf16> to vector<16x256xbf16>
    %49 = arith.mulf %47, %48 : vector<16x256xbf16>
    %50 = vector.extract_strided_slice %46 {offsets = [0, 112], sizes = [16, 256], strides = [1, 1]} : vector<16x512xbf16> to vector<16x256xbf16>
    %51 = vector.extract_strided_slice %46 {offsets = [0, 113], sizes = [16, 256], strides = [1, 1]} : vector<16x512xbf16> to vector<16x256xbf16>
    %52 = vector.broadcast %9 : vector<1x256xbf16> to vector<16x256xbf16>
    %53 = arith.mulf %51, %52 : vector<16x256xbf16>
    %54 = vector.extract_strided_slice %46 {offsets = [0, 127], sizes = [16, 256], strides = [1, 1]} : vector<16x512xbf16> to vector<16x256xbf16>
    %55 = vector.broadcast %7 : vector<1x256xbf16> to vector<16x256xbf16>
    %56 = arith.mulf %54, %55 : vector<16x256xbf16>
    %57 = vector.extract_strided_slice %46 {offsets = [0, 128], sizes = [16, 256], strides = [1, 1]} : vector<16x512xbf16> to vector<16x256xbf16>
    %58 = vector.extract_strided_slice %46 {offsets = [0, 129], sizes = [16, 256], strides = [1, 1]} : vector<16x512xbf16> to vector<16x256xbf16>
    %59 = vector.broadcast %9 : vector<1x256xbf16> to vector<16x256xbf16>
    %60 = arith.mulf %58, %59 : vector<16x256xbf16>
    %61 = vector.extract_strided_slice %46 {offsets = [0, 143], sizes = [16, 256], strides = [1, 1]} : vector<16x512xbf16> to vector<16x256xbf16>
    %62 = vector.broadcast %7 : vector<1x256xbf16> to vector<16x256xbf16>
    %63 = arith.mulf %61, %62 : vector<16x256xbf16>
    %64 = vector.extract_strided_slice %46 {offsets = [0, 144], sizes = [16, 256], strides = [1, 1]} : vector<16x512xbf16> to vector<16x256xbf16>
    %65 = vector.extract_strided_slice %46 {offsets = [0, 145], sizes = [16, 256], strides = [1, 1]} : vector<16x512xbf16> to vector<16x256xbf16>
    %66 = vector.broadcast %9 : vector<1x256xbf16> to vector<16x256xbf16>
    %67 = arith.mulf %65, %66 : vector<16x256xbf16>
    %68 = tpu.concatenate %49, %50, %53, %56, %57, %60, %63, %64, %67 in 0 : vector<16x256xbf16>, vector<16x256xbf16>, vector<16x256xbf16>, vector<16x256xbf16>, vector<16x256xbf16>, vector<16x256xbf16>, vector<16x256xbf16>, vector<16x256xbf16>, vector<16x256xbf16> -> vector<144x256xbf16>
    %cst_21 = arith.constant dense<0.000000e+00> : vector<16x256xf32>
    %69 = tpu.matmul %43, %68, %cst_21 {dimension_numbers = #tpu.dot_dimension_numbers<[1], [0], [0], [1], [0, 0, 1, 1], [], []>} : vector<16x144xbf16>, vector<144x256xbf16>, vector<16x256xf32> -> vector<16x256xf32>
    %70 = vector.broadcast %44 : vector<16x1xf32> to vector<16x256xf32>
    %71 = arith.addf %69, %70 : vector<16x256xf32>
    %cst_22 = arith.constant 0.000000e+00 : f32
    %72 = vector.broadcast %cst_22 : f32 to vector<16x256xf32>
    %73 = arith.maximumf %71, %72 : vector<16x256xf32>
    %74 = arith.truncf %73 : vector<16x256xf32> to vector<16x256xbf16>
    %c0_23 = arith.constant 0 : index
    %c0_24 = arith.constant 0 : index
    %75 = vector.load %arg4[%c0_23, %c0_24] : memref<16x256xbf16, #tpu.memory_space<vmem>>, vector<16x256xbf16>
    tpu.vector_store %arg4[%c0_23, %c0_24], %74 {strides = array<i32>} : memref<16x256xbf16, #tpu.memory_space<vmem>>, vector<16x256xbf16>,
    %c32 = arith.constant 32 : index
    %c0_25 = arith.constant 0 : index
    %76 = vector.load %arg1[%c32, %c0_25] : memref<64x144xbf16, #tpu.memory_space<vmem>>, vector<16x144xbf16>
    %77 = vector.extract_strided_slice %5 {offsets = [0, 2], sizes = [16, 1], strides = [1, 1]} : vector<16x4xf32> to vector<16x1xf32>
    %c0_26 = arith.constant 0 : index
    %c128_27 = arith.constant 128 : index
    %78 = vector.load %arg6[%c0_26, %c128_27] : memref<16x512xbf16, #tpu.memory_space<vmem>>, vector<16x256xbf16>
    tpu.vector_store %arg6[%c0_26, %c128_27], %74 {strides = array<i32>} : memref<16x512xbf16, #tpu.memory_space<vmem>>, vector<16x256xbf16>,
    %c0_28 = arith.constant 0 : index
    %c0_29 = arith.constant 0 : index
    %79 = vector.load %arg6[%c0_28, %c0_29] : memref<16x512xbf16, #tpu.memory_space<vmem>>, vector<16x512xbf16>
    %80 = vector.extract_strided_slice %79 {offsets = [0, 111], sizes = [16, 256], strides = [1, 1]} : vector<16x512xbf16> to vector<16x256xbf16>
    %81 = vector.broadcast %7 : vector<1x256xbf16> to vector<16x256xbf16>
    %82 = arith.mulf %80, %81 : vector<16x256xbf16>
    %83 = vector.extract_strided_slice %79 {offsets = [0, 112], sizes = [16, 256], strides = [1, 1]} : vector<16x512xbf16> to vector<16x256xbf16>
    %84 = vector.extract_strided_slice %79 {offsets = [0, 113], sizes = [16, 256], strides = [1, 1]} : vector<16x512xbf16> to vector<16x256xbf16>
    %85 = vector.broadcast %9 : vector<1x256xbf16> to vector<16x256xbf16>
    %86 = arith.mulf %84, %85 : vector<16x256xbf16>
    %87 = vector.extract_strided_slice %79 {offsets = [0, 127], sizes = [16, 256], strides = [1, 1]} : vector<16x512xbf16> to vector<16x256xbf16>
    %88 = vector.broadcast %7 : vector<1x256xbf16> to vector<16x256xbf16>
    %89 = arith.mulf %87, %88 : vector<16x256xbf16>
    %90 = vector.extract_strided_slice %79 {offsets = [0, 128], sizes = [16, 256], strides = [1, 1]} : vector<16x512xbf16> to vector<16x256xbf16>
    %91 = vector.extract_strided_slice %79 {offsets = [0, 129], sizes = [16, 256], strides = [1, 1]} : vector<16x512xbf16> to vector<16x256xbf16>
    %92 = vector.broadcast %9 : vector<1x256xbf16> to vector<16x256xbf16>
    %93 = arith.mulf %91, %92 : vector<16x256xbf16>
    %94 = vector.extract_strided_slice %79 {offsets = [0, 143], sizes = [16, 256], strides = [1, 1]} : vector<16x512xbf16> to vector<16x256xbf16>
    %95 = vector.broadcast %7 : vector<1x256xbf16> to vector<16x256xbf16>
    %96 = arith.mulf %94, %95 : vector<16x256xbf16>
    %97 = vector.extract_strided_slice %79 {offsets = [0, 144], sizes = [16, 256], strides = [1, 1]} : vector<16x512xbf16> to vector<16x256xbf16>
    %98 = vector.extract_strided_slice %79 {offsets = [0, 145], sizes = [16, 256], strides = [1, 1]} : vector<16x512xbf16> to vector<16x256xbf16>
    %99 = vector.broadcast %9 : vector<1x256xbf16> to vector<16x256xbf16>
    %100 = arith.mulf %98, %99 : vector<16x256xbf16>
    %101 = tpu.concatenate %82, %83, %86, %89, %90, %93, %96, %97, %100 in 0 : vector<16x256xbf16>, vector<16x256xbf16>, vector<16x256xbf16>, vector<16x256xbf16>, vector<16x256xbf16>, vector<16x256xbf16>, vector<16x256xbf16>, vector<16x256xbf16>, vector<16x256xbf16> -> vector<144x256xbf16>
    %cst_30 = arith.constant dense<0.000000e+00> : vector<16x256xf32>
    %102 = tpu.matmul %76, %101, %cst_30 {dimension_numbers = #tpu.dot_dimension_numbers<[1], [0], [0], [1], [0, 0, 1, 1], [], []>} : vector<16x144xbf16>, vector<144x256xbf16>, vector<16x256xf32> -> vector<16x256xf32>
    %103 = vector.broadcast %77 : vector<16x1xf32> to vector<16x256xf32>
    %104 = arith.addf %102, %103 : vector<16x256xf32>
    %cst_31 = arith.constant 0.000000e+00 : f32
    %105 = vector.broadcast %cst_31 : f32 to vector<16x256xf32>
    %106 = arith.maximumf %104, %105 : vector<16x256xf32>
    %c48 = arith.constant 48 : index
    %c0_32 = arith.constant 0 : index
    %107 = vector.load %arg1[%c48, %c0_32] : memref<64x144xbf16, #tpu.memory_space<vmem>>, vector<16x16xbf16>
    %108 = arith.truncf %106 : vector<16x256xf32> to vector<16x256xbf16>
    %cst_33 = arith.constant dense<0.000000e+00> : vector<16x256xf32>
    %109 = tpu.matmul %107, %108, %cst_33 {dimension_numbers = #tpu.dot_dimension_numbers<[1], [0], [0], [1], [0, 0, 1, 1], [], []>} : vector<16x16xbf16>, vector<16x256xbf16>, vector<16x256xf32> -> vector<16x256xf32>
    %110 = vector.extract_strided_slice %5 {offsets = [0, 3], sizes = [16, 1], strides = [1, 1]} : vector<16x4xf32> to vector<16x1xf32>
    %111 = vector.broadcast %110 : vector<16x1xf32> to vector<16x256xf32>
    %112 = arith.addf %109, %111 : vector<16x256xf32>
    %c0_34 = arith.constant 0 : index
    %c0_35 = arith.constant 0 : index
    %113 = vector.load %arg5[%c0_34, %c0_35] : memref<16x256xf32, #tpu.memory_space<vmem>>, vector<16x256xf32>
    tpu.vector_store %arg5[%c0_34, %c0_35], %112 {strides = array<i32>} : memref<16x256xf32, #tpu.memory_space<vmem>>, vector<16x256xf32>,
    %114 = vector.extract_strided_slice %112 {offsets = [0, 0], sizes = [3, 256], strides = [1, 1]} : vector<16x256xf32> to vector<3x256xf32>
    %115 = vector.extract_strided_slice %112 {offsets = [3, 0], sizes = [12, 256], strides = [1, 1]} : vector<16x256xf32> to vector<12x256xf32>
    %116 = vector.extract_strided_slice %4 {offsets = [0, 0], sizes = [3, 256], strides = [1, 1]} : vector<32x256xf32> to vector<3x256xf32>
    %117 = vector.extract_strided_slice %4 {offsets = [3, 0], sizes = [3, 256], strides = [1, 1]} : vector<32x256xf32> to vector<3x256xf32>
    %118 = vector.extract_strided_slice %4 {offsets = [6, 0], sizes = [12, 256], strides = [1, 1]} : vector<32x256xf32> to vector<12x256xf32>
    %119 = vector.extract_strided_slice %4 {offsets = [18, 0], sizes = [12, 256], strides = [1, 1]} : vector<32x256xf32> to vector<12x256xf32>
    %120 = vector.shape_cast %117 : vector<3x256xf32> to vector<1x3x256xf32>
    %cst_36 = arith.constant dense<0.000000e+00> : vector<1xf32>
    %121 = vector.multi_reduction <add>, %120, %cst_36 [1, 2] : vector<1x3x256xf32> to vector<1xf32>
    %122 = vector.shape_cast %121 : vector<1xf32> to vector<1x1x1xf32>
    %123 = vector.extract %122[0, 0, 0] : f32 from vector<1x1x1xf32>
    %cst_37 = arith.constant 1.000000e+00 : f32
    %124 = arith.maximumf %123, %cst_37 : f32
    %cst_38 = arith.constant 0.000000e+00 : f32
    %125 = vector.broadcast %cst_38 : f32 to vector<3x256xf32>
    %126 = arith.maximumf %114, %125 : vector<3x256xf32>
    %127 = math.absf %114 : vector<3x256xf32>
    %cst_39 = arith.constant 0.000000e+00 : f32
    %128 = vector.broadcast %cst_39 : f32 to vector<3x256xf32>
    %129 = arith.subf %128, %127 : vector<3x256xf32>
    %130 = math.exp %129 : vector<3x256xf32>
    %cst_40 = arith.constant 1.000000e+00 : f32
    %131 = vector.broadcast %cst_40 : f32 to vector<3x256xf32>
    %132 = arith.addf %131, %130 : vector<3x256xf32>
    %133 = math.log %132 : vector<3x256xf32>
    %134 = arith.addf %126, %133 : vector<3x256xf32>
    %135 = arith.mulf %116, %114 : vector<3x256xf32>
    %136 = arith.subf %134, %135 : vector<3x256xf32>
    %137 = arith.mulf %117, %136 : vector<3x256xf32>
    %138 = vector.shape_cast %137 : vector<3x256xf32> to vector<1x3x256xf32>
    %cst_41 = arith.constant dense<0.000000e+00> : vector<1xf32>
    %139 = vector.multi_reduction <add>, %138, %cst_41 [1, 2] : vector<1x3x256xf32> to vector<1xf32>
    %140 = vector.shape_cast %139 : vector<1xf32> to vector<1x1x1xf32>
    %141 = vector.extract %140[0, 0, 0] : f32 from vector<1x1x1xf32>
    %142 = arith.divf %141, %124 : f32
    %143 = arith.subf %115, %119 : vector<12x256xf32>
    %144 = arith.mulf %118, %143 : vector<12x256xf32>
    %145 = math.absf %144 : vector<12x256xf32>
    %cst_42 = arith.constant 0.111111112 : f32
    %146 = vector.broadcast %cst_42 : f32 to vector<12x256xf32>
    %147 = arith.cmpf olt, %145, %146 : vector<12x256xf32>
    %148 = arith.extui %147 : vector<12x256xi1> to vector<12x256xi32>
    %149 = arith.sitofp %148 : vector<12x256xi32> to vector<12x256xf32>
    %cst_43 = arith.constant 5.000000e-01 : f32
    %150 = vector.broadcast %cst_43 : f32 to vector<12x256xf32>
    %151 = arith.mulf %149, %150 : vector<12x256xf32>
    %cst_44 = arith.constant 9.000000e+00 : f32
    %152 = vector.broadcast %cst_44 : f32 to vector<12x256xf32>
    %153 = arith.mulf %151, %152 : vector<12x256xf32>
    %154 = arith.mulf %153, %144 : vector<12x256xf32>
    %155 = arith.mulf %154, %144 : vector<12x256xf32>
    %cst_45 = arith.constant 1.000000e+00 : f32
    %156 = vector.broadcast %cst_45 : f32 to vector<12x256xf32>
    %157 = arith.subf %156, %149 : vector<12x256xf32>
    %cst_46 = arith.constant 0.055555556 : f32
    %158 = vector.broadcast %cst_46 : f32 to vector<12x256xf32>
    %159 = arith.subf %145, %158 : vector<12x256xf32>
    %160 = arith.mulf %157, %159 : vector<12x256xf32>
    %161 = arith.addf %155, %160 : vector<12x256xf32>
    %162 = vector.shape_cast %161 : vector<12x256xf32> to vector<1x12x256xf32>
    %cst_47 = arith.constant dense<0.000000e+00> : vector<1xf32>
    %163 = vector.multi_reduction <add>, %162, %cst_47 [1, 2] : vector<1x12x256xf32> to vector<1xf32>
    %164 = vector.shape_cast %163 : vector<1xf32> to vector<1x1x1xf32>
    %165 = vector.extract %164[0, 0, 0] : f32 from vector<1x1x1xf32>
    %166 = arith.divf %165, %124 : f32
    %167 = tpu.iota {dimensions = array<i32: 1>} : vector<1x2xi32>
    %c0_i32 = arith.constant 0 : i32
    %168 = vector.broadcast %c0_i32 : i32 to vector<1x2xi32>
    %169 = arith.cmpi eq, %167, %168 : vector<1x2xi32>
    %170 = vector.broadcast %166 : f32 to vector<1x2xf32>
    %171 = vector.broadcast %142 : f32 to vector<1x2xf32>
    %172 = arith.select %169, %170, %171 : vector<1x2xi1>, vector<1x2xf32>
    %c15 = arith.constant 15 : index
    %c0_48 = arith.constant 0 : index
    %173 = vector.load %arg5[%c15, %c0_48] : memref<16x256xf32, #tpu.memory_space<vmem>>, vector<1x2xf32>
    tpu.vector_store %arg5[%c15, %c0_48], %172 {strides = array<i32>} : memref<16x256xf32, #tpu.memory_space<vmem>>, vector<1x2xf32>,
    return
  }
}

module attributes {stable_mosaic.version = 11 : i64} {
  func.func @_roi_head_loss_kernel(%arg0: memref<128x784xbf16, #tpu.memory_space<vmem>>, %arg1: memref<1040x128xbf16, #tpu.memory_space<vmem>>, %arg2: memref<3x128xf32, #tpu.memory_space<vmem>>, %arg3: memref<128x8xf32, #tpu.memory_space<vmem>>, %arg4: memref<1x2xf32, #tpu.memory_space<vmem>>) attributes {dimension_semantics = [], scalar_prefetch = 0 : i64, scratch_operands = 0 : i64, tpu.core_type = #tpu.core_type<tc>} {
    %c0 = arith.constant 0 : index
    %c0_0 = arith.constant 0 : index
    %0 = vector.load %arg2[%c0, %c0_0] : memref<3x128xf32, #tpu.memory_space<vmem>>, vector<3x128xf32>
    %c0_1 = arith.constant 0 : index
    %c0_2 = arith.constant 0 : index
    %1 = vector.load %arg0[%c0_1, %c0_2] : memref<128x784xbf16, #tpu.memory_space<vmem>>, vector<128x784xbf16>
    %c0_3 = arith.constant 0 : index
    %c0_4 = arith.constant 0 : index
    %2 = vector.load %arg1[%c0_3, %c0_4] : memref<1040x128xbf16, #tpu.memory_space<vmem>>, vector<784x128xbf16>
    %cst = arith.constant dense<0.000000e+00> : vector<128x128xf32>
    %3 = tpu.matmul %1, %2, %cst {dimension_numbers = #tpu.dot_dimension_numbers<[1], [0], [0], [1], [0, 0, 1, 1], [], []>} : vector<128x784xbf16>, vector<784x128xbf16>, vector<128x128xf32> -> vector<128x128xf32>
    %4 = vector.extract_strided_slice %0 {offsets = [0, 0], sizes = [1, 128], strides = [1, 1]} : vector<3x128xf32> to vector<1x128xf32>
    %5 = vector.broadcast %4 : vector<1x128xf32> to vector<128x128xf32>
    %6 = arith.addf %3, %5 : vector<128x128xf32>
    %cst_5 = arith.constant 0.000000e+00 : f32
    %7 = vector.broadcast %cst_5 : f32 to vector<128x128xf32>
    %8 = arith.maximumf %6, %7 : vector<128x128xf32>
    %9 = arith.truncf %8 : vector<128x128xf32> to vector<128x128xbf16>
    %c784 = arith.constant 784 : index
    %c0_6 = arith.constant 0 : index
    %10 = vector.load %arg1[%c784, %c0_6] : memref<1040x128xbf16, #tpu.memory_space<vmem>>, vector<128x128xbf16>
    %cst_7 = arith.constant dense<0.000000e+00> : vector<128x128xf32>
    %11 = tpu.matmul %9, %10, %cst_7 {dimension_numbers = #tpu.dot_dimension_numbers<[1], [0], [0], [1], [0, 0, 1, 1], [], []>} : vector<128x128xbf16>, vector<128x128xbf16>, vector<128x128xf32> -> vector<128x128xf32>
    %12 = vector.extract_strided_slice %0 {offsets = [1, 0], sizes = [1, 128], strides = [1, 1]} : vector<3x128xf32> to vector<1x128xf32>
    %13 = vector.broadcast %12 : vector<1x128xf32> to vector<128x128xf32>
    %14 = arith.addf %11, %13 : vector<128x128xf32>
    %cst_8 = arith.constant 0.000000e+00 : f32
    %15 = vector.broadcast %cst_8 : f32 to vector<128x128xf32>
    %16 = arith.maximumf %14, %15 : vector<128x128xf32>
    %17 = arith.truncf %16 : vector<128x128xf32> to vector<128x128xbf16>
    %c912 = arith.constant 912 : index
    %c0_9 = arith.constant 0 : index
    %18 = vector.load %arg1[%c912, %c0_9] : memref<1040x128xbf16, #tpu.memory_space<vmem>>, vector<128x128xbf16>
    %cst_10 = arith.constant dense<0.000000e+00> : vector<128x128xf32>
    %19 = tpu.matmul %17, %18, %cst_10 {dimension_numbers = #tpu.dot_dimension_numbers<[1], [0], [0], [1], [0, 0, 1, 1], [], []>} : vector<128x128xbf16>, vector<128x128xbf16>, vector<128x128xf32> -> vector<128x128xf32>
    %20 = vector.extract_strided_slice %0 {offsets = [2, 0], sizes = [1, 128], strides = [1, 1]} : vector<3x128xf32> to vector<1x128xf32>
    %21 = vector.broadcast %20 : vector<1x128xf32> to vector<128x128xf32>
    %22 = arith.addf %19, %21 : vector<128x128xf32>
    %c0_11 = arith.constant 0 : index
    %c0_12 = arith.constant 0 : index
    %23 = vector.load %arg3[%c0_11, %c0_12] : memref<128x8xf32, #tpu.memory_space<vmem>>, vector<128x8xf32>
    %24 = vector.extract_strided_slice %23 {offsets = [0, 0], sizes = [128, 3], strides = [1, 1]} : vector<128x8xf32> to vector<128x3xf32>
    %25 = vector.extract_strided_slice %23 {offsets = [0, 3], sizes = [128, 4], strides = [1, 1]} : vector<128x8xf32> to vector<128x4xf32>
    %26 = vector.extract_strided_slice %23 {offsets = [0, 7], sizes = [128, 1], strides = [1, 1]} : vector<128x8xf32> to vector<128x1xf32>
    %27 = vector.extract_strided_slice %22 {offsets = [0, 0], sizes = [128, 3], strides = [1, 1]} : vector<128x128xf32> to vector<128x3xf32>
    %cst_13 = arith.constant dense<0xFF800000> : vector<128xf32>
    %28 = vector.multi_reduction <maximumf>, %27, %cst_13 [1] : vector<128x3xf32> to vector<128xf32>
    %29 = vector.shape_cast %28 : vector<128xf32> to vector<128x1xf32>
    %30 = vector.broadcast %29 : vector<128x1xf32> to vector<128x3xf32>
    %31 = arith.subf %27, %30 : vector<128x3xf32>
    %32 = math.exp %31 : vector<128x3xf32>
    %cst_14 = arith.constant dense<0.000000e+00> : vector<128xf32>
    %33 = vector.multi_reduction <add>, %32, %cst_14 [1] : vector<128x3xf32> to vector<128xf32>
    %34 = vector.shape_cast %33 : vector<128xf32> to vector<128x1xf32>
    %35 = math.log %34 : vector<128x1xf32>
    %36 = arith.mulf %31, %24 : vector<128x3xf32>
    %cst_15 = arith.constant dense<0.000000e+00> : vector<128xf32>
    %37 = vector.multi_reduction <add>, %36, %cst_15 [1] : vector<128x3xf32> to vector<128xf32>
    %38 = vector.shape_cast %37 : vector<128xf32> to vector<128x1xf32>
    %39 = arith.subf %35, %38 : vector<128x1xf32>
    %40 = vector.shape_cast %39 : vector<128x1xf32> to vector<1x128x1xf32>
    %cst_16 = arith.constant dense<0.000000e+00> : vector<1xf32>
    %41 = vector.multi_reduction <add>, %40, %cst_16 [1, 2] : vector<1x128x1xf32> to vector<1xf32>
    %42 = vector.shape_cast %41 : vector<1xf32> to vector<1x1x1xf32>
    %43 = vector.extract %42[0, 0, 0] : f32 from vector<1x1x1xf32>
    %cst_17 = arith.constant 1.280000e+02 : f32
    %44 = arith.divf %43, %cst_17 : f32
    %cst_18 = arith.constant 0.000000e+00 : f32
    %45 = vector.broadcast %cst_18 : f32 to vector<128x4xf32>
    %46 = vector.extract_strided_slice %24 {offsets = [0, 0], sizes = [128, 1], strides = [1, 1]} : vector<128x3xf32> to vector<128x1xf32>
    %47 = vector.extract_strided_slice %22 {offsets = [0, 3], sizes = [128, 4], strides = [1, 1]} : vector<128x128xf32> to vector<128x4xf32>
    %48 = vector.broadcast %46 : vector<128x1xf32> to vector<128x4xf32>
    %49 = arith.mulf %48, %47 : vector<128x4xf32>
    %50 = arith.addf %45, %49 : vector<128x4xf32>
    %51 = vector.extract_strided_slice %24 {offsets = [0, 1], sizes = [128, 1], strides = [1, 1]} : vector<128x3xf32> to vector<128x1xf32>
    %52 = vector.extract_strided_slice %22 {offsets = [0, 7], sizes = [128, 4], strides = [1, 1]} : vector<128x128xf32> to vector<128x4xf32>
    %53 = vector.broadcast %51 : vector<128x1xf32> to vector<128x4xf32>
    %54 = arith.mulf %53, %52 : vector<128x4xf32>
    %55 = arith.addf %50, %54 : vector<128x4xf32>
    %56 = vector.extract_strided_slice %24 {offsets = [0, 2], sizes = [128, 1], strides = [1, 1]} : vector<128x3xf32> to vector<128x1xf32>
    %57 = vector.extract_strided_slice %22 {offsets = [0, 11], sizes = [128, 4], strides = [1, 1]} : vector<128x128xf32> to vector<128x4xf32>
    %58 = vector.broadcast %56 : vector<128x1xf32> to vector<128x4xf32>
    %59 = arith.mulf %58, %57 : vector<128x4xf32>
    %60 = arith.addf %55, %59 : vector<128x4xf32>
    %61 = arith.subf %60, %25 : vector<128x4xf32>
    %62 = vector.broadcast %26 : vector<128x1xf32> to vector<128x4xf32>
    %63 = arith.mulf %62, %61 : vector<128x4xf32>
    %64 = math.absf %63 : vector<128x4xf32>
    %cst_19 = arith.constant 1.000000e+00 : f32
    %65 = vector.broadcast %cst_19 : f32 to vector<128x4xf32>
    %66 = arith.cmpf olt, %64, %65 : vector<128x4xf32>
    %67 = arith.extui %66 : vector<128x4xi1> to vector<128x4xi32>
    %68 = arith.sitofp %67 : vector<128x4xi32> to vector<128x4xf32>
    %cst_20 = arith.constant 5.000000e-01 : f32
    %69 = vector.broadcast %cst_20 : f32 to vector<128x4xf32>
    %70 = arith.mulf %68, %69 : vector<128x4xf32>
    %cst_21 = arith.constant 1.000000e+00 : f32
    %71 = vector.broadcast %cst_21 : f32 to vector<128x4xf32>
    %72 = arith.mulf %70, %71 : vector<128x4xf32>
    %73 = arith.mulf %72, %63 : vector<128x4xf32>
    %74 = arith.mulf %73, %63 : vector<128x4xf32>
    %cst_22 = arith.constant 1.000000e+00 : f32
    %75 = vector.broadcast %cst_22 : f32 to vector<128x4xf32>
    %76 = arith.subf %75, %68 : vector<128x4xf32>
    %cst_23 = arith.constant 5.000000e-01 : f32
    %77 = vector.broadcast %cst_23 : f32 to vector<128x4xf32>
    %78 = arith.subf %64, %77 : vector<128x4xf32>
    %79 = arith.mulf %76, %78 : vector<128x4xf32>
    %80 = arith.addf %74, %79 : vector<128x4xf32>
    %81 = vector.shape_cast %80 : vector<128x4xf32> to vector<1x128x4xf32>
    %cst_24 = arith.constant dense<0.000000e+00> : vector<1xf32>
    %82 = vector.multi_reduction <add>, %81, %cst_24 [1, 2] : vector<1x128x4xf32> to vector<1xf32>
    %83 = vector.shape_cast %82 : vector<1xf32> to vector<1x1x1xf32>
    %84 = vector.extract %83[0, 0, 0] : f32 from vector<1x1x1xf32>
    %cst_25 = arith.constant 1.280000e+02 : f32
    %85 = arith.divf %84, %cst_25 : f32
    %86 = tpu.iota {dimensions = array<i32: 1>} : vector<1x2xi32>
    %c0_i32 = arith.constant 0 : i32
    %87 = vector.broadcast %c0_i32 : i32 to vector<1x2xi32>
    %88 = arith.cmpi eq, %86, %87 : vector<1x2xi32>
    %89 = vector.broadcast %85 : f32 to vector<1x2xf32>
    %90 = vector.broadcast %44 : f32 to vector<1x2xf32>
    %91 = arith.select %88, %89, %90 : vector<1x2xi1>, vector<1x2xf32>
    %c0_26 = arith.constant 0 : index
    %c0_27 = arith.constant 0 : index
    %92 = vector.load %arg4[%c0_26, %c0_27] : memref<1x2xf32, #tpu.memory_space<vmem>>, vector<1x2xf32>
    tpu.vector_store %arg4[%c0_26, %c0_27], %91 {strides = array<i32>} : memref<1x2xf32, #tpu.memory_space<vmem>>, vector<1x2xf32>,
    return
  }
}

</mosaic_0001>

<llo_original>
// kernel: _faster_rcnn_forward.2
$region0: #{_faster_rcnn_forward.2}
  #allocation0 [shape = 'u32[]', space=smem, size = 0x4, offset = 0x4, fixed_abs, tag = 'smem constant byte address 0x4 - core index']
  #allocation1 [shape = 'u32[144,128]{1,0:T(1,128)}', space=vmem, size = 0x12000, scoped, tag = 'internal scratch']
  #allocation2 [shape = 'bf16[16,512]{1,0:T(16,128)(2,1)}', space=vmem, size = 0x4000, scoped, tag = 'scratch operand']
  %s0 = inlined_call_operand.vmem [shape: bf16[16,256], index: 0, kind: input, shape index: {}]
  %s1 = inlined_call_operand.vmem [shape: bf16[64,144], index: 1, kind: input, shape index: {}]
  %s2 = inlined_call_operand.vmem [shape: f32[16,4], index: 2, kind: input, shape index: {}]
  %s3 = inlined_call_operand.vmem [shape: f32[32,256], index: 3, kind: input, shape index: {}]
  %s4 = inlined_call_operand.vmem [shape: bf16[16,256], index: 4, kind: output, shape index: {0}]
  %s5 = inlined_call_operand.vmem [shape: f32[16,256], index: 5, kind: output, shape index: {1}]
  %6 = xla_tuple %s4, %s5
  %s7 = sld [smem:[#allocation0]]
  $region34: #{_faster_rcnn_forward.2} parent=0
    _
  %s9 = ssub.s32 1, %s7
  %s10 = scalar_select 0, %s9, %s7
  // Predicated region
  $region2: #{_faster_rcnn_forward.2} parent=0 // pred_check
    _
  $region3: #{_faster_rcnn_forward.2} parent=0 // pred_check_branch
    %12 = sbr.rel (0) target = $region5
  $region4: #{_faster_rcnn_forward.2} parent=0 // pred_region
    _
  $region5: #{_faster_rcnn_forward.2} parent=0 // pred_fallthru
    _
  // Predicated region
  $region6: #{_faster_rcnn_forward.2} parent=0 // pred_check
    _
  $region7: #{_faster_rcnn_forward.2} parent=0 // pred_check_branch
    %14 = sbr.rel (0) target = $region9
  $region8: #{_faster_rcnn_forward.2} parent=0 // pred_region
    _
  $region9: #{_faster_rcnn_forward.2} parent=0 // pred_fallthru
    _
  // Predicated region
  $region10: #{_faster_rcnn_forward.2} parent=0 // pred_check
    _
  $region11: #{_faster_rcnn_forward.2} parent=0 // pred_check_branch
    %16 = sbr.rel (0) target = $region13
  $region12: #{_faster_rcnn_forward.2} parent=0 // pred_region
    _
  $region13: #{_faster_rcnn_forward.2} parent=0 // pred_fallthru
    _
  // Predicated region
  $region14: #{_faster_rcnn_forward.2} parent=0 // pred_check
    _
  $region15: #{_faster_rcnn_forward.2} parent=0 // pred_check_branch
    %18 = sbr.rel (0) target = $region17
  $region16: #{_faster_rcnn_forward.2} parent=0 // pred_region
    _
  $region17: #{_faster_rcnn_forward.2} parent=0 // pred_fallthru
    _
  %20 = vst [vmem:[#allocation2] sm:$0xff] 0
  %21 = vst [vmem:[#allocation2 + $0x18] sm:$0xff] 0
  %v22 = vld [vmem:[%s3] sm:$0xff]
  %v23 = vld [vmem:[%s3 + $0x8] sm:$0xff]
  %v24 = vld [vmem:[%s3 + $0x10] sm:$0xff]
  %v25 = vld [vmem:[%s3 + $0x18] sm:$0xff]
  %v26 = vld [vmem:[%s3 + $0x20] sm:$0xff]
  %v27 = vld [vmem:[%s3 + $0x28] sm:$0xff]
  %v28 = vld [vmem:[%s3 + $0x30] sm:$0xff]
  %v29 = vld [vmem:[%s3 + $0x38] sm:$0xff]
  %v30 = vld [vmem:[%s2] sm:$0xff]
  %v31 = vld [vmem:[%s2 + $0x8] sm:$0xff]
  %v32 = vpack.c.bf16 %v28, %v28
  %v33 = vpack.c.bf16 %v29, %v29
  %v34 = vld [vmem:[%s0] sm:$0xff]
  %v35 = vld [vmem:[%s0 + $0x8] sm:$0xff]
  %v36 = vld [vmem:[%s1] sm:$0xff]
  %v37 = vld [vmem:[%s1 + $0x8] sm:$0xff]
  %v40 = vunpack.c.l.b16 %v34
  %v41 = vunpack.c.h.b16 %v34
  %v42 = vunpack.c.l.b16 %v35
  %v43 = vunpack.c.h.b16 %v35
  %v44 = vpack.c.b16 %v42, %v40
  %v45 = vpack.c.b16 %v43, %v41
  %48 = vst [vmem:[#allocation2 + $0x8] sm:$0xff] %v44
  %49 = vst [vmem:[#allocation2 + $0x10] sm:$0xff] %v45
  %v50 = vld [vmem:[#allocation2] sm:$0xff]
  %v51 = vld [vmem:[#allocation2 + $0x8] sm:$0xff]
  %v52 = vld [vmem:[#allocation2 + $0x10] sm:$0xff]
  %v53 = vld [vmem:[#allocation2 + $0x18] sm:$0xff]
  %v55 = vpack.i.b16 %v32, %v32
  %v57 = vlaneseq
  %v58 = vshrl.u32 %v57, 7
  %v59 = vsub.s32 3, %v58
  %v60 = vrot.slane %v55, %v59
  %v62 = vpack.i.b16 %v33, %v33
  %v64 = vlaneseq
  %v65 = vshrl.u32 %v64, 7
  %v66 = vsub.s32 3, %v65
  %v67 = vrot.slane %v62, %v66
  %70 = vrot.lane.b32.xlu0 %v60, 111
  %v71 = vpop.permute.xlu0 %70
  %72 = vrot.lane.b32.xlu0 %v67, 111
  %v73 = vpop.permute.xlu0 %72
  %vm74 = vcmask 908288
  %v75 = vsel %vm74, %v71, %v73
  %v79 = vmul.bf16 %v50, %v71
  %v80 = vmul.bf16 %v51, %v75
  %v81 = vmul.bf16 %v52, %v73
  %v82 = vshrl.u32 %v32, 16
  %v83 = vpack.i.b16 %v82, %v82
  %v85 = vlaneseq
  %v86 = vshrl.u32 %v85, 7
  %v87 = vsub.s32 3, %v86
  %v88 = vrot.slane %v83, %v87
  %v89 = vshrl.u32 %v33, 16
  %v90 = vpack.i.b16 %v89, %v89
  %v92 = vlaneseq
  %v93 = vshrl.u32 %v92, 7
  %v94 = vsub.s32 3, %v93
  %v95 = vrot.slane %v90, %v94
  %98 = vrot.lane.b32.xlu0 %v88, 113
  %v99 = vpop.permute.xlu0 %98
  %100 = vrot.lane.b32.xlu0 %v95, 113
  %v101 = vpop.permute.xlu0 %100
  %vm102 = vcmask 924672
  %v103 = vsel %vm102, %v99, %v101
  %v107 = vmul.bf16 %v50, %v99
  %v108 = vmul.bf16 %v51, %v103
  %v109 = vmul.bf16 %v52, %v101
  %110 = vrot.lane.b32.xlu0 %v60, 127
  %v111 = vpop.permute.xlu0 %110
  %112 = vrot.lane.b32.xlu0 %v67, 127
  %v113 = vpop.permute.xlu0 %112
  %vm114 = vcmask 1039360
  %v115 = vsel %vm114, %v111, %v113
  %v119 = vmul.bf16 %v50, %v111
  %v120 = vmul.bf16 %v51, %v115
  %v121 = vmul.bf16 %v52, %v113
  %122 = vrot.lane.b32.xlu0 %v88, 1
  %v123 = vpop.permute.xlu0 %122
  %124 = vrot.lane.b32.xlu0 %v95, 1
  %v125 = vpop.permute.xlu0 %124
  %vm126 = vcmask 7168
  %v127 = vsel %vm126, %v123, %v125
  %v131 = vmul.bf16 %v51, %v123
  %v132 = vmul.bf16 %v52, %v127
  %v133 = vmul.bf16 %v53, %v125
  %134 = vrot.lane.b32.xlu0 %v60, 15
  %v135 = vpop.permute.xlu0 %134
  %136 = vrot.lane.b32.xlu0 %v67, 15
  %v137 = vpop.permute.xlu0 %136
  %vm138 = vcmask 121856
  %v139 = vsel %vm138, %v135, %v137
  %v143 = vmul.bf16 %v51, %v135
  %v144 = vmul.bf16 %v52, %v139
  %v145 = vmul.bf16 %v53, %v137
  %146 = vrot.lane.b32.xlu0 %v88, 17
  %v147 = vpop.permute.xlu0 %146
  %148 = vrot.lane.b32.xlu0 %v95, 17
  %v149 = vpop.permute.xlu0 %148
  %vm150 = vcmask 138240
  %v151 = vsel %vm150, %v147, %v149
  %v155 = vmul.bf16 %v51, %v147
  %v156 = vmul.bf16 %v52, %v151
  %v157 = vmul.bf16 %v53, %v149
  %161 = vrot.lane.b32.xlu0 %v50, 127
  %v162 = vpop.permute.xlu0 %161
  %163 = vrot.lane.b32.xlu0 %v51, 127
  %v164 = vpop.permute.xlu0 %163
  %165 = vrot.lane.b32.xlu0 %v52, 127
  %v166 = vpop.permute.xlu0 %165
  %v167 = vsel %vm114, %v162, %v164
  %v168 = vsel %vm114, %v164, %v166
  %172 = vrot.lane.b32.xlu0 %v107, 126
  %v173 = vpop.permute.xlu0 %172
  %174 = vrot.lane.b32.xlu0 %v108, 126
  %v175 = vpop.permute.xlu0 %174
  %176 = vrot.lane.b32.xlu0 %v109, 126
  %v177 = vpop.permute.xlu0 %176
  %vm178 = vcmask 1031168
  %v179 = vsel %vm178, %v173, %v175
  %v180 = vsel %vm178, %v175, %v177
  %184 = vrot.lane.b32.xlu0 %v119, 112
  %v185 = vpop.permute.xlu0 %184
  %186 = vrot.lane.b32.xlu0 %v120, 112
  %v187 = vpop.permute.xlu0 %186
  %188 = vrot.lane.b32.xlu0 %v121, 112
  %v189 = vpop.permute.xlu0 %188
  %vm190 = vcmask 916480
  %v191 = vsel %vm190, %v185, %v187
  %v192 = vsel %vm190, %v187, %v189
  %193 = vrot.lane.b32.xlu0 %v51, 111
  %v194 = vpop.permute.xlu0 %193
  %195 = vrot.lane.b32.xlu0 %v52, 111
  %v196 = vpop.permute.xlu0 %195
  %v197 = vsel %vm74, %v194, %v196
  %201 = vrot.lane.b32.xlu0 %v131, 110
  %v202 = vpop.permute.xlu0 %201
  %203 = vrot.lane.b32.xlu0 %v132, 110
  %v204 = vpop.permute.xlu0 %203
  %205 = vrot.lane.b32.xlu0 %v133, 110
  %v206 = vpop.permute.xlu0 %205
  %vm207 = vcmask 900096
  %v208 = vsel %vm207, %v202, %v204
  %v209 = vsel %vm207, %v204, %v206
  %213 = vrot.lane.b32.xlu0 %v143, 96
  %v214 = vpop.permute.xlu0 %213
  %215 = vrot.lane.b32.xlu0 %v144, 96
  %v216 = vpop.permute.xlu0 %215
  %217 = vrot.lane.b32.xlu0 %v145, 96
  %v218 = vpop.permute.xlu0 %217
  %vm219 = vcmask 785408
  %v220 = vsel %vm219, %v214, %v216
  %v221 = vsel %vm219, %v216, %v218
  %223 = vrot.lane.b32.xlu0 %v51, 95
  %v224 = vpop.permute.xlu0 %223
  %225 = vrot.lane.b32.xlu0 %v52, 95
  %v226 = vpop.permute.xlu0 %225
  %227 = vrot.lane.b32.xlu0 %v53, 95
  %v228 = vpop.permute.xlu0 %227
  %vm229 = vcmask 777216
  %v230 = vsel %vm229, %v224, %v226
  %v231 = vsel %vm229, %v226, %v228
  %235 = vrot.lane.b32.xlu0 %v155, 94
  %v236 = vpop.permute.xlu0 %235
  %237 = vrot.lane.b32.xlu0 %v156, 94
  %v238 = vpop.permute.xlu0 %237
  %239 = vrot.lane.b32.xlu0 %v157, 94
  %v240 = vpop.permute.xlu0 %239
  %vm241 = vcmask 769024
  %v242 = vsel %vm241, %v236, %v238
  %v243 = vsel %vm241, %v238, %v240
  %245 = vset.pattern.permute.xlu0 0
  %246 = vperm.xlu0 %245, %v30
  %v247 = vpop.permute.xlu0 %246
  %250 = vset.pattern.permute.xlu0 0
  %251 = vperm.xlu0 %250, %v31
  %v252 = vpop.permute.xlu0 %251
  %v256 = vunpack.c.l.b16 %v36
  %v257 = vunpack.c.h.b16 %v36
  %v258 = vunpack.c.l.b16 %v37
  %v259 = vunpack.c.h.b16 %v37
  %v260 = vpack.c.b16 %v258, %v256
  %v261 = vpack.c.b16 %v259, %v257
  %266 = vrot.lane.b32.xlu0 %v79, 17
  %v267 = vpop.permute.xlu0 %266
  %268 = vrot.lane.b32.xlu0 %v80, 17
  %v269 = vpop.permute.xlu0 %268
  %270 = vrot.lane.b32.xlu0 %v81, 17
  %v271 = vpop.permute.xlu0 %270
  %272 = vrot.lane.b32.xlu0 %v167, 17
  %v273 = vpop.permute.xlu0 %272
  %274 = vrot.lane.b32.xlu0 %v168, 17
  %v275 = vpop.permute.xlu0 %274
  %276 = vrot.lane.b32.xlu0 %v166, 17
  %v277 = vpop.permute.xlu0 %276
  %278 = vrot.lane.b32.xlu0 %v179, 17
  %v279 = vpop.permute.xlu0 %278
  %280 = vrot.lane.b32.xlu0 %v180, 17
  %v281 = vpop.permute.xlu0 %280
  %282 = vrot.lane.b32.xlu0 %v177, 17
  %v283 = vpop.permute.xlu0 %282
  %284 = vrot.lane.b32.xlu0 %v191, 17
  %v285 = vpop.permute.xlu0 %284
  %286 = vrot.lane.b32.xlu0 %v192, 17
  %v287 = vpop.permute.xlu0 %286
  %288 = vrot.lane.b32.xlu0 %v189, 17
  %v289 = vpop.permute.xlu0 %288
  %290 = vrot.lane.b32.xlu0 %v194, 17
  %v291 = vpop.permute.xlu0 %290
  %292 = vrot.lane.b32.xlu0 %v197, 17
  %v293 = vpop.permute.xlu0 %292
  %294 = vrot.lane.b32.xlu0 %v196, 17
  %v295 = vpop.permute.xlu0 %294
  %296 = vrot.lane.b32.xlu0 %v202, 17
  %v297 = vpop.permute.xlu0 %296
  %298 = vrot.lane.b32.xlu0 %v208, 17
  %v299 = vpop.permute.xlu0 %298
  %300 = vrot.lane.b32.xlu0 %v209, 17
  %v301 = vpop.permute.xlu0 %300
  %302 = vrot.lane.b32.xlu0 %v214, 17
  %v303 = vpop.permute.xlu0 %302
  %304 = vrot.lane.b32.xlu0 %v220, 17
  %v305 = vpop.permute.xlu0 %304
  %306 = vrot.lane.b32.xlu0 %v221, 17
  %v307 = vpop.permute.xlu0 %306
  %308 = vrot.lane.b32.xlu0 %v224, 17
  %v309 = vpop.permute.xlu0 %308
  %310 = vrot.lane.b32.xlu0 %v230, 17
  %v311 = vpop.permute.xlu0 %310
  %312 = vrot.lane.b32.xlu0 %v231, 17
  %v313 = vpop.permute.xlu0 %312
  %314 = vrot.lane.b32.xlu0 %v236, 17
  %v315 = vpop.permute.xlu0 %314
  %316 = vrot.lane.b32.xlu0 %v242, 17
  %v317 = vpop.permute.xlu0 %316
  %318 = vrot.lane.b32.xlu0 %v243, 17
  %v319 = vpop.permute.xlu0 %318
  %v320 = vsel %vm150, %v267, %v269
  %v321 = vsel %vm150, %v269, %v271
  %v322 = vsel %vm150, %v273, %v275
  %v323 = vsel %vm150, %v275, %v277
  %v324 = vsel %vm150, %v279, %v281
  %v325 = vsel %vm150, %v281, %v283
  %v326 = vsel %vm150, %v285, %v287
  %v327 = vsel %vm150, %v287, %v289
  %v328 = vsel %vm150, %v291, %v293
  %v329 = vsel %vm150, %v293, %v295
  %v330 = vsel %vm150, %v297, %v299
  %v331 = vsel %vm150, %v299, %v301
  %v332 = vsel %vm150, %v303, %v305
  %v333 = vsel %vm150, %v305, %v307
  %v334 = vsel %vm150, %v309, %v311
  %v335 = vsel %vm150, %v311, %v313
  %v336 = vsel %vm150, %v315, %v317
  %v337 = vsel %vm150, %v317, %v319
  %vm356 = vcmask 130048
  %v358 = vsel %vm356, %v261, 0
  %360 = vmatprep.subr.bf16.mxu0 %v321
  %361 = vmatpush1.bf16.msra.mxu0 %v320
  %362 = vmatprep.subr.bf16.mxu0 %v323
  %363 = vmatpush1.bf16.msra.mxu0 %v322
  %364 = vmatprep.subr.bf16.mxu0 %v325
  %365 = vmatpush1.bf16.msra.mxu0 %v324
  %366 = vmatprep.subr.bf16.mxu0 %v327
  %367 = vmatpush1.bf16.msra.mxu0 %v326
  %368 = vmatprep.subr.bf16.mxu0 %v329
  %369 = vmatpush1.bf16.msra.mxu0 %v328
  %370 = vmatprep.subr.bf16.mxu0 %v331
  %371 = vmatpush1.bf16.msra.mxu0 %v330
  %372 = vmatprep.subr.bf16.mxu0 %v333
  %373 = vmatpush1.bf16.msra.mxu0 %v332
  %374 = vmatprep.subr.bf16.mxu0 %v335
  %375 = vmatpush1.bf16.msra.mxu0 %v334
  %376 = vmatprep.subr.bf16.mxu0 %v337
  %377 = vmatpush1.bf16.msra.mxu0 %v336
  %378 = vmatprep.subr.bf16.mxu0 0
  %379 = vmatpush1.bf16.msra.mxu0 0
  %380 = vmatprep.subr.bf16.mxu0 0
  %381 = vmatpush1.bf16.msra.mxu0 0
  %382 = vmatprep.subr.bf16.mxu0 0
  %383 = vmatpush1.bf16.msra.mxu0 0
  %384 = vmatprep.subr.bf16.mxu0 0
  %385 = vmatpush1.bf16.msra.mxu0 0
  %386 = vmatprep.subr.bf16.mxu0 0
  %387 = vmatpush1.bf16.msra.mxu0 0
  %388 = vmatprep.subr.bf16.mxu0 0
  %389 = vmatpush1.bf16.msra.mxu0 0
  %390 = vmatprep.subr.bf16.mxu0 0
  %391 = vmatpush1.bf16.msra.mxu0 0
  %392 = vmatprep.mubr.bf16.mxu0 %v358
  %393 = vmatmul.mubr.bf16.gmra.mrb[0].mxu0 %v260
  %v394 = vpop.f32.mrb[0].mxu0
  %v395 = vadd.f32 %v247, %v394
  %v396 = vpop.f32.mrb[0].mxu0
  %v397 = vadd.f32 %v247, %v396
  %v398 = vpop.f32.mrb[0].mxu0
  %v399 = vadd.f32 %v252, %v398
  %v400 = vpop.f32.mrb[0].mxu0
  %v401 = vadd.f32 %v252, %v400
  %402 = vdwg.mxu0
  %v403 = vmax.f32 %v395, 0.0
  %v404 = vmax.f32 %v397, 0.0
  %v405 = vmax.f32 %v399, 0.0
  %v406 = vmax.f32 %v401, 0.0
  %v407 = vpack.c.bf16 %v405, %v403
  %v408 = vpack.c.bf16 %v406, %v404
  %v409 = vld [vmem:[%s1 + $0x10] sm:$0xff]
  %v410 = vld [vmem:[%s1 + $0x18] sm:$0xff]
  %411 = vst [vmem:[#allocation2 + $0x8] sm:$0xff] %v407
  %412 = vst [vmem:[#allocation2 + $0x10] sm:$0xff] %v408
  %v413 = vld [vmem:[#allocation2] sm:$0xff]
  %v414 = vld [vmem:[#allocation2 + $0x8] sm:$0xff]
  %v415 = vld [vmem:[#allocation2 + $0x10] sm:$0xff]
  %v416 = vld [vmem:[#allocation2 + $0x18] sm:$0xff]
  %v417 = vmul.bf16 %v413, %v71
  %v418 = vmul.bf16 %v414, %v75
  %v419 = vmul.bf16 %v415, %v73
  %v420 = vmul.bf16 %v413, %v99
  %v421 = vmul.bf16 %v414, %v103
  %v422 = vmul.bf16 %v415, %v101
  %v423 = vmul.bf16 %v413, %v111
  %v424 = vmul.bf16 %v414, %v115
  %v425 = vmul.bf16 %v415, %v113
  %v426 = vmul.bf16 %v414, %v123
  %v427 = vmul.bf16 %v415, %v127
  %v428 = vmul.bf16 %v416, %v125
  %v429 = vmul.bf16 %v414, %v135
  %v430 = vmul.bf16 %v415, %v139
  %v431 = vmul.bf16 %v416, %v137
  %v432 = vmul.bf16 %v414, %v147
  %v433 = vmul.bf16 %v415, %v151
  %v434 = vmul.bf16 %v416, %v149
  %438 = vrot.lane.b32.xlu0 %v413, 127
  %v439 = vpop.permute.xlu0 %438
  %440 = vrot.lane.b32.xlu0 %v414, 127
  %v441 = vpop.permute.xlu0 %440
  %442 = vrot.lane.b32.xlu0 %v415, 127
  %v443 = vpop.permute.xlu0 %442
  %v444 = vsel %vm114, %v439, %v441
  %v445 = vsel %vm114, %v441, %v443
  %449 = vrot.lane.b32.xlu0 %v420, 126
  %v450 = vpop.permute.xlu0 %449
  %451 = vrot.lane.b32.xlu0 %v421, 126
  %v452 = vpop.permute.xlu0 %451
  %453 = vrot.lane.b32.xlu0 %v422, 126
  %v454 = vpop.permute.xlu0 %453
  %v455 = vsel %vm178, %v450, %v452
  %v456 = vsel %vm178, %v452, %v454
  %460 = vrot.lane.b32.xlu0 %v423, 112
  %v461 = vpop.permute.xlu0 %460
  %462 = vrot.lane.b32.xlu0 %v424, 112
  %v463 = vpop.permute.xlu0 %462
  %464 = vrot.lane.b32.xlu0 %v425, 112
  %v465 = vpop.permute.xlu0 %464
  %v466 = vsel %vm190, %v461, %v463
  %v467 = vsel %vm190, %v463, %v465
  %468 = vrot.lane.b32.xlu0 %v414, 111
  %v469 = vpop.permute.xlu0 %468
  %470 = vrot.lane.b32.xlu0 %v415, 111
  %v471 = vpop.permute.xlu0 %470
  %v472 = vsel %vm74, %v469, %v471
  %476 = vrot.lane.b32.xlu0 %v426, 110
  %v477 = vpop.permute.xlu0 %476
  %478 = vrot.lane.b32.xlu0 %v427, 110
  %v479 = vpop.permute.xlu0 %478
  %480 = vrot.lane.b32.xlu0 %v428, 110
  %v481 = vpop.permute.xlu0 %480
  %v482 = vsel %vm207, %v477, %v479
  %v483 = vsel %vm207, %v479, %v481
  %487 = vrot.lane.b32.xlu0 %v429, 96
  %v488 = vpop.permute.xlu0 %487
  %489 = vrot.lane.b32.xlu0 %v430, 96
  %v490 = vpop.permute.xlu0 %489
  %491 = vrot.lane.b32.xlu0 %v431, 96
  %v492 = vpop.permute.xlu0 %491
  %v493 = vsel %vm219, %v488, %v490
  %v494 = vsel %vm219, %v490, %v492
  %496 = vrot.lane.b32.xlu0 %v414, 95
  %v497 = vpop.permute.xlu0 %496
  %498 = vrot.lane.b32.xlu0 %v415, 95
  %v499 = vpop.permute.xlu0 %498
  %500 = vrot.lane.b32.xlu0 %v416, 95
  %v501 = vpop.permute.xlu0 %500
  %v502 = vsel %vm229, %v497, %v499
  %v503 = vsel %vm229, %v499, %v501
  %507 = vrot.lane.b32.xlu0 %v432, 94
  %v508 = vpop.permute.xlu0 %507
  %509 = vrot.lane.b32.xlu0 %v433, 94
  %v510 = vpop.permute.xlu0 %509
  %511 = vrot.lane.b32.xlu0 %v434, 94
  %v512 = vpop.permute.xlu0 %511
  %v513 = vsel %vm241, %v508, %v510
  %v514 = vsel %vm241, %v510, %v512
  %515 = vset.pattern.permute.xlu0 1
  %516 = vperm.xlu0 %515, %v30
  %v517 = vpop.permute.xlu0 %516
  %519 = vset.pattern.permute.xlu0 1
  %520 = vperm.xlu0 %519, %v31
  %v521 = vpop.permute.xlu0 %520
  %v525 = vunpack.c.l.b16 %v409
  %v526 = vunpack.c.h.b16 %v409
  %v527 = vunpack.c.l.b16 %v410
  %v528 = vunpack.c.h.b16 %v410
  %v529 = vpack.c.b16 %v527, %v525
  %v530 = vpack.c.b16 %v528, %v526
  %535 = vrot.lane.b32.xlu0 %v417, 17
  %v536 = vpop.permute.xlu0 %535
  %537 = vrot.lane.b32.xlu0 %v418, 17
  %v538 = vpop.permute.xlu0 %537
  %539 = vrot.lane.b32.xlu0 %v419, 17
  %v540 = vpop.permute.xlu0 %539
  %541 = vrot.lane.b32.xlu0 %v444, 17
  %v542 = vpop.permute.xlu0 %541
  %543 = vrot.lane.b32.xlu0 %v445, 17
  %v544 = vpop.permute.xlu0 %543
  %545 = vrot.lane.b32.xlu0 %v443, 17
  %v546 = vpop.permute.xlu0 %545
  %547 = vrot.lane.b32.xlu0 %v455, 17
  %v548 = vpop.permute.xlu0 %547
  %549 = vrot.lane.b32.xlu0 %v456, 17
  %v550 = vpop.permute.xlu0 %549
  %551 = vrot.lane.b32.xlu0 %v454, 17
  %v552 = vpop.permute.xlu0 %551
  %553 = vrot.lane.b32.xlu0 %v466, 17
  %v554 = vpop.permute.xlu0 %553
  %555 = vrot.lane.b32.xlu0 %v467, 17
  %v556 = vpop.permute.xlu0 %555
  %557 = vrot.lane.b32.xlu0 %v465, 17
  %v558 = vpop.permute.xlu0 %557
  %559 = vrot.lane.b32.xlu0 %v469, 17
  %v560 = vpop.permute.xlu0 %559
  %561 = vrot.lane.b32.xlu0 %v472, 17
  %v562 = vpop.permute.xlu0 %561
  %563 = vrot.lane.b32.xlu0 %v471, 17
  %v564 = vpop.permute.xlu0 %563
  %565 = vrot.lane.b32.xlu0 %v477, 17
  %v566 = vpop.permute.xlu0 %565
  %567 = vrot.lane.b32.xlu0 %v482, 17
  %v568 = vpop.permute.xlu0 %567
  %569 = vrot.lane.b32.xlu0 %v483, 17
  %v570 = vpop.permute.xlu0 %569
  %571 = vrot.lane.b32.xlu0 %v488, 17
  %v572 = vpop.permute.xlu0 %571
  %573 = vrot.lane.b32.xlu0 %v493, 17
  %v574 = vpop.permute.xlu0 %573
  %575 = vrot.lane.b32.xlu0 %v494, 17
  %v576 = vpop.permute.xlu0 %575
  %577 = vrot.lane.b32.xlu0 %v497, 17
  %v578 = vpop.permute.xlu0 %577
  %579 = vrot.lane.b32.xlu0 %v502, 17
  %v580 = vpop.permute.xlu0 %579
  %581 = vrot.lane.b32.xlu0 %v503, 17
  %v582 = vpop.permute.xlu0 %581
  %583 = vrot.lane.b32.xlu0 %v508, 17
  %v584 = vpop.permute.xlu0 %583
  %585 = vrot.lane.b32.xlu0 %v513, 17
  %v586 = vpop.permute.xlu0 %585
  %587 = vrot.lane.b32.xlu0 %v514, 17
  %v588 = vpop.permute.xlu0 %587
  %v589 = vsel %vm150, %v536, %v538
  %v590 = vsel %vm150, %v538, %v540
  %v591 = vsel %vm150, %v542, %v544
  %v592 = vsel %vm150, %v544, %v546
  %v593 = vsel %vm150, %v548, %v550
  %v594 = vsel %vm150, %v550, %v552
  %v595 = vsel %vm150, %v554, %v556
  %v596 = vsel %vm150, %v556, %v558
  %v597 = vsel %vm150, %v560, %v562
  %v598 = vsel %vm150, %v562, %v564
  %v599 = vsel %vm150, %v566, %v568
  %v600 = vsel %vm150, %v568, %v570
  %v601 = vsel %vm150, %v572, %v574
  %v602 = vsel %vm150, %v574, %v576
  %v603 = vsel %vm150, %v578, %v580
  %v604 = vsel %vm150, %v580, %v582
  %v605 = vsel %vm150, %v584, %v586
  %v606 = vsel %vm150, %v586, %v588
  %v626 = vsel %vm356, %v530, 0
  %628 = vmatprep.subr.bf16.mxu0 %v590
  %629 = vmatpush1.bf16.msra.mxu0 %v589
  %630 = vmatprep.subr.bf16.mxu0 %v592
  %631 = vmatpush1.bf16.msra.mxu0 %v591
  %632 = vmatprep.subr.bf16.mxu0 %v594
  %633 = vmatpush1.bf16.msra.mxu0 %v593
  %634 = vmatprep.subr.bf16.mxu0 %v596
  %635 = vmatpush1.bf16.msra.mxu0 %v595
  %636 = vmatprep.subr.bf16.mxu0 %v598
  %637 = vmatpush1.bf16.msra.mxu0 %v597
  %638 = vmatprep.subr.bf16.mxu0 %v600
  %639 = vmatpush1.bf16.msra.mxu0 %v599
  %640 = vmatprep.subr.bf16.mxu0 %v602
  %641 = vmatpush1.bf16.msra.mxu0 %v601
  %642 = vmatprep.subr.bf16.mxu0 %v604
  %643 = vmatpush1.bf16.msra.mxu0 %v603
  %644 = vmatprep.subr.bf16.mxu0 %v606
  %645 = vmatpush1.bf16.msra.mxu0 %v605
  %646 = vmatprep.subr.bf16.mxu0 0
  %647 = vmatpush1.bf16.msra.mxu0 0
  %648 = vmatprep.subr.bf16.mxu0 0
  %649 = vmatpush1.bf16.msra.mxu0 0
  %650 = vmatprep.subr.bf16.mxu0 0
  %651 = vmatpush1.bf16.msra.mxu0 0
  %652 = vmatprep.subr.bf16.mxu0 0
  %653 = vmatpush1.bf16.msra.mxu0 0
  %654 = vmatprep.subr.bf16.mxu0 0
  %655 = vmatpush1.bf16.msra.mxu0 0
  %656 = vmatprep.subr.bf16.mxu0 0
  %657 = vmatpush1.bf16.msra.mxu0 0
  %658 = vmatprep.subr.bf16.mxu0 0
  %659 = vmatpush1.bf16.msra.mxu0 0
  %660 = vmatprep.mubr.bf16.mxu0 %v626
  %661 = vmatmul.mubr.bf16.gmra.mrb[0].mxu0 %v529
  %v662 = vpop.f32.mrb[0].mxu0
  %v663 = vadd.f32 %v517, %v662
  %v664 = vpop.f32.mrb[0].mxu0
  %v665 = vadd.f32 %v517, %v664
  %v666 = vpop.f32.mrb[0].mxu0
  %v667 = vadd.f32 %v521, %v666
  %v668 = vpop.f32.mrb[0].mxu0
  %v669 = vadd.f32 %v521, %v668
  %670 = vdwg.mxu0
  %v671 = vmax.f32 %v663, 0.0
  %v672 = vmax.f32 %v665, 0.0
  %v673 = vmax.f32 %v667, 0.0
  %v674 = vmax.f32 %v669, 0.0
  %v675 = vpack.c.bf16 %v673, %v671
  %v676 = vpack.c.bf16 %v674, %v672
  %v679 = vunpack.c.l.b16 %v675
  %v680 = vunpack.c.l.b16 %v676
  %v681 = vunpack.c.h.b16 %v675
  %v682 = vunpack.c.h.b16 %v676
  %v683 = vpack.c.b16 %v680, %v679
  %v684 = vpack.c.b16 %v682, %v681
  %687 = vst [vmem:[%s4] sm:$0xff] %v683
  %688 = vst [vmem:[%s4 + $0x8] sm:$0xff] %v684
  %v689 = vld [vmem:[%s1 + $0x20] sm:$0xff]
  %v690 = vld [vmem:[%s1 + $0x28] sm:$0xff]
  %691 = vst [vmem:[#allocation2 + $0x8] sm:$0xff] %v675
  %692 = vst [vmem:[#allocation2 + $0x10] sm:$0xff] %v676
  %v693 = vld [vmem:[#allocation2] sm:$0xff]
  %v694 = vld [vmem:[#allocation2 + $0x8] sm:$0xff]
  %v695 = vld [vmem:[#allocation2 + $0x10] sm:$0xff]
  %v696 = vld [vmem:[#allocation2 + $0x18] sm:$0xff]
  %v697 = vmul.bf16 %v693, %v71
  %v698 = vmul.bf16 %v694, %v75
  %v699 = vmul.bf16 %v695, %v73
  %v700 = vmul.bf16 %v693, %v99
  %v701 = vmul.bf16 %v694, %v103
  %v702 = vmul.bf16 %v695, %v101
  %v703 = vmul.bf16 %v693, %v111
  %v704 = vmul.bf16 %v694, %v115
  %v705 = vmul.bf16 %v695, %v113
  %v706 = vmul.bf16 %v694, %v123
  %v707 = vmul.bf16 %v695, %v127
  %v708 = vmul.bf16 %v696, %v125
  %v709 = vmul.bf16 %v694, %v135
  %v710 = vmul.bf16 %v695, %v139
  %v711 = vmul.bf16 %v696, %v137
  %v712 = vmul.bf16 %v694, %v147
  %v713 = vmul.bf16 %v695, %v151
  %v714 = vmul.bf16 %v696, %v149
  %718 = vrot.lane.b32.xlu0 %v693, 127
  %v719 = vpop.permute.xlu0 %718
  %720 = vrot.lane.b32.xlu0 %v694, 127
  %v721 = vpop.permute.xlu0 %720
  %722 = vrot.lane.b32.xlu0 %v695, 127
  %v723 = vpop.permute.xlu0 %722
  %v724 = vsel %vm114, %v719, %v721
  %v725 = vsel %vm114, %v721, %v723
  %729 = vrot.lane.b32.xlu0 %v700, 126
  %v730 = vpop.permute.xlu0 %729
  %731 = vrot.lane.b32.xlu0 %v701, 126
  %v732 = vpop.permute.xlu0 %731
  %733 = vrot.lane.b32.xlu0 %v702, 126
  %v734 = vpop.permute.xlu0 %733
  %v735 = vsel %vm178, %v730, %v732
  %v736 = vsel %vm178, %v732, %v734
  %740 = vrot.lane.b32.xlu0 %v703, 112
  %v741 = vpop.permute.xlu0 %740
  %742 = vrot.lane.b32.xlu0 %v704, 112
  %v743 = vpop.permute.xlu0 %742
  %744 = vrot.lane.b32.xlu0 %v705, 112
  %v745 = vpop.permute.xlu0 %744
  %v746 = vsel %vm190, %v741, %v743
  %v747 = vsel %vm190, %v743, %v745
  %748 = vrot.lane.b32.xlu0 %v694, 111
  %v749 = vpop.permute.xlu0 %748
  %750 = vrot.lane.b32.xlu0 %v695, 111
  %v751 = vpop.permute.xlu0 %750
  %v752 = vsel %vm74, %v749, %v751
  %756 = vrot.lane.b32.xlu0 %v706, 110
  %v757 = vpop.permute.xlu0 %756
  %758 = vrot.lane.b32.xlu0 %v707, 110
  %v759 = vpop.permute.xlu0 %758
  %760 = vrot.lane.b32.xlu0 %v708, 110
  %v761 = vpop.permute.xlu0 %760
  %v762 = vsel %vm207, %v757, %v759
  %v763 = vsel %vm207, %v759, %v761
  %767 = vrot.lane.b32.xlu0 %v709, 96
  %v768 = vpop.permute.xlu0 %767
  %769 = vrot.lane.b32.xlu0 %v710, 96
  %v770 = vpop.permute.xlu0 %769
  %771 = vrot.lane.b32.xlu0 %v711, 96
  %v772 = vpop.permute.xlu0 %771
  %v773 = vsel %vm219, %v768, %v770
  %v774 = vsel %vm219, %v770, %v772
  %776 = vrot.lane.b32.xlu0 %v694, 95
  %v777 = vpop.permute.xlu0 %776
  %778 = vrot.lane.b32.xlu0 %v695, 95
  %v779 = vpop.permute.xlu0 %778
  %780 = vrot.lane.b32.xlu0 %v696, 95
  %v781 = vpop.permute.xlu0 %780
  %v782 = vsel %vm229, %v777, %v779
  %v783 = vsel %vm229, %v779, %v781
  %787 = vrot.lane.b32.xlu0 %v712, 94
  %v788 = vpop.permute.xlu0 %787
  %789 = vrot.lane.b32.xlu0 %v713, 94
  %v790 = vpop.permute.xlu0 %789
  %791 = vrot.lane.b32.xlu0 %v714, 94
  %v792 = vpop.permute.xlu0 %791
  %v793 = vsel %vm241, %v788, %v790
  %v794 = vsel %vm241, %v790, %v792
  %795 = vset.pattern.permute.xlu0 2
  %796 = vperm.xlu0 %795, %v30
  %v797 = vpop.permute.xlu0 %796
  %799 = vset.pattern.permute.xlu0 2
  %800 = vperm.xlu0 %799, %v31
  %v801 = vpop.permute.xlu0 %800
  %v805 = vunpack.c.l.b16 %v689
  %v806 = vunpack.c.h.b16 %v689
  %v807 = vunpack.c.l.b16 %v690
  %v808 = vunpack.c.h.b16 %v690
  %v809 = vpack.c.b16 %v807, %v805
  %v810 = vpack.c.b16 %v808, %v806
  %815 = vrot.lane.b32.xlu0 %v697, 17
  %v816 = vpop.permute.xlu0 %815
  %817 = vrot.lane.b32.xlu0 %v698, 17
  %v818 = vpop.permute.xlu0 %817
  %819 = vrot.lane.b32.xlu0 %v699, 17
  %v820 = vpop.permute.xlu0 %819
  %821 = vrot.lane.b32.xlu0 %v724, 17
  %v822 = vpop.permute.xlu0 %821
  %823 = vrot.lane.b32.xlu0 %v725, 17
  %v824 = vpop.permute.xlu0 %823
  %825 = vrot.lane.b32.xlu0 %v723, 17
  %v826 = vpop.permute.xlu0 %825
  %827 = vrot.lane.b32.xlu0 %v735, 17
  %v828 = vpop.permute.xlu0 %827
  %829 = vrot.lane.b32.xlu0 %v736, 17
  %v830 = vpop.permute.xlu0 %829
  %831 = vrot.lane.b32.xlu0 %v734, 17
  %v832 = vpop.permute.xlu0 %831
  %833 = vrot.lane.b32.xlu0 %v746, 17
  %v834 = vpop.permute.xlu0 %833
  %835 = vrot.lane.b32.xlu0 %v747, 17
  %v836 = vpop.permute.xlu0 %835
  %837 = vrot.lane.b32.xlu0 %v745, 17
  %v838 = vpop.permute.xlu0 %837
  %839 = vrot.lane.b32.xlu0 %v749, 17
  %v840 = vpop.permute.xlu0 %839
  %841 = vrot.lane.b32.xlu0 %v752, 17
  %v842 = vpop.permute.xlu0 %841
  %843 = vrot.lane.b32.xlu0 %v751, 17
  %v844 = vpop.permute.xlu0 %843
  %845 = vrot.lane.b32.xlu0 %v757, 17
  %v846 = vpop.permute.xlu0 %845
  %847 = vrot.lane.b32.xlu0 %v762, 17
  %v848 = vpop.permute.xlu0 %847
  %849 = vrot.lane.b32.xlu0 %v763, 17
  %v850 = vpop.permute.xlu0 %849
  %851 = vrot.lane.b32.xlu0 %v768, 17
  %v852 = vpop.permute.xlu0 %851
  %853 = vrot.lane.b32.xlu0 %v773, 17
  %v854 = vpop.permute.xlu0 %853
  %855 = vrot.lane.b32.xlu0 %v774, 17
  %v856 = vpop.permute.xlu0 %855
  %857 = vrot.lane.b32.xlu0 %v777, 17
  %v858 = vpop.permute.xlu0 %857
  %859 = vrot.lane.b32.xlu0 %v782, 17
  %v860 = vpop.permute.xlu0 %859
  %861 = vrot.lane.b32.xlu0 %v783, 17
  %v862 = vpop.permute.xlu0 %861
  %863 = vrot.lane.b32.xlu0 %v788, 17
  %v864 = vpop.permute.xlu0 %863
  %865 = vrot.lane.b32.xlu0 %v793, 17
  %v866 = vpop.permute.xlu0 %865
  %867 = vrot.lane.b32.xlu0 %v794, 17
  %v868 = vpop.permute.xlu0 %867
  %v869 = vsel %vm150, %v816, %v818
  %v870 = vsel %vm150, %v818, %v820
  %v871 = vsel %vm150, %v822, %v824
  %v872 = vsel %vm150, %v824, %v826
  %v873 = vsel %vm150, %v828, %v830
  %v874 = vsel %vm150, %v830, %v832
  %v875 = vsel %vm150, %v834, %v836
  %v876 = vsel %vm150, %v836, %v838
  %v877 = vsel %vm150, %v840, %v842
  %v878 = vsel %vm150, %v842, %v844
  %v879 = vsel %vm150, %v846, %v848
  %v880 = vsel %vm150, %v848, %v850
  %v881 = vsel %vm150, %v852, %v854
  %v882 = vsel %vm150, %v854, %v856
  %v883 = vsel %vm150, %v858, %v860
  %v884 = vsel %vm150, %v860, %v862
  %v885 = vsel %vm150, %v864, %v866
  %v886 = vsel %vm150, %v866, %v868
  %v906 = vsel %vm356, %v810, 0
  %908 = vmatprep.subr.bf16.mxu0 %v870
  %909 = vmatpush1.bf16.msra.mxu0 %v869
  %910 = vmatprep.subr.bf16.mxu0 %v872
  %911 = vmatpush1.bf16.msra.mxu0 %v871
  %912 = vmatprep.subr.bf16.mxu0 %v874
  %913 = vmatpush1.bf16.msra.mxu0 %v873
  %914 = vmatprep.subr.bf16.mxu0 %v876
  %915 = vmatpush1.bf16.msra.mxu0 %v875
  %916 = vmatprep.subr.bf16.mxu0 %v878
  %917 = vmatpush1.bf16.msra.mxu0 %v877
  %918 = vmatprep.subr.bf16.mxu0 %v880
  %919 = vmatpush1.bf16.msra.mxu0 %v879
  %920 = vmatprep.subr.bf16.mxu0 %v882
  %921 = vmatpush1.bf16.msra.mxu0 %v881
  %922 = vmatprep.subr.bf16.mxu0 %v884
  %923 = vmatpush1.bf16.msra.mxu0 %v883
  %924 = vmatprep.subr.bf16.mxu0 %v886
  %925 = vmatpush1.bf16.msra.mxu0 %v885
  %926 = vmatprep.subr.bf16.mxu0 0
  %927 = vmatpush1.bf16.msra.mxu0 0
  %928 = vmatprep.subr.bf16.mxu0 0
  %929 = vmatpush1.bf16.msra.mxu0 0
  %930 = vmatprep.subr.bf16.mxu0 0
  %931 = vmatpush1.bf16.msra.mxu0 0
  %932 = vmatprep.subr.bf16.mxu0 0
  %933 = vmatpush1.bf16.msra.mxu0 0
  %934 = vmatprep.subr.bf16.mxu0 0
  %935 = vmatpush1.bf16.msra.mxu0 0
  %936 = vmatprep.subr.bf16.mxu0 0
  %937 = vmatpush1.bf16.msra.mxu0 0
  %938 = vmatprep.subr.bf16.mxu0 0
  %939 = vmatpush1.bf16.msra.mxu0 0
  %940 = vmatprep.mubr.bf16.mxu0 %v906
  %941 = vmatmul.mubr.bf16.gmra.mrb[0].mxu0 %v809
  %v942 = vpop.f32.mrb[0].mxu0
  %v943 = vadd.f32 %v797, %v942
  %v944 = vpop.f32.mrb[0].mxu0
  %v945 = vadd.f32 %v797, %v944
  %v946 = vpop.f32.mrb[0].mxu0
  %v947 = vadd.f32 %v801, %v946
  %v948 = vpop.f32.mrb[0].mxu0
  %v949 = vadd.f32 %v801, %v948
  %950 = vdwg.mxu0
  %v951 = vmax.f32 %v943, 0.0
  %v952 = vmax.f32 %v945, 0.0
  %v953 = vmax.f32 %v947, 0.0
  %v954 = vmax.f32 %v949, 0.0
  %v955 = vld [vmem:[%s1 + $0x30] sm:$0xf]
  %v956 = vld [vmem:[%s1 + $0x38] sm:$0xf]
  %v957 = vpack.c.bf16 %v953, %v951
  %v958 = vpack.c.bf16 %v954, %v952
  %959 = vset.pattern.permute.xlu0 3
  %960 = vperm.xlu0 %959, %v30
  %v961 = vpop.permute.xlu0 %960
  %963 = vset.pattern.permute.xlu0 3
  %964 = vperm.xlu0 %963, %v31
  %v965 = vpop.permute.xlu0 %964
  %v969 = vunpack.c.l.b16 %v955
  %v970 = vunpack.c.l.b16 %v956
  %v971 = vpack.c.b16 %v970, %v969
  %v973 = vsel %vm356, %v971, 0
  %975 = vmatprep.subr.bf16.mxu0 %v958
  %976 = vmatpush1.bf16.msra.mxu0 %v957
  %977 = vmatprep.subr.bf16.mxu0 0
  %978 = vmatpush1.bf16.msra.mxu0 0
  %979 = vmatprep.subr.bf16.mxu0 0
  %980 = vmatpush1.bf16.msra.mxu0 0
  %981 = vmatprep.subr.bf16.mxu0 0
  %982 = vmatpush1.bf16.msra.mxu0 0
  %983 = vmatprep.subr.bf16.mxu0 0
  %984 = vmatpush1.bf16.msra.mxu0 0
  %985 = vmatprep.subr.bf16.mxu0 0
  %986 = vmatpush1.bf16.msra.mxu0 0
  %987 = vmatprep.subr.bf16.mxu0 0
  %988 = vmatpush1.bf16.msra.mxu0 0
  %989 = vmatprep.subr.bf16.mxu0 0
  %990 = vmatpush1.bf16.msra.mxu0 0
  %991 = vmatprep.subr.bf16.mxu0 0
  %992 = vmatpush1.bf16.msra.mxu0 0
  %993 = vmatprep.subr.bf16.mxu0 0
  %994 = vmatpush1.bf16.msra.mxu0 0
  %995 = vmatprep.subr.bf16.mxu0 0
  %996 = vmatpush1.bf16.msra.mxu0 0
  %997 = vmatprep.subr.bf16.mxu0 0
  %998 = vmatpush1.bf16.msra.mxu0 0
  %999 = vmatprep.subr.bf16.mxu0 0
  %1000 = vmatpush1.bf16.msra.mxu0 0
  %1001 = vmatprep.subr.bf16.mxu0 0
  %1002 = vmatpush1.bf16.msra.mxu0 0
  %1003 = vmatprep.subr.bf16.mxu0 0
  %1004 = vmatpush1.bf16.msra.mxu0 0
  %1005 = vmatprep.subr.bf16.mxu0 0
  %1006 = vmatpush1.bf16.msra.mxu0 0
  %1007 = vmatprep.mubr.bf16.mxu0 0
  %1008 = vmatmul.mubr.bf16.gmra.mrb[0].mxu0 %v973
  %v1009 = vpop.f32.mrb[0].mxu0
  %v1010 = vadd.f32 %v961, %v1009
  %v1011 = vpop.f32.mrb[0].mxu0
  %v1012 = vadd.f32 %v961, %v1011
  %v1013 = vpop.f32.mrb[0].mxu0
  %v1014 = vadd.f32 %v965, %v1013
  %v1015 = vpop.f32.mrb[0].mxu0
  %v1016 = vadd.f32 %v965, %v1015
  %1017 = vdwg.mxu0
  %1018 = vst [vmem:[%s5] sm:$0xff] %v1010
  %1019 = vst [vmem:[%s5 + $0x8] sm:$0xff] %v1012
  %1020 = vst [vmem:[%s5 + $0x10] sm:$0xff] %v1014
  %1021 = vst [vmem:[%s5 + $0x18] sm:$0xff] %v1016
  %v1024 = vrot.slane %v22, 3
  %v1025 = vrot.slane %v23, 3
  %vm1028 = vcmask 1042432
  %v1029 = vsel %vm1028, %v1024, 0.0
  %v1030 = vsel %vm1028, %v1025, 0.0
  %v1031 = vadd.f32 %v1029, %v1030
  %1032 = vadd.xlane.f32.xlu0 %v1031
  %v1033 = vpop.xlane.xlu0 %1032
  %v1034 = vrot.slane %v1033, 4
  %v1035 = vadd.f32 %v1033, %v1034
  %v1036 = vrot.slane %v1035, 2
  %v1037 = vadd.f32 %v1035, %v1036
  %v1038 = vrot.slane %v1037, 1
  %v1039 = vadd.f32 %v1037, %v1038
  %s1040 = vtos %v1039
  %s1041 = smax.f32 %s1040, 1.0
  %v1042 = vmax.f32 %v1010, 0.0
  %v1043 = vmax.f32 %v1012, 0.0
  %v1044 = vand.u32 2147483647, %v1010
  %v1045 = vand.u32 2147483647, %v1012
  %v1046 = vsub.f32 0.0, %v1044
  %v1047 = vsub.f32 0.0, %v1045
  %v1048 = vmul.f32 %v1046, 1.442695
  %v1049 = vpow.pop %v1048
  %v1050 = vmul.f32 %v1047, 1.442695
  %v1051 = vpow.pop %v1050
  %v1052 = vadd.f32 %v1049, 1.0
  %v1053 = vadd.f32 %v1051, 1.0
  %v1054 = vlog2.pop %v1052
  %v1055 = vmul.f32 %v1054, 0.6931472
  %v1056 = vlog2.pop %v1053
  %v1057 = vmul.f32 %v1056, 0.6931472
  %v1058 = vadd.f32 %v1042, %v1055
  %v1059 = vadd.f32 %v1043, %v1057
  %v1060 = vmul.f32 %v22, %v1010
  %v1061 = vmul.f32 %v23, %v1012
  %v1062 = vsub.f32 %v1058, %v1060
  %v1063 = vsub.f32 %v1059, %v1061
  %v1066 = vrot.slane %v1062, 5
  %v1067 = vrot.slane %v1063, 5
  %v1070 = vmul.f32 %v22, %v1066
  %v1071 = vmul.f32 %v23, %v1067
  %v1074 = vrot.slane %v1070, 3
  %v1075 = vrot.slane %v1071, 3
  %v1078 = vsel %vm1028, %v1074, 0.0
  %v1079 = vsel %vm1028, %v1075, 0.0
  %v1080 = vadd.f32 %v1078, %v1079
  %1081 = vadd.xlane.f32.xlu0 %v1080
  %v1082 = vpop.xlane.xlu0 %1081
  %v1083 = vrot.slane %v1082, 4
  %v1084 = vadd.f32 %v1082, %v1083
  %v1085 = vrot.slane %v1084, 2
  %v1086 = vadd.f32 %v1084, %v1085
  %v1087 = vrot.slane %v1086, 1
  %v1088 = vadd.f32 %v1086, %v1087
  %s1089 = vtos %v1088
  %v1090 = vstv %s1041
  %v1091 = vrcp.pop %v1090
  %s1092 = vtos %v1091
  %s1093 = smul.f32 %s1089, %s1092
  %vm1098 = vcmask 1040384
  %v1099 = vrot.slane %v26, 7
  %v1100 = vrot.slane %v27, 7
  %v1101 = vrot.slane %v28, 7
  %v1102 = vsel %vm1098, %v1099, %v1101
  %v1103 = vrot.slane %v29, 7
  %v1104 = vsel %vm1098, %v1100, %v1103
  %v1109 = vsub.f32 %v1010, %v1099
  %v1110 = vsub.f32 %v1012, %v1100
  %v1111 = vsub.f32 %v1014, %v1102
  %v1112 = vsub.f32 %v1016, %v1104
  %v1117 = vrot.slane %v1109, 5
  %v1118 = vrot.slane %v1110, 5
  %v1119 = vrot.slane %v1111, 5
  %v1120 = vsel %vm1028, %v1117, %v1119
  %v1121 = vrot.slane %v1112, 5
  %v1122 = vsel %vm1028, %v1118, %v1121
  %v1129 = vmul.f32 %v22, %v1117
  %v1130 = vmul.f32 %v23, %v1118
  %v1131 = vmul.f32 %v24, %v1120
  %v1132 = vmul.f32 %v25, %v1122
  %v1133 = vmul.f32 %v26, %v1119
  %v1134 = vmul.f32 %v27, %v1121
  %v1135 = vand.u32 2147483647, %v1129
  %v1136 = vand.u32 2147483647, %v1130
  %v1137 = vand.u32 2147483647, %v1131
  %v1138 = vand.u32 2147483647, %v1132
  %v1139 = vand.u32 2147483647, %v1133
  %v1140 = vand.u32 2147483647, %v1134
  %vm1141 = vcmp.lt.f32.partialorder %v1135, 0.11111111
  %vm1142 = vcmp.lt.f32.partialorder %v1136, 0.11111111
  %vm1143 = vcmp.lt.f32.partialorder %v1137, 0.11111111
  %vm1144 = vcmp.lt.f32.partialorder %v1138, 0.11111111
  %vm1145 = vcmp.lt.f32.partialorder %v1139, 0.11111111
  %vm1146 = vcmp.lt.f32.partialorder %v1140, 0.11111111
  %v1147 = vsel %vm1141, 1, 0
  %v1148 = vsel %vm1142, 1, 0
  %v1149 = vsel %vm1143, 1, 0
  %v1150 = vsel %vm1144, 1, 0
  %v1151 = vsel %vm1145, 1, 0
  %v1152 = vsel %vm1146, 1, 0
  %v1153 = vcvt.s32.f32 %v1147
  %v1154 = vcvt.s32.f32 %v1148
  %v1155 = vcvt.s32.f32 %v1149
  %v1156 = vcvt.s32.f32 %v1150
  %v1157 = vcvt.s32.f32 %v1151
  %v1158 = vcvt.s32.f32 %v1152
  %v1159 = vmul.f32 %v1153, 0.5
  %v1160 = vmul.f32 %v1154, 0.5
  %v1161 = vmul.f32 %v1155, 0.5
  %v1162 = vmul.f32 %v1156, 0.5
  %v1163 = vmul.f32 %v1157, 0.5
  %v1164 = vmul.f32 %v1158, 0.5
  %v1165 = vmul.f32 %v1159, 9.0
  %v1166 = vmul.f32 %v1160, 9.0
  %v1167 = vmul.f32 %v1161, 9.0
  %v1168 = vmul.f32 %v1162, 9.0
  %v1169 = vmul.f32 %v1163, 9.0
  %v1170 = vmul.f32 %v1164, 9.0
  %v1171 = vmul.f32 %v1165, %v1129
  %v1172 = vmul.f32 %v1166, %v1130
  %v1173 = vmul.f32 %v1167, %v1131
  %v1174 = vmul.f32 %v1168, %v1132
  %v1175 = vmul.f32 %v1169, %v1133
  %v1176 = vmul.f32 %v1170, %v1134
  %v1177 = vmul.f32 %v1171, %v1129
  %v1178 = vmul.f32 %v1172, %v1130
  %v1179 = vmul.f32 %v1173, %v1131
  %v1180 = vmul.f32 %v1174, %v1132
  %v1181 = vmul.f32 %v1175, %v1133
  %v1182 = vmul.f32 %v1176, %v1134
  %v1183 = vsub.f32 1.0, %v1153
  %v1184 = vsub.f32 1.0, %v1154
  %v1185 = vsub.f32 1.0, %v1155
  %v1186 = vsub.f32 1.0, %v1156
  %v1187 = vsub.f32 1.0, %v1157
  %v1188 = vsub.f32 1.0, %v1158
  %v1189 = vsub.f32 %v1135, 0.055555556
  %v1190 = vsub.f32 %v1136, 0.055555556
  %v1191 = vsub.f32 %v1137, 0.055555556
  %v1192 = vsub.f32 %v1138, 0.055555556
  %v1193 = vsub.f32 %v1139, 0.055555556
  %v1194 = vsub.f32 %v1140, 0.055555556
  %v1195 = vmul.f32 %v1183, %v1189
  %v1196 = vmul.f32 %v1184, %v1190
  %v1197 = vmul.f32 %v1185, %v1191
  %v1198 = vmul.f32 %v1186, %v1192
  %v1199 = vmul.f32 %v1187, %v1193
  %v1200 = vmul.f32 %v1188, %v1194
  %v1201 = vadd.f32 %v1177, %v1195
  %v1202 = vadd.f32 %v1178, %v1196
  %v1203 = vadd.f32 %v1179, %v1197
  %v1204 = vadd.f32 %v1180, %v1198
  %v1205 = vadd.f32 %v1181, %v1199
  %v1206 = vadd.f32 %v1182, %v1200
  %vm1213 = vcmask 1041408
  %v1214 = vrot.slane %v1201, 6
  %v1215 = vrot.slane %v1203, 6
  %v1216 = vsel %vm1213, %v1214, %v1215
  %v1217 = vrot.slane %v1202, 6
  %v1218 = vrot.slane %v1204, 6
  %v1219 = vsel %vm1213, %v1217, %v1218
  %v1220 = vrot.slane %v1205, 6
  %v1221 = vsel %vm1213, %v1215, %v1220
  %v1222 = vrot.slane %v1206, 6
  %v1223 = vsel %vm1213, %v1218, %v1222
  %v1228 = vadd.f32 %v1216, %v1219
  %vm1229 = vcmask 1043456
  %v1230 = vsel %vm1229, %v1221, 0.0
  %v1231 = vadd.f32 %v1228, %v1230
  %v1232 = vsel %vm1229, %v1223, 0.0
  %v1233 = vadd.f32 %v1231, %v1232
  %1234 = vadd.xlane.f32.xlu0 %v1233
  %v1235 = vpop.xlane.xlu0 %1234
  %v1236 = vrot.slane %v1235, 4
  %v1237 = vadd.f32 %v1235, %v1236
  %v1238 = vrot.slane %v1237, 2
  %v1239 = vadd.f32 %v1237, %v1238
  %v1240 = vrot.slane %v1239, 1
  %v1241 = vadd.f32 %v1239, %v1240
  %s1242 = vtos %v1241
  %v1243 = vstv %s1041
  %v1244 = vrcp.pop %v1243
  %s1245 = vtos %v1244
  %s1246 = smul.f32 %s1242, %s1245
  %v1247 = vlaneseq
  %v1248 = vand.u32 %v1247, 127
  %vm1249 = vcmp.eq.s32.totalorder %v1248, 0
  %v1250 = vstv %s1246
  %v1251 = vstv %s1093
  %v1252 = vsel %vm1249, %v1250, %v1251
  %vm1253 = vcmask 8192
  %1254 = vst.msk [vmem:[%s5 + $0x17] sm:$0x1] %vm1253, %v1252
  // Predicated region
  $region18: #{_faster_rcnn_forward.2} parent=0 // pred_check
    _
  $region19: #{_faster_rcnn_forward.2} parent=0 // pred_check_branch
    %1256 = sbr.rel (0) target = $region21
  $region20: #{_faster_rcnn_forward.2} parent=0 // pred_region
    _
  $region21: #{_faster_rcnn_forward.2} parent=0 // pred_fallthru
    _
  // Predicated region
  $region22: #{_faster_rcnn_forward.2} parent=0 // pred_check
    _
  $region23: #{_faster_rcnn_forward.2} parent=0 // pred_check_branch
    %1258 = sbr.rel (0) target = $region25
  $region24: #{_faster_rcnn_forward.2} parent=0 // pred_region
    _
  $region25: #{_faster_rcnn_forward.2} parent=0 // pred_fallthru
    _
  // Predicated region
  $region26: #{_faster_rcnn_forward.2} parent=0 // pred_check
    _
  $region27: #{_faster_rcnn_forward.2} parent=0 // pred_check_branch
    %1260 = sbr.rel (0) target = $region29
  $region28: #{_faster_rcnn_forward.2} parent=0 // pred_region
    _
  $region29: #{_faster_rcnn_forward.2} parent=0 // pred_fallthru
    _
  // Predicated region
  $region30: #{_faster_rcnn_forward.2} parent=0 // pred_check
    _
  $region31: #{_faster_rcnn_forward.2} parent=0 // pred_check_branch
    %1262 = sbr.rel (0) target = $region33
  $region32: #{_faster_rcnn_forward.2} parent=0 // pred_region
    _
  $region33: #{_faster_rcnn_forward.2} parent=0 // pred_fallthru
    _

// kernel: _faster_rcnn_forward.3
$region0: #{_faster_rcnn_forward.3}
  #allocation0 [shape = 'u32[]', space=smem, size = 0x4, offset = 0x4, fixed_abs, tag = 'smem constant byte address 0x4 - core index']
  #allocation1 [shape = 'u32[144,128]{1,0:T(1,128)}', space=vmem, size = 0x12000, scoped, tag = 'internal scratch']
  %s0 = inlined_call_operand.vmem [shape: bf16[128,784], index: 0, kind: input, shape index: {}]
  %s1 = inlined_call_operand.vmem [shape: bf16[1040,128], index: 1, kind: input, shape index: {}]
  %s2 = inlined_call_operand.vmem [shape: f32[3,128], index: 2, kind: input, shape index: {}]
  %s3 = inlined_call_operand.vmem [shape: f32[128,8], index: 3, kind: input, shape index: {}]
  %s4 = inlined_call_operand.vmem [shape: f32[1,2], index: 4, kind: output, shape index: {}]
  %s5 = sld [smem:[#allocation0]]
  $region26: #{_faster_rcnn_forward.3} parent=0
    _
  %s7 = ssub.s32 1, %s5
  %s8 = scalar_select 0, %s7, %s5
  // Predicated region
  $region2: #{_faster_rcnn_forward.3} parent=0 // pred_check
    _
  $region3: #{_faster_rcnn_forward.3} parent=0 // pred_check_branch
    %10 = sbr.rel (0) target = $region5
  $region4: #{_faster_rcnn_forward.3} parent=0 // pred_region
    _
  $region5: #{_faster_rcnn_forward.3} parent=0 // pred_fallthru
    _
  // Predicated region
  $region6: #{_faster_rcnn_forward.3} parent=0 // pred_check
    _
  $region7: #{_faster_rcnn_forward.3} parent=0 // pred_check_branch
    %12 = sbr.rel (0) target = $region9
  $region8: #{_faster_rcnn_forward.3} parent=0 // pred_region
    _
  $region9: #{_faster_rcnn_forward.3} parent=0 // pred_fallthru
    _
  // Predicated region
  $region10: #{_faster_rcnn_forward.3} parent=0 // pred_check
    _
  $region11: #{_faster_rcnn_forward.3} parent=0 // pred_check_branch
    %14 = sbr.rel (0) target = $region13
  $region12: #{_faster_rcnn_forward.3} parent=0 // pred_region
    _
  $region13: #{_faster_rcnn_forward.3} parent=0 // pred_fallthru
    _
  // Predicated region
  $region14: #{_faster_rcnn_forward.3} parent=0 // pred_check
    _
  $region15: #{_faster_rcnn_forward.3} parent=0 // pred_check_branch
    %16 = sbr.rel (0) target = $region17
  $region16: #{_faster_rcnn_forward.3} parent=0 // pred_region
    _
  $region17: #{_faster_rcnn_forward.3} parent=0 // pred_fallthru
    _
  %v18 = vld [vmem:[%s2] sm:$0x7]
  %v19 = vld [vmem:[%s0] sm:$0xff]
  %v20 = vld [vmem:[%s0 + $0x8] sm:$0xff]
  %v21 = vld [vmem:[%s0 + $0x10] sm:$0xff]
  %v22 = vld [vmem:[%s0 + $0x18] sm:$0xf]
  %v23 = vld [vmem:[%s0 + $0x1c] sm:$0xff]
  %v24 = vld [vmem:[%s0 + $0x24] sm:$0xff]
  %v25 = vld [vmem:[%s0 + $0x2c] sm:$0xff]
  %v26 = vld [vmem:[%s0 + $0x34] sm:$0xf]
  %v27 = vld [vmem:[%s0 + $0x38] sm:$0xff]
  %v28 = vld [vmem:[%s0 + $0x40] sm:$0xff]
  %v29 = vld [vmem:[%s0 + $0x48] sm:$0xff]
  %v30 = vld [vmem:[%s0 + $0x50] sm:$0xf]
  %v31 = vld [vmem:[%s0 + $0x54] sm:$0xff]
  %v32 = vld [vmem:[%s0 + $0x5c] sm:$0xff]
  %v33 = vld [vmem:[%s0 + $0x64] sm:$0xff]
  %v34 = vld [vmem:[%s0 + $0x6c] sm:$0xf]
  %v35 = vld [vmem:[%s0 + $0x70] sm:$0xff]
  %v36 = vld [vmem:[%s0 + $0x78] sm:$0xff]
  %v37 = vld [vmem:[%s0 + $0x80] sm:$0xff]
  %v38 = vld [vmem:[%s0 + $0x88] sm:$0xf]
  %v39 = vld [vmem:[%s0 + $0x8c] sm:$0xff]
  %v40 = vld [vmem:[%s0 + $0x94] sm:$0xff]
  %v41 = vld [vmem:[%s0 + $0x9c] sm:$0xff]
  %v42 = vld [vmem:[%s0 + $0xa4] sm:$0xf]
  %v43 = vld [vmem:[%s0 + $0xa8] sm:$0xff]
  %v44 = vld [vmem:[%s0 + $0xb0] sm:$0xff]
  %v45 = vld [vmem:[%s0 + $0xb8] sm:$0xff]
  %v46 = vld [vmem:[%s0 + $0xc0] sm:$0xf]
  %v47 = vld [vmem:[%s0 + $0xc4] sm:$0xff]
  %v48 = vld [vmem:[%s0 + $0xcc] sm:$0xff]
  %v49 = vld [vmem:[%s0 + $0xd4] sm:$0xff]
  %v50 = vld [vmem:[%s0 + $0xdc] sm:$0xf]
  %v51 = vld [vmem:[%s0 + $0xe0] sm:$0xff]
  %v52 = vld [vmem:[%s0 + $0xe8] sm:$0xff]
  %v53 = vld [vmem:[%s0 + $0xf0] sm:$0xff]
  %v54 = vld [vmem:[%s0 + $0xf8] sm:$0xf]
  %v55 = vld [vmem:[%s0 + $0xfc] sm:$0xff]
  %v56 = vld [vmem:[%s0 + $0x104] sm:$0xff]
  %v57 = vld [vmem:[%s0 + $0x10c] sm:$0xff]
  %v58 = vld [vmem:[%s0 + $0x114] sm:$0xf]
  %v59 = vld [vmem:[%s0 + $0x118] sm:$0xff]
  %v60 = vld [vmem:[%s0 + $0x120] sm:$0xff]
  %v61 = vld [vmem:[%s0 + $0x128] sm:$0xff]
  %v62 = vld [vmem:[%s0 + $0x130] sm:$0xf]
  %v63 = vld [vmem:[%s0 + $0x134] sm:$0xff]
  %v64 = vld [vmem:[%s0 + $0x13c] sm:$0xff]
  %v65 = vld [vmem:[%s0 + $0x144] sm:$0xff]
  %v66 = vld [vmem:[%s0 + $0x14c] sm:$0xf]
  %v67 = vld [vmem:[%s0 + $0x150] sm:$0xff]
  %v68 = vld [vmem:[%s0 + $0x158] sm:$0xff]
  %v69 = vld [vmem:[%s0 + $0x160] sm:$0xff]
  %v70 = vld [vmem:[%s0 + $0x168] sm:$0xf]
  %v71 = vld [vmem:[%s0 + $0x16c] sm:$0xff]
  %v72 = vld [vmem:[%s0 + $0x174] sm:$0xff]
  %v73 = vld [vmem:[%s0 + $0x17c] sm:$0xff]
  %v74 = vld [vmem:[%s0 + $0x184] sm:$0xf]
  %v75 = vld [vmem:[%s0 + $0x188] sm:$0xff]
  %v76 = vld [vmem:[%s0 + $0x190] sm:$0xff]
  %v77 = vld [vmem:[%s0 + $0x198] sm:$0xff]
  %v78 = vld [vmem:[%s0 + $0x1a0] sm:$0xf]
  %v79 = vld [vmem:[%s0 + $0x1a4] sm:$0xff]
  %v80 = vld [vmem:[%s0 + $0x1ac] sm:$0xff]
  %v81 = vld [vmem:[%s0 + $0x1b4] sm:$0xff]
  %v82 = vld [vmem:[%s0 + $0x1bc] sm:$0xf]
  %v83 = vld [vmem:[%s1] sm:$0xf]
  %v84 = vld [vmem:[%s1 + $0x4] sm:$0xf]
  %v85 = vld [vmem:[%s1 + $0x8] sm:$0xf]
  %v86 = vld [vmem:[%s1 + $0xc] sm:$0xf]
  %v87 = vld [vmem:[%s1 + $0x10] sm:$0xf]
  %v88 = vld [vmem:[%s1 + $0x14] sm:$0xf]
  %v89 = vld [vmem:[%s1 + $0x18] sm:$0xf]
  %v90 = vld [vmem:[%s1 + $0x1c] sm:$0xf]
  %v91 = vld [vmem:[%s1 + $0x20] sm:$0xf]
  %v92 = vld [vmem:[%s1 + $0x24] sm:$0xf]
  %v93 = vld [vmem:[%s1 + $0x28] sm:$0xf]
  %v94 = vld [vmem:[%s1 + $0x2c] sm:$0xf]
  %v95 = vld [vmem:[%s1 + $0x30] sm:$0xf]
  %v96 = vld [vmem:[%s1 + $0x34] sm:$0xf]
  %v97 = vld [vmem:[%s1 + $0x38] sm:$0xf]
  %v98 = vld [vmem:[%s1 + $0x3c] sm:$0xf]
  %v99 = vld [vmem:[%s1 + $0x40] sm:$0xf]
  %v100 = vld [vmem:[%s1 + $0x44] sm:$0xf]
  %v101 = vld [vmem:[%s1 + $0x48] sm:$0xf]
  %v102 = vld [vmem:[%s1 + $0x4c] sm:$0xf]
  %v103 = vld [vmem:[%s1 + $0x50] sm:$0xf]
  %v104 = vld [vmem:[%s1 + $0x54] sm:$0xf]
  %v105 = vld [vmem:[%s1 + $0x58] sm:$0xf]
  %v106 = vld [vmem:[%s1 + $0x5c] sm:$0xf]
  %v107 = vld [vmem:[%s1 + $0x60] sm:$0xf]
  %v108 = vld [vmem:[%s1 + $0x64] sm:$0xf]
  %v109 = vld [vmem:[%s1 + $0x68] sm:$0xf]
  %v110 = vld [vmem:[%s1 + $0x6c] sm:$0xf]
  %v111 = vld [vmem:[%s1 + $0x70] sm:$0xf]
  %v112 = vld [vmem:[%s1 + $0x74] sm:$0xf]
  %v113 = vld [vmem:[%s1 + $0x78] sm:$0xf]
  %v114 = vld [vmem:[%s1 + $0x7c] sm:$0xf]
  %v115 = vld [vmem:[%s1 + $0x80] sm:$0xf]
  %v116 = vld [vmem:[%s1 + $0x84] sm:$0xf]
  %v117 = vld [vmem:[%s1 + $0x88] sm:$0xf]
  %v118 = vld [vmem:[%s1 + $0x8c] sm:$0xf]
  %v119 = vld [vmem:[%s1 + $0x90] sm:$0xf]
  %v120 = vld [vmem:[%s1 + $0x94] sm:$0xf]
  %v121 = vld [vmem:[%s1 + $0x98] sm:$0xf]
  %v122 = vld [vmem:[%s1 + $0x9c] sm:$0xf]
  %v123 = vld [vmem:[%s1 + $0xa0] sm:$0xf]
  %v124 = vld [vmem:[%s1 + $0xa4] sm:$0xf]
  %v125 = vld [vmem:[%s1 + $0xa8] sm:$0xf]
  %v126 = vld [vmem:[%s1 + $0xac] sm:$0xf]
  %v127 = vld [vmem:[%s1 + $0xb0] sm:$0xf]
  %v128 = vld [vmem:[%s1 + $0xb4] sm:$0xf]
  %v129 = vld [vmem:[%s1 + $0xb8] sm:$0xf]
  %v130 = vld [vmem:[%s1 + $0xbc] sm:$0xf]
  %v131 = vld [vmem:[%s1 + $0xc0] sm:$0xf]
  %v132 = vld [vmem:[%s1 + $0xc4] sm:$0xf]
  %v133 = vld [vmem:[%s1 + $0xc8] sm:$0xf]
  %v134 = vld [vmem:[%s1 + $0xcc] sm:$0xf]
  %v135 = vld [vmem:[%s1 + $0xd0] sm:$0xf]
  %v136 = vld [vmem:[%s1 + $0xd4] sm:$0xf]
  %v137 = vld [vmem:[%s1 + $0xd8] sm:$0xf]
  %v138 = vld [vmem:[%s1 + $0xdc] sm:$0xf]
  %v139 = vld [vmem:[%s1 + $0xe0] sm:$0xf]
  %v140 = vld [vmem:[%s1 + $0xe4] sm:$0xf]
  %v141 = vld [vmem:[%s1 + $0xe8] sm:$0xf]
  %v142 = vld [vmem:[%s1 + $0xec] sm:$0xf]
  %v143 = vld [vmem:[%s1 + $0xf0] sm:$0xf]
  %v144 = vld [vmem:[%s1 + $0xf4] sm:$0xf]
  %v145 = vld [vmem:[%s1 + $0xf8] sm:$0xf]
  %v146 = vld [vmem:[%s1 + $0xfc] sm:$0xf]
  %v147 = vld [vmem:[%s1 + $0x100] sm:$0xf]
  %v148 = vld [vmem:[%s1 + $0x104] sm:$0xf]
  %v149 = vld [vmem:[%s1 + $0x108] sm:$0xf]
  %v150 = vld [vmem:[%s1 + $0x10c] sm:$0xf]
  %v151 = vld [vmem:[%s1 + $0x110] sm:$0xf]
  %v152 = vld [vmem:[%s1 + $0x114] sm:$0xf]
  %v153 = vld [vmem:[%s1 + $0x118] sm:$0xf]
  %v154 = vld [vmem:[%s1 + $0x11c] sm:$0xf]
  %v155 = vld [vmem:[%s1 + $0x120] sm:$0xf]
  %v156 = vld [vmem:[%s1 + $0x124] sm:$0xf]
  %v157 = vld [vmem:[%s1 + $0x128] sm:$0xf]
  %v158 = vld [vmem:[%s1 + $0x12c] sm:$0xf]
  %v159 = vld [vmem:[%s1 + $0x130] sm:$0xf]
  %v160 = vld [vmem:[%s1 + $0x134] sm:$0xf]
  %v161 = vld [vmem:[%s1 + $0x138] sm:$0xf]
  %v162 = vld [vmem:[%s1 + $0x13c] sm:$0xf]
  %v163 = vld [vmem:[%s1 + $0x140] sm:$0xf]
  %v164 = vld [vmem:[%s1 + $0x144] sm:$0xf]
  %v165 = vld [vmem:[%s1 + $0x148] sm:$0xf]
  %v166 = vld [vmem:[%s1 + $0x14c] sm:$0xf]
  %v167 = vld [vmem:[%s1 + $0x150] sm:$0xf]
  %v168 = vld [vmem:[%s1 + $0x154] sm:$0xf]
  %v169 = vld [vmem:[%s1 + $0x158] sm:$0xf]
  %v170 = vld [vmem:[%s1 + $0x15c] sm:$0xf]
  %v171 = vld [vmem:[%s1 + $0x160] sm:$0xf]
  %v172 = vld [vmem:[%s1 + $0x164] sm:$0xf]
  %v173 = vld [vmem:[%s1 + $0x168] sm:$0xf]
  %v174 = vld [vmem:[%s1 + $0x16c] sm:$0xf]
  %v175 = vld [vmem:[%s1 + $0x170] sm:$0xf]
  %v176 = vld [vmem:[%s1 + $0x174] sm:$0xf]
  %v177 = vld [vmem:[%s1 + $0x178] sm:$0xf]
  %v178 = vld [vmem:[%s1 + $0x17c] sm:$0xf]
  %v179 = vld [vmem:[%s1 + $0x180] sm:$0xf]
  %v180 = vld [vmem:[%s1 + $0x184] sm:$0xf]
  %v181 = vlaneseq
  %v182 = vshrl.u32 %v181, 7
  %v183 = vsub.s32 0, %v182
  %v184 = vrot.slane %v18, %v183
  %v249 = vunpack.c.l.b16 %v19
  %v250 = vunpack.c.h.b16 %v19
  %v251 = vunpack.c.l.b16 %v20
  %v252 = vunpack.c.h.b16 %v20
  %v253 = vunpack.c.l.b16 %v21
  %v254 = vunpack.c.h.b16 %v21
  %v255 = vunpack.c.l.b16 %v22
  %v256 = vunpack.c.l.b16 %v23
  %v257 = vunpack.c.h.b16 %v23
  %v258 = vunpack.c.l.b16 %v24
  %v259 = vunpack.c.h.b16 %v24
  %v260 = vunpack.c.l.b16 %v25
  %v261 = vunpack.c.h.b16 %v25
  %v262 = vunpack.c.l.b16 %v26
  %v263 = vunpack.c.l.b16 %v27
  %v264 = vunpack.c.h.b16 %v27
  %v265 = vunpack.c.l.b16 %v28
  %v266 = vunpack.c.h.b16 %v28
  %v267 = vunpack.c.l.b16 %v29
  %v268 = vunpack.c.h.b16 %v29
  %v269 = vunpack.c.l.b16 %v30
  %v270 = vunpack.c.l.b16 %v31
  %v271 = vunpack.c.h.b16 %v31
  %v272 = vunpack.c.l.b16 %v32
  %v273 = vunpack.c.h.b16 %v32
  %v274 = vunpack.c.l.b16 %v33
  %v275 = vunpack.c.h.b16 %v33
  %v276 = vunpack.c.l.b16 %v34
  %v277 = vunpack.c.l.b16 %v35
  %v278 = vunpack.c.h.b16 %v35
  %v279 = vunpack.c.l.b16 %v36
  %v280 = vunpack.c.h.b16 %v36
  %v281 = vunpack.c.l.b16 %v37
  %v282 = vunpack.c.h.b16 %v37
  %v283 = vunpack.c.l.b16 %v38
  %v284 = vunpack.c.l.b16 %v39
  %v285 = vunpack.c.h.b16 %v39
  %v286 = vunpack.c.l.b16 %v40
  %v287 = vunpack.c.h.b16 %v40
  %v288 = vunpack.c.l.b16 %v41
  %v289 = vunpack.c.h.b16 %v41
  %v290 = vunpack.c.l.b16 %v42
  %v291 = vunpack.c.l.b16 %v43
  %v292 = vunpack.c.h.b16 %v43
  %v293 = vunpack.c.l.b16 %v44
  %v294 = vunpack.c.h.b16 %v44
  %v295 = vunpack.c.l.b16 %v45
  %v296 = vunpack.c.h.b16 %v45
  %v297 = vunpack.c.l.b16 %v46
  %v298 = vunpack.c.l.b16 %v47
  %v299 = vunpack.c.h.b16 %v47
  %v300 = vunpack.c.l.b16 %v48
  %v301 = vunpack.c.h.b16 %v48
  %v302 = vunpack.c.l.b16 %v49
  %v303 = vunpack.c.h.b16 %v49
  %v304 = vunpack.c.l.b16 %v50
  %v305 = vunpack.c.l.b16 %v51
  %v306 = vunpack.c.h.b16 %v51
  %v307 = vunpack.c.l.b16 %v52
  %v308 = vunpack.c.h.b16 %v52
  %v309 = vunpack.c.l.b16 %v53
  %v310 = vunpack.c.h.b16 %v53
  %v311 = vunpack.c.l.b16 %v54
  %v312 = vunpack.c.l.b16 %v55
  %v313 = vunpack.c.h.b16 %v55
  %v314 = vunpack.c.l.b16 %v56
  %v315 = vunpack.c.h.b16 %v56
  %v316 = vunpack.c.l.b16 %v57
  %v317 = vunpack.c.h.b16 %v57
  %v318 = vunpack.c.l.b16 %v58
  %v319 = vunpack.c.l.b16 %v59
  %v320 = vunpack.c.h.b16 %v59
  %v321 = vunpack.c.l.b16 %v60
  %v322 = vunpack.c.h.b16 %v60
  %v323 = vunpack.c.l.b16 %v61
  %v324 = vunpack.c.h.b16 %v61
  %v325 = vunpack.c.l.b16 %v62
  %v326 = vunpack.c.l.b16 %v63
  %v327 = vunpack.c.h.b16 %v63
  %v328 = vunpack.c.l.b16 %v64
  %v329 = vunpack.c.h.b16 %v64
  %v330 = vunpack.c.l.b16 %v65
  %v331 = vunpack.c.h.b16 %v65
  %v332 = vunpack.c.l.b16 %v66
  %v333 = vunpack.c.l.b16 %v67
  %v334 = vunpack.c.h.b16 %v67
  %v335 = vunpack.c.l.b16 %v68
  %v336 = vunpack.c.h.b16 %v68
  %v337 = vunpack.c.l.b16 %v69
  %v338 = vunpack.c.h.b16 %v69
  %v339 = vunpack.c.l.b16 %v70
  %v340 = vunpack.c.l.b16 %v71
  %v341 = vunpack.c.h.b16 %v71
  %v342 = vunpack.c.l.b16 %v72
  %v343 = vunpack.c.h.b16 %v72
  %v344 = vunpack.c.l.b16 %v73
  %v345 = vunpack.c.h.b16 %v73
  %v346 = vunpack.c.l.b16 %v74
  %v347 = vunpack.c.l.b16 %v75
  %v348 = vunpack.c.h.b16 %v75
  %v349 = vunpack.c.l.b16 %v76
  %v350 = vunpack.c.h.b16 %v76
  %v351 = vunpack.c.l.b16 %v77
  %v352 = vunpack.c.h.b16 %v77
  %v353 = vunpack.c.l.b16 %v78
  %v354 = vunpack.c.l.b16 %v79
  %v355 = vunpack.c.h.b16 %v79
  %v356 = vunpack.c.l.b16 %v80
  %v357 = vunpack.c.h.b16 %v80
  %v358 = vunpack.c.l.b16 %v81
  %v359 = vunpack.c.h.b16 %v81
  %v360 = vunpack.c.l.b16 %v82
  %v361 = vpack.c.b16 %v256, %v249
  %v362 = vpack.c.b16 %v257, %v250
  %v363 = vpack.c.b16 %v258, %v251
  %v364 = vpack.c.b16 %v259, %v252
  %v365 = vpack.c.b16 %v260, %v253
  %v366 = vpack.c.b16 %v261, %v254
  %v367 = vpack.c.b16 %v262, %v255
  %v368 = vpack.c.b16 %v270, %v263
  %v369 = vpack.c.b16 %v271, %v264
  %v370 = vpack.c.b16 %v272, %v265
  %v371 = vpack.c.b16 %v273, %v266
  %v372 = vpack.c.b16 %v274, %v267
  %v373 = vpack.c.b16 %v275, %v268
  %v374 = vpack.c.b16 %v276, %v269
  %v375 = vpack.c.b16 %v284, %v277
  %v376 = vpack.c.b16 %v285, %v278
  %v377 = vpack.c.b16 %v286, %v279
  %v378 = vpack.c.b16 %v287, %v280
  %v379 = vpack.c.b16 %v288, %v281
  %v380 = vpack.c.b16 %v289, %v282
  %v381 = vpack.c.b16 %v290, %v283
  %v382 = vpack.c.b16 %v298, %v291
  %v383 = vpack.c.b16 %v299, %v292
  %v384 = vpack.c.b16 %v300, %v293
  %v385 = vpack.c.b16 %v301, %v294
  %v386 = vpack.c.b16 %v302, %v295
  %v387 = vpack.c.b16 %v303, %v296
  %v388 = vpack.c.b16 %v304, %v297
  %v389 = vpack.c.b16 %v312, %v305
  %v390 = vpack.c.b16 %v313, %v306
  %v391 = vpack.c.b16 %v314, %v307
  %v392 = vpack.c.b16 %v315, %v308
  %v393 = vpack.c.b16 %v316, %v309
  %v394 = vpack.c.b16 %v317, %v310
  %v395 = vpack.c.b16 %v318, %v311
  %v396 = vpack.c.b16 %v326, %v319
  %v397 = vpack.c.b16 %v327, %v320
  %v398 = vpack.c.b16 %v328, %v321
  %v399 = vpack.c.b16 %v329, %v322
  %v400 = vpack.c.b16 %v330, %v323
  %v401 = vpack.c.b16 %v331, %v324
  %v402 = vpack.c.b16 %v332, %v325
  %v403 = vpack.c.b16 %v340, %v333
  %v404 = vpack.c.b16 %v341, %v334
  %v405 = vpack.c.b16 %v342, %v335
  %v406 = vpack.c.b16 %v343, %v336
  %v407 = vpack.c.b16 %v344, %v337
  %v408 = vpack.c.b16 %v345, %v338
  %v409 = vpack.c.b16 %v346, %v339
  %v410 = vpack.c.b16 %v354, %v347
  %v411 = vpack.c.b16 %v355, %v348
  %v412 = vpack.c.b16 %v356, %v349
  %v413 = vpack.c.b16 %v357, %v350
  %v414 = vpack.c.b16 %v358, %v351
  %v415 = vpack.c.b16 %v359, %v352
  %v416 = vpack.c.b16 %v360, %v353
  %v563 = vunpack.c.l.b16 %v83
  %v564 = vunpack.c.l.b16 %v84
  %v565 = vunpack.c.l.b16 %v85
  %v566 = vunpack.c.l.b16 %v86
  %v567 = vunpack.c.l.b16 %v87
  %v568 = vunpack.c.l.b16 %v88
  %v569 = vunpack.c.l.b16 %v89
  %v570 = vunpack.c.l.b16 %v90
  %v571 = vunpack.c.l.b16 %v91
  %v572 = vunpack.c.l.b16 %v92
  %v573 = vunpack.c.l.b16 %v93
  %v574 = vunpack.c.l.b16 %v94
  %v575 = vunpack.c.l.b16 %v95
  %v576 = vunpack.c.l.b16 %v96
  %v577 = vunpack.c.l.b16 %v97
  %v578 = vunpack.c.l.b16 %v98
  %v579 = vunpack.c.l.b16 %v99
  %v580 = vunpack.c.l.b16 %v100
  %v581 = vunpack.c.l.b16 %v101
  %v582 = vunpack.c.l.b16 %v102
  %v583 = vunpack.c.l.b16 %v103
  %v584 = vunpack.c.l.b16 %v104
  %v585 = vunpack.c.l.b16 %v105
  %v586 = vunpack.c.l.b16 %v106
  %v587 = vunpack.c.l.b16 %v107
  %v588 = vunpack.c.l.b16 %v108
  %v589 = vunpack.c.l.b16 %v109
  %v590 = vunpack.c.l.b16 %v110
  %v591 = vunpack.c.l.b16 %v111
  %v592 = vunpack.c.l.b16 %v112
  %v593 = vunpack.c.l.b16 %v113
  %v594 = vunpack.c.l.b16 %v114
  %v595 = vunpack.c.l.b16 %v115
  %v596 = vunpack.c.l.b16 %v116
  %v597 = vunpack.c.l.b16 %v117
  %v598 = vunpack.c.l.b16 %v118
  %v599 = vunpack.c.l.b16 %v119
  %v600 = vunpack.c.l.b16 %v120
  %v601 = vunpack.c.l.b16 %v121
  %v602 = vunpack.c.l.b16 %v122
  %v603 = vunpack.c.l.b16 %v123
  %v604 = vunpack.c.l.b16 %v124
  %v605 = vunpack.c.l.b16 %v125
  %v606 = vunpack.c.l.b16 %v126
  %v607 = vunpack.c.l.b16 %v127
  %v608 = vunpack.c.l.b16 %v128
  %v609 = vunpack.c.l.b16 %v129
  %v610 = vunpack.c.l.b16 %v130
  %v611 = vunpack.c.l.b16 %v131
  %v612 = vunpack.c.l.b16 %v132
  %v613 = vunpack.c.l.b16 %v133
  %v614 = vunpack.c.l.b16 %v134
  %v615 = vunpack.c.l.b16 %v135
  %v616 = vunpack.c.l.b16 %v136
  %v617 = vunpack.c.l.b16 %v137
  %v618 = vunpack.c.l.b16 %v138
  %v619 = vunpack.c.l.b16 %v139
  %v620 = vunpack.c.l.b16 %v140
  %v621 = vunpack.c.l.b16 %v141
  %v622 = vunpack.c.l.b16 %v142
  %v623 = vunpack.c.l.b16 %v143
  %v624 = vunpack.c.l.b16 %v144
  %v625 = vunpack.c.l.b16 %v145
  %v626 = vunpack.c.l.b16 %v146
  %v627 = vunpack.c.l.b16 %v147
  %v628 = vunpack.c.l.b16 %v148
  %v629 = vunpack.c.l.b16 %v149
  %v630 = vunpack.c.l.b16 %v150
  %v631 = vunpack.c.l.b16 %v151
  %v632 = vunpack.c.l.b16 %v152
  %v633 = vunpack.c.l.b16 %v153
  %v634 = vunpack.c.l.b16 %v154
  %v635 = vunpack.c.l.b16 %v155
  %v636 = vunpack.c.l.b16 %v156
  %v637 = vunpack.c.l.b16 %v157
  %v638 = vunpack.c.l.b16 %v158
  %v639 = vunpack.c.l.b16 %v159
  %v640 = vunpack.c.l.b16 %v160
  %v641 = vunpack.c.l.b16 %v161
  %v642 = vunpack.c.l.b16 %v162
  %v643 = vunpack.c.l.b16 %v163
  %v644 = vunpack.c.l.b16 %v164
  %v645 = vunpack.c.l.b16 %v165
  %v646 = vunpack.c.l.b16 %v166
  %v647 = vunpack.c.l.b16 %v167
  %v648 = vunpack.c.l.b16 %v168
  %v649 = vunpack.c.l.b16 %v169
  %v650 = vunpack.c.l.b16 %v170
  %v651 = vunpack.c.l.b16 %v171
  %v652 = vunpack.c.l.b16 %v172
  %v653 = vunpack.c.l.b16 %v173
  %v654 = vunpack.c.l.b16 %v174
  %v655 = vunpack.c.l.b16 %v175
  %v656 = vunpack.c.l.b16 %v176
  %v657 = vunpack.c.l.b16 %v177
  %v658 = vunpack.c.l.b16 %v178
  %v659 = vunpack.c.l.b16 %v179
  %v660 = vunpack.c.l.b16 %v180
  %v661 = vpack.c.b16 %v564, %v563
  %v662 = vpack.c.b16 %v566, %v565
  %v663 = vpack.c.b16 %v568, %v567
  %v664 = vpack.c.b16 %v570, %v569
  %v665 = vpack.c.b16 %v572, %v571
  %v666 = vpack.c.b16 %v574, %v573
  %v667 = vpack.c.b16 %v576, %v575
  %v668 = vpack.c.b16 %v578, %v577
  %v669 = vpack.c.b16 %v580, %v579
  %v670 = vpack.c.b16 %v582, %v581
  %v671 = vpack.c.b16 %v584, %v583
  %v672 = vpack.c.b16 %v586, %v585
  %v673 = vpack.c.b16 %v588, %v587
  %v674 = vpack.c.b16 %v590, %v589
  %v675 = vpack.c.b16 %v592, %v591
  %v676 = vpack.c.b16 %v594, %v593
  %v677 = vpack.c.b16 %v596, %v595
  %v678 = vpack.c.b16 %v598, %v597
  %v679 = vpack.c.b16 %v600, %v599
  %v680 = vpack.c.b16 %v602, %v601
  %v681 = vpack.c.b16 %v604, %v603
  %v682 = vpack.c.b16 %v606, %v605
  %v683 = vpack.c.b16 %v608, %v607
  %v684 = vpack.c.b16 %v610, %v609
  %v685 = vpack.c.b16 %v612, %v611
  %v686 = vpack.c.b16 %v614, %v613
  %v687 = vpack.c.b16 %v616, %v615
  %v688 = vpack.c.b16 %v618, %v617
  %v689 = vpack.c.b16 %v620, %v619
  %v690 = vpack.c.b16 %v622, %v621
  %v691 = vpack.c.b16 %v624, %v623
  %v692 = vpack.c.b16 %v626, %v625
  %v693 = vpack.c.b16 %v628, %v627
  %v694 = vpack.c.b16 %v630, %v629
  %v695 = vpack.c.b16 %v632, %v631
  %v696 = vpack.c.b16 %v634, %v633
  %v697 = vpack.c.b16 %v636, %v635
  %v698 = vpack.c.b16 %v638, %v637
  %v699 = vpack.c.b16 %v640, %v639
  %v700 = vpack.c.b16 %v642, %v641
  %v701 = vpack.c.b16 %v644, %v643
  %v702 = vpack.c.b16 %v646, %v645
  %v703 = vpack.c.b16 %v648, %v647
  %v704 = vpack.c.b16 %v650, %v649
  %v705 = vpack.c.b16 %v652, %v651
  %v706 = vpack.c.b16 %v654, %v653
  %v707 = vpack.c.b16 %v656, %v655
  %v708 = vpack.c.b16 %v658, %v657
  %v709 = vpack.c.b16 %v660, %v659
  %vm759 = vcmask 130048
  %v761 = vsel %vm759, %v367, 0
  %v764 = vsel %vm759, %v374, 0
  %v767 = vsel %vm759, %v381, 0
  %v770 = vsel %vm759, %v388, 0
  %v773 = vsel %vm759, %v395, 0
  %v776 = vsel %vm759, %v402, 0
  %v779 = vsel %vm759, %v409, 0
  %v782 = vsel %vm759, %v416, 0
  %784 = vmatprep.subr.bf16.mxu0 0
  %785 = vmatpush1.bf16.msra.mxu0 %v661
  %786 = vmatprep.subr.bf16.mxu0 0
  %787 = vmatpush1.bf16.msra.mxu0 %v662
  %788 = vmatprep.subr.bf16.mxu0 0
  %789 = vmatpush1.bf16.msra.mxu0 %v663
  %790 = vmatprep.subr.bf16.mxu0 0
  %791 = vmatpush1.bf16.msra.mxu0 %v664
  %792 = vmatprep.subr.bf16.mxu0 0
  %793 = vmatpush1.bf16.msra.mxu0 %v665
  %794 = vmatprep.subr.bf16.mxu0 0
  %795 = vmatpush1.bf16.msra.mxu0 %v666
  %796 = vmatprep.subr.bf16.mxu0 0
  %797 = vmatpush1.bf16.msra.mxu0 %v667
  %798 = vmatprep.subr.bf16.mxu0 0
  %799 = vmatpush1.bf16.msra.mxu0 %v668
  %800 = vmatprep.subr.bf16.mxu0 0
  %801 = vmatpush1.bf16.msra.mxu0 %v669
  %802 = vmatprep.subr.bf16.mxu0 0
  %803 = vmatpush1.bf16.msra.mxu0 %v670
  %804 = vmatprep.subr.bf16.mxu0 0
  %805 = vmatpush1.bf16.msra.mxu0 %v671
  %806 = vmatprep.subr.bf16.mxu0 0
  %807 = vmatpush1.bf16.msra.mxu0 %v672
  %808 = vmatprep.subr.bf16.mxu0 0
  %809 = vmatpush1.bf16.msra.mxu0 %v673
  %810 = vmatprep.subr.bf16.mxu0 0
  %811 = vmatpush1.bf16.msra.mxu0 %v674
  %812 = vmatprep.subr.bf16.mxu0 0
  %813 = vmatpush1.bf16.msra.mxu0 %v675
  %814 = vmatprep.subr.bf16.mxu0 0
  %815 = vmatpush1.bf16.msra.mxu0 %v676
  %816 = vmatprep.mubr.bf16.mxu0 %v362
  %817 = vmatmul.mubr.bf16.gmra.mrb[0].mxu0 %v361
  %v818 = vpop.f32.mrb[0].mxu0
  %v819 = vadd.f32 %v184, %v818
  %v820 = vpop.f32.mrb[0].mxu0
  %v821 = vpop.f32.mrb[0].mxu0
  %v822 = vadd.f32 %v184, %v821
  %v823 = vpop.f32.mrb[0].mxu0
  %824 = vmatprep.mubr.bf16.mxu0 %v369
  %825 = vmatmul.mubr.bf16.gmra.mrb[0].mxu0 %v368
  %v826 = vpop.f32.mrb[0].mxu0
  %v827 = vadd.f32 %v184, %v826
  %v828 = vpop.f32.mrb[0].mxu0
  %v829 = vpop.f32.mrb[0].mxu0
  %v830 = vadd.f32 %v184, %v829
  %v831 = vpop.f32.mrb[0].mxu0
  %832 = vmatprep.mubr.bf16.mxu0 %v376
  %833 = vmatmul.mubr.bf16.gmra.mrb[0].mxu0 %v375
  %v834 = vpop.f32.mrb[0].mxu0
  %v835 = vadd.f32 %v184, %v834
  %v836 = vpop.f32.mrb[0].mxu0
  %v837 = vpop.f32.mrb[0].mxu0
  %v838 = vadd.f32 %v184, %v837
  %v839 = vpop.f32.mrb[0].mxu0
  %840 = vmatprep.mubr.bf16.mxu0 %v383
  %841 = vmatmul.mubr.bf16.gmra.mrb[0].mxu0 %v382
  %v842 = vpop.f32.mrb[0].mxu0
  %v843 = vadd.f32 %v184, %v842
  %v844 = vpop.f32.mrb[0].mxu0
  %v845 = vpop.f32.mrb[0].mxu0
  %v846 = vadd.f32 %v184, %v845
  %v847 = vpop.f32.mrb[0].mxu0
  %848 = vmatprep.mubr.bf16.mxu0 %v390
  %849 = vmatmul.mubr.bf16.gmra.mrb[0].mxu0 %v389
  %v850 = vpop.f32.mrb[0].mxu0
  %v851 = vadd.f32 %v184, %v850
  %v852 = vpop.f32.mrb[0].mxu0
  %v853 = vpop.f32.mrb[0].mxu0
  %v854 = vadd.f32 %v184, %v853
  %v855 = vpop.f32.mrb[0].mxu0
  %856 = vmatprep.mubr.bf16.mxu0 %v397
  %857 = vmatmul.mubr.bf16.gmra.mrb[0].mxu0 %v396
  %v858 = vpop.f32.mrb[0].mxu0
  %v859 = vadd.f32 %v184, %v858
  %v860 = vpop.f32.mrb[0].mxu0
  %v861 = vpop.f32.mrb[0].mxu0
  %v862 = vadd.f32 %v184, %v861
  %v863 = vpop.f32.mrb[0].mxu0
  %864 = vmatprep.mubr.bf16.mxu0 %v404
  %865 = vmatmul.mubr.bf16.gmra.mrb[0].mxu0 %v403
  %v866 = vpop.f32.mrb[0].mxu0
  %v867 = vadd.f32 %v184, %v866
  %v868 = vpop.f32.mrb[0].mxu0
  %v869 = vpop.f32.mrb[0].mxu0
  %v870 = vadd.f32 %v184, %v869
  %v871 = vpop.f32.mrb[0].mxu0
  %872 = vmatprep.mubr.bf16.mxu0 %v411
  %873 = vmatmul.mubr.bf16.gmra.mrb[0].mxu0 %v410
  %v874 = vpop.f32.mrb[0].mxu0
  %v875 = vadd.f32 %v184, %v874
  %v876 = vpop.f32.mrb[0].mxu0
  %v877 = vpop.f32.mrb[0].mxu0
  %v878 = vadd.f32 %v184, %v877
  %v879 = vpop.f32.mrb[0].mxu0
  %880 = vdwg.mxu0
  %881 = vmatprep.subr.bf16.mxu0 0
  %882 = vmatpush1.bf16.msra.mxu0 %v677
  %883 = vmatprep.subr.bf16.mxu0 0
  %884 = vmatpush1.bf16.msra.mxu0 %v678
  %885 = vmatprep.subr.bf16.mxu0 0
  %886 = vmatpush1.bf16.msra.mxu0 %v679
  %887 = vmatprep.subr.bf16.mxu0 0
  %888 = vmatpush1.bf16.msra.mxu0 %v680
  %889 = vmatprep.subr.bf16.mxu0 0
  %890 = vmatpush1.bf16.msra.mxu0 %v681
  %891 = vmatprep.subr.bf16.mxu0 0
  %892 = vmatpush1.bf16.msra.mxu0 %v682
  %893 = vmatprep.subr.bf16.mxu0 0
  %894 = vmatpush1.bf16.msra.mxu0 %v683
  %895 = vmatprep.subr.bf16.mxu0 0
  %896 = vmatpush1.bf16.msra.mxu0 %v684
  %897 = vmatprep.subr.bf16.mxu0 0
  %898 = vmatpush1.bf16.msra.mxu0 %v685
  %899 = vmatprep.subr.bf16.mxu0 0
  %900 = vmatpush1.bf16.msra.mxu0 %v686
  %901 = vmatprep.subr.bf16.mxu0 0
  %902 = vmatpush1.bf16.msra.mxu0 %v687
  %903 = vmatprep.subr.bf16.mxu0 0
  %904 = vmatpush1.bf16.msra.mxu0 %v688
  %905 = vmatprep.subr.bf16.mxu0 0
  %906 = vmatpush1.bf16.msra.mxu0 %v689
  %907 = vmatprep.subr.bf16.mxu0 0
  %908 = vmatpush1.bf16.msra.mxu0 %v690
  %909 = vmatprep.subr.bf16.mxu0 0
  %910 = vmatpush1.bf16.msra.mxu0 %v691
  %911 = vmatprep.subr.bf16.mxu0 0
  %912 = vmatpush1.bf16.msra.mxu0 %v692
  %913 = vmatprep.mubr.bf16.mxu0 %v364
  %914 = vmatmul.mubr.bf16.gmra.mrb[0].mxu0 %v363
  %v915 = vpop.f32.mrb[0].mxu0
  %v916 = vadd.f32 %v819, %v915
  %v917 = vpop.f32.mrb[0].mxu0
  %v918 = vpop.f32.mrb[0].mxu0
  %v919 = vadd.f32 %v822, %v918
  %v920 = vpop.f32.mrb[0].mxu0
  %921 = vmatprep.mubr.bf16.mxu0 %v371
  %922 = vmatmul.mubr.bf16.gmra.mrb[0].mxu0 %v370
  %v923 = vpop.f32.mrb[0].mxu0
  %v924 = vadd.f32 %v827, %v923
  %v925 = vpop.f32.mrb[0].mxu0
  %v926 = vpop.f32.mrb[0].mxu0
  %v927 = vadd.f32 %v830, %v926
  %v928 = vpop.f32.mrb[0].mxu0
  %929 = vmatprep.mubr.bf16.mxu0 %v378
  %930 = vmatmul.mubr.bf16.gmra.mrb[0].mxu0 %v377
  %v931 = vpop.f32.mrb[0].mxu0
  %v932 = vadd.f32 %v835, %v931
  %v933 = vpop.f32.mrb[0].mxu0
  %v934 = vpop.f32.mrb[0].mxu0
  %v935 = vadd.f32 %v838, %v934
  %v936 = vpop.f32.mrb[0].mxu0
  %937 = vmatprep.mubr.bf16.mxu0 %v385
  %938 = vmatmul.mubr.bf16.gmra.mrb[0].mxu0 %v384
  %v939 = vpop.f32.mrb[0].mxu0
  %v940 = vadd.f32 %v843, %v939
  %v941 = vpop.f32.mrb[0].mxu0
  %v942 = vpop.f32.mrb[0].mxu0
  %v943 = vadd.f32 %v846, %v942
  %v944 = vpop.f32.mrb[0].mxu0
  %945 = vmatprep.mubr.bf16.mxu0 %v392
  %946 = vmatmul.mubr.bf16.gmra.mrb[0].mxu0 %v391
  %v947 = vpop.f32.mrb[0].mxu0
  %v948 = vadd.f32 %v851, %v947
  %v949 = vpop.f32.mrb[0].mxu0
  %v950 = vpop.f32.mrb[0].mxu0
  %v951 = vadd.f32 %v854, %v950
  %v952 = vpop.f32.mrb[0].mxu0
  %953 = vmatprep.mubr.bf16.mxu0 %v399
  %954 = vmatmul.mubr.bf16.gmra.mrb[0].mxu0 %v398
  %v955 = vpop.f32.mrb[0].mxu0
  %v956 = vadd.f32 %v859, %v955
  %v957 = vpop.f32.mrb[0].mxu0
  %v958 = vpop.f32.mrb[0].mxu0
  %v959 = vadd.f32 %v862, %v958
  %v960 = vpop.f32.mrb[0].mxu0
  %961 = vmatprep.mubr.bf16.mxu0 %v406
  %962 = vmatmul.mubr.bf16.gmra.mrb[0].mxu0 %v405
  %v963 = vpop.f32.mrb[0].mxu0
  %v964 = vadd.f32 %v867, %v963
  %v965 = vpop.f32.mrb[0].mxu0
  %v966 = vpop.f32.mrb[0].mxu0
  %v967 = vadd.f32 %v870, %v966
  %v968 = vpop.f32.mrb[0].mxu0
  %969 = vmatprep.mubr.bf16.mxu0 %v413
  %970 = vmatmul.mubr.bf16.gmra.mrb[0].mxu0 %v412
  %v971 = vpop.f32.mrb[0].mxu0
  %v972 = vadd.f32 %v875, %v971
  %v973 = vpop.f32.mrb[0].mxu0
  %v974 = vpop.f32.mrb[0].mxu0
  %v975 = vadd.f32 %v878, %v974
  %v976 = vpop.f32.mrb[0].mxu0
  %977 = vdwg.mxu0
  %978 = vmatprep.subr.bf16.mxu0 0
  %979 = vmatpush1.bf16.msra.mxu0 %v693
  %980 = vmatprep.subr.bf16.mxu0 0
  %981 = vmatpush1.bf16.msra.mxu0 %v694
  %982 = vmatprep.subr.bf16.mxu0 0
  %983 = vmatpush1.bf16.msra.mxu0 %v695
  %984 = vmatprep.subr.bf16.mxu0 0
  %985 = vmatpush1.bf16.msra.mxu0 %v696
  %986 = vmatprep.subr.bf16.mxu0 0
  %987 = vmatpush1.bf16.msra.mxu0 %v697
  %988 = vmatprep.subr.bf16.mxu0 0
  %989 = vmatpush1.bf16.msra.mxu0 %v698
  %990 = vmatprep.subr.bf16.mxu0 0
  %991 = vmatpush1.bf16.msra.mxu0 %v699
  %992 = vmatprep.subr.bf16.mxu0 0
  %993 = vmatpush1.bf16.msra.mxu0 %v700
  %994 = vmatprep.subr.bf16.mxu0 0
  %995 = vmatpush1.bf16.msra.mxu0 %v701
  %996 = vmatprep.subr.bf16.mxu0 0
  %997 = vmatpush1.bf16.msra.mxu0 %v702
  %998 = vmatprep.subr.bf16.mxu0 0
  %999 = vmatpush1.bf16.msra.mxu0 %v703
  %1000 = vmatprep.subr.bf16.mxu0 0
  %1001 = vmatpush1.bf16.msra.mxu0 %v704
  %1002 = vmatprep.subr.bf16.mxu0 0
  %1003 = vmatpush1.bf16.msra.mxu0 %v705
  %1004 = vmatprep.subr.bf16.mxu0 0
  %1005 = vmatpush1.bf16.msra.mxu0 %v706
  %1006 = vmatprep.subr.bf16.mxu0 0
  %1007 = vmatpush1.bf16.msra.mxu0 %v707
  %1008 = vmatprep.subr.bf16.mxu0 0
  %1009 = vmatpush1.bf16.msra.mxu0 %v708
  %1010 = vmatprep.mubr.bf16.mxu0 %v366
  %1011 = vmatmul.mubr.bf16.gmra.mrb[0].mxu0 %v365
  %v1012 = vpop.f32.mrb[0].mxu0
  %v1013 = vadd.f32 %v916, %v1012
  %v1014 = vpop.f32.mrb[0].mxu0
  %v1015 = vpop.f32.mrb[0].mxu0
  %v1016 = vadd.f32 %v919, %v1015
  %v1017 = vpop.f32.mrb[0].mxu0
  %1018 = vmatprep.mubr.bf16.mxu0 %v373
  %1019 = vmatmul.mubr.bf16.gmra.mrb[0].mxu0 %v372
  %v1020 = vpop.f32.mrb[0].mxu0
  %v1021 = vadd.f32 %v924, %v1020
  %v1022 = vpop.f32.mrb[0].mxu0
  %v1023 = vpop.f32.mrb[0].mxu0
  %v1024 = vadd.f32 %v927, %v1023
  %v1025 = vpop.f32.mrb[0].mxu0
  %1026 = vmatprep.mubr.bf16.mxu0 %v380
  %1027 = vmatmul.mubr.bf16.gmra.mrb[0].mxu0 %v379
  %v1028 = vpop.f32.mrb[0].mxu0
  %v1029 = vadd.f32 %v932, %v1028
  %v1030 = vpop.f32.mrb[0].mxu0
  %v1031 = vpop.f32.mrb[0].mxu0
  %v1032 = vadd.f32 %v935, %v1031
  %v1033 = vpop.f32.mrb[0].mxu0
  %1034 = vmatprep.mubr.bf16.mxu0 %v387
  %1035 = vmatmul.mubr.bf16.gmra.mrb[0].mxu0 %v386
  %v1036 = vpop.f32.mrb[0].mxu0
  %v1037 = vadd.f32 %v940, %v1036
  %v1038 = vpop.f32.mrb[0].mxu0
  %v1039 = vpop.f32.mrb[0].mxu0
  %v1040 = vadd.f32 %v943, %v1039
  %v1041 = vpop.f32.mrb[0].mxu0
  %1042 = vmatprep.mubr.bf16.mxu0 %v394
  %1043 = vmatmul.mubr.bf16.gmra.mrb[0].mxu0 %v393
  %v1044 = vpop.f32.mrb[0].mxu0
  %v1045 = vadd.f32 %v948, %v1044
  %v1046 = vpop.f32.mrb[0].mxu0
  %v1047 = vpop.f32.mrb[0].mxu0
  %v1048 = vadd.f32 %v951, %v1047
  %v1049 = vpop.f32.mrb[0].mxu0
  %1050 = vmatprep.mubr.bf16.mxu0 %v401
  %1051 = vmatmul.mubr.bf16.gmra.mrb[0].mxu0 %v400
  %v1052 = vpop.f32.mrb[0].mxu0
  %v1053 = vadd.f32 %v956, %v1052
  %v1054 = vpop.f32.mrb[0].mxu0
  %v1055 = vpop.f32.mrb[0].mxu0
  %v1056 = vadd.f32 %v959, %v1055
  %v1057 = vpop.f32.mrb[0].mxu0
  %1058 = vmatprep.mubr.bf16.mxu0 %v408
  %1059 = vmatmul.mubr.bf16.gmra.mrb[0].mxu0 %v407
  %v1060 = vpop.f32.mrb[0].mxu0
  %v1061 = vadd.f32 %v964, %v1060
  %v1062 = vpop.f32.mrb[0].mxu0
  %v1063 = vpop.f32.mrb[0].mxu0
  %v1064 = vadd.f32 %v967, %v1063
  %v1065 = vpop.f32.mrb[0].mxu0
  %1066 = vmatprep.mubr.bf16.mxu0 %v415
  %1067 = vmatmul.mubr.bf16.gmra.mrb[0].mxu0 %v414
  %v1068 = vpop.f32.mrb[0].mxu0
  %v1069 = vadd.f32 %v972, %v1068
  %v1070 = vpop.f32.mrb[0].mxu0
  %v1071 = vpop.f32.mrb[0].mxu0
  %v1072 = vadd.f32 %v975, %v1071
  %v1073 = vpop.f32.mrb[0].mxu0
  %1074 = vdwg.mxu0
  %1075 = vmatprep.subr.bf16.mxu0 0
  %1076 = vmatpush1.bf16.msra.mxu0 %v709
  %1077 = vmatprep.subr.bf16.mxu0 0
  %1078 = vmatpush1.bf16.msra.mxu0 0
  %1079 = vmatprep.subr.bf16.mxu0 0
  %1080 = vmatpush1.bf16.msra.mxu0 0
  %1081 = vmatprep.subr.bf16.mxu0 0
  %1082 = vmatpush1.bf16.msra.mxu0 0
  %1083 = vmatprep.subr.bf16.mxu0 0
  %1084 = vmatpush1.bf16.msra.mxu0 0
  %1085 = vmatprep.subr.bf16.mxu0 0
  %1086 = vmatpush1.bf16.msra.mxu0 0
  %1087 = vmatprep.subr.bf16.mxu0 0
  %1088 = vmatpush1.bf16.msra.mxu0 0
  %1089 = vmatprep.subr.bf16.mxu0 0
  %1090 = vmatpush1.bf16.msra.mxu0 0
  %1091 = vmatprep.subr.bf16.mxu0 0
  %1092 = vmatpush1.bf16.msra.mxu0 0
  %1093 = vmatprep.subr.bf16.mxu0 0
  %1094 = vmatpush1.bf16.msra.mxu0 0
  %1095 = vmatprep.subr.bf16.mxu0 0
  %1096 = vmatpush1.bf16.msra.mxu0 0
  %1097 = vmatprep.subr.bf16.mxu0 0
  %1098 = vmatpush1.bf16.msra.mxu0 0
  %1099 = vmatprep.subr.bf16.mxu0 0
  %1100 = vmatpush1.bf16.msra.mxu0 0
  %1101 = vmatprep.subr.bf16.mxu0 0
  %1102 = vmatpush1.bf16.msra.mxu0 0
  %1103 = vmatprep.subr.bf16.mxu0 0
  %1104 = vmatpush1.bf16.msra.mxu0 0
  %1105 = vmatprep.subr.bf16.mxu0 0
  %1106 = vmatpush1.bf16.msra.mxu0 0
  %1107 = vmatprep.mubr.bf16.mxu0 0
  %1108 = vmatmul.mubr.bf16.gmra.mrb[0].mxu0 %v761
  %v1109 = vpop.f32.mrb[0].mxu0
  %v1110 = vadd.f32 %v1013, %v1109
  %v1111 = vpop.f32.mrb[0].mxu0
  %v1112 = vpop.f32.mrb[0].mxu0
  %v1113 = vadd.f32 %v1016, %v1112
  %v1114 = vpop.f32.mrb[0].mxu0
  %1115 = vmatprep.mubr.bf16.mxu0 0
  %1116 = vmatmul.mubr.bf16.gmra.mrb[0].mxu0 %v764
  %v1117 = vpop.f32.mrb[0].mxu0
  %v1118 = vadd.f32 %v1021, %v1117
  %v1119 = vpop.f32.mrb[0].mxu0
  %v1120 = vpop.f32.mrb[0].mxu0
  %v1121 = vadd.f32 %v1024, %v1120
  %v1122 = vpop.f32.mrb[0].mxu0
  %1123 = vmatprep.mubr.bf16.mxu0 0
  %1124 = vmatmul.mubr.bf16.gmra.mrb[0].mxu0 %v767
  %v1125 = vpop.f32.mrb[0].mxu0
  %v1126 = vadd.f32 %v1029, %v1125
  %v1127 = vpop.f32.mrb[0].mxu0
  %v1128 = vpop.f32.mrb[0].mxu0
  %v1129 = vadd.f32 %v1032, %v1128
  %v1130 = vpop.f32.mrb[0].mxu0
  %1131 = vmatprep.mubr.bf16.mxu0 0
  %1132 = vmatmul.mubr.bf16.gmra.mrb[0].mxu0 %v770
  %v1133 = vpop.f32.mrb[0].mxu0
  %v1134 = vadd.f32 %v1037, %v1133
  %v1135 = vpop.f32.mrb[0].mxu0
  %v1136 = vpop.f32.mrb[0].mxu0
  %v1137 = vadd.f32 %v1040, %v1136
  %v1138 = vpop.f32.mrb[0].mxu0
  %1139 = vmatprep.mubr.bf16.mxu0 0
  %1140 = vmatmul.mubr.bf16.gmra.mrb[0].mxu0 %v773
  %v1141 = vpop.f32.mrb[0].mxu0
  %v1142 = vadd.f32 %v1045, %v1141
  %v1143 = vpop.f32.mrb[0].mxu0
  %v1144 = vpop.f32.mrb[0].mxu0
  %v1145 = vadd.f32 %v1048, %v1144
  %v1146 = vpop.f32.mrb[0].mxu0
  %1147 = vmatprep.mubr.bf16.mxu0 0
  %1148 = vmatmul.mubr.bf16.gmra.mrb[0].mxu0 %v776
  %v1149 = vpop.f32.mrb[0].mxu0
  %v1150 = vadd.f32 %v1053, %v1149
  %v1151 = vpop.f32.mrb[0].mxu0
  %v1152 = vpop.f32.mrb[0].mxu0
  %v1153 = vadd.f32 %v1056, %v1152
  %v1154 = vpop.f32.mrb[0].mxu0
  %1155 = vmatprep.mubr.bf16.mxu0 0
  %1156 = vmatmul.mubr.bf16.gmra.mrb[0].mxu0 %v779
  %v1157 = vpop.f32.mrb[0].mxu0
  %v1158 = vadd.f32 %v1061, %v1157
  %v1159 = vpop.f32.mrb[0].mxu0
  %v1160 = vpop.f32.mrb[0].mxu0
  %v1161 = vadd.f32 %v1064, %v1160
  %v1162 = vpop.f32.mrb[0].mxu0
  %1163 = vmatprep.mubr.bf16.mxu0 0
  %1164 = vmatmul.mubr.bf16.gmra.mrb[0].mxu0 %v782
  %v1165 = vpop.f32.mrb[0].mxu0
  %v1166 = vadd.f32 %v1069, %v1165
  %v1167 = vpop.f32.mrb[0].mxu0
  %v1168 = vpop.f32.mrb[0].mxu0
  %v1169 = vadd.f32 %v1072, %v1168
  %v1170 = vpop.f32.mrb[0].mxu0
  %1171 = vdwg.mxu0
  %v1172 = vmax.f32 %v1110, 0.0
  %v1173 = vmax.f32 %v1113, 0.0
  %v1174 = vmax.f32 %v1118, 0.0
  %v1175 = vmax.f32 %v1121, 0.0
  %v1176 = vmax.f32 %v1126, 0.0
  %v1177 = vmax.f32 %v1129, 0.0
  %v1178 = vmax.f32 %v1134, 0.0
  %v1179 = vmax.f32 %v1137, 0.0
  %v1180 = vmax.f32 %v1142, 0.0
  %v1181 = vmax.f32 %v1145, 0.0
  %v1182 = vmax.f32 %v1150, 0.0
  %v1183 = vmax.f32 %v1153, 0.0
  %v1184 = vmax.f32 %v1158, 0.0
  %v1185 = vmax.f32 %v1161, 0.0
  %v1186 = vmax.f32 %v1166, 0.0
  %v1187 = vmax.f32 %v1169, 0.0
  %v1188 = vpack.c.bf16 %v1173, %v1172
  %v1189 = vpack.c.bf16 %v1175, %v1174
  %v1190 = vpack.c.bf16 %v1177, %v1176
  %v1191 = vpack.c.bf16 %v1179, %v1178
  %v1192 = vpack.c.bf16 %v1181, %v1180
  %v1193 = vpack.c.bf16 %v1183, %v1182
  %v1194 = vpack.c.bf16 %v1185, %v1184
  %v1195 = vpack.c.bf16 %v1187, %v1186
  %v1196 = vld [vmem:[%s1 + $0x188] sm:$0xf]
  %v1197 = vld [vmem:[%s1 + $0x18c] sm:$0xf]
  %v1198 = vld [vmem:[%s1 + $0x190] sm:$0xf]
  %v1199 = vld [vmem:[%s1 + $0x194] sm:$0xf]
  %v1200 = vld [vmem:[%s1 + $0x198] sm:$0xf]
  %v1201 = vld [vmem:[%s1 + $0x19c] sm:$0xf]
  %v1202 = vld [vmem:[%s1 + $0x1a0] sm:$0xf]
  %v1203 = vld [vmem:[%s1 + $0x1a4] sm:$0xf]
  %v1204 = vld [vmem:[%s1 + $0x1a8] sm:$0xf]
  %v1205 = vld [vmem:[%s1 + $0x1ac] sm:$0xf]
  %v1206 = vld [vmem:[%s1 + $0x1b0] sm:$0xf]
  %v1207 = vld [vmem:[%s1 + $0x1b4] sm:$0xf]
  %v1208 = vld [vmem:[%s1 + $0x1b8] sm:$0xf]
  %v1209 = vld [vmem:[%s1 + $0x1bc] sm:$0xf]
  %v1210 = vld [vmem:[%s1 + $0x1c0] sm:$0xf]
  %v1211 = vld [vmem:[%s1 + $0x1c4] sm:$0xf]
  %v1212 = vlaneseq
  %v1213 = vshrl.u32 %v1212, 7
  %v1214 = vsub.s32 1, %v1213
  %v1215 = vrot.slane %v18, %v1214
  %v1232 = vunpack.c.l.b16 %v1196
  %v1233 = vunpack.c.l.b16 %v1197
  %v1234 = vunpack.c.l.b16 %v1198
  %v1235 = vunpack.c.l.b16 %v1199
  %v1236 = vunpack.c.l.b16 %v1200
  %v1237 = vunpack.c.l.b16 %v1201
  %v1238 = vunpack.c.l.b16 %v1202
  %v1239 = vunpack.c.l.b16 %v1203
  %v1240 = vunpack.c.l.b16 %v1204
  %v1241 = vunpack.c.l.b16 %v1205
  %v1242 = vunpack.c.l.b16 %v1206
  %v1243 = vunpack.c.l.b16 %v1207
  %v1244 = vunpack.c.l.b16 %v1208
  %v1245 = vunpack.c.l.b16 %v1209
  %v1246 = vunpack.c.l.b16 %v1210
  %v1247 = vunpack.c.l.b16 %v1211
  %v1248 = vpack.c.b16 %v1233, %v1232
  %v1249 = vpack.c.b16 %v1235, %v1234
  %v1250 = vpack.c.b16 %v1237, %v1236
  %v1251 = vpack.c.b16 %v1239, %v1238
  %v1252 = vpack.c.b16 %v1241, %v1240
  %v1253 = vpack.c.b16 %v1243, %v1242
  %v1254 = vpack.c.b16 %v1245, %v1244
  %v1255 = vpack.c.b16 %v1247, %v1246
  %1264 = vmatprep.subr.bf16.mxu0 0
  %1265 = vmatpush1.bf16.msra.mxu0 %v1248
  %1266 = vmatprep.subr.bf16.mxu0 0
  %1267 = vmatpush1.bf16.msra.mxu0 %v1249
  %1268 = vmatprep.subr.bf16.mxu0 0
  %1269 = vmatpush1.bf16.msra.mxu0 %v1250
  %1270 = vmatprep.subr.bf16.mxu0 0
  %1271 = vmatpush1.bf16.msra.mxu0 %v1251
  %1272 = vmatprep.subr.bf16.mxu0 0
  %1273 = vmatpush1.bf16.msra.mxu0 %v1252
  %1274 = vmatprep.subr.bf16.mxu0 0
  %1275 = vmatpush1.bf16.msra.mxu0 %v1253
  %1276 = vmatprep.subr.bf16.mxu0 0
  %1277 = vmatpush1.bf16.msra.mxu0 %v1254
  %1278 = vmatprep.subr.bf16.mxu0 0
  %1279 = vmatpush1.bf16.msra.mxu0 %v1255
  %1280 = vmatprep.subr.bf16.mxu0 0
  %1281 = vmatpush1.bf16.msra.mxu0 0
  %1282 = vmatprep.subr.bf16.mxu0 0
  %1283 = vmatpush1.bf16.msra.mxu0 0
  %1284 = vmatprep.subr.bf16.mxu0 0
  %1285 = vmatpush1.bf16.msra.mxu0 0
  %1286 = vmatprep.subr.bf16.mxu0 0
  %1287 = vmatpush1.bf16.msra.mxu0 0
  %1288 = vmatprep.subr.bf16.mxu0 0
  %1289 = vmatpush1.bf16.msra.mxu0 0
  %1290 = vmatprep.subr.bf16.mxu0 0
  %1291 = vmatpush1.bf16.msra.mxu0 0
  %1292 = vmatprep.subr.bf16.mxu0 0
  %1293 = vmatpush1.bf16.msra.mxu0 0
  %1294 = vmatprep.subr.bf16.mxu0 0
  %1295 = vmatpush1.bf16.msra.mxu0 0
  %1296 = vmatprep.mubr.bf16.mxu0 0
  %1297 = vmatmul.mubr.bf16.gmra.mrb[0].mxu0 %v1188
  %v1298 = vpop.f32.mrb[0].mxu0
  %v1299 = vadd.f32 %v1215, %v1298
  %v1300 = vpop.f32.mrb[0].mxu0
  %v1301 = vpop.f32.mrb[0].mxu0
  %v1302 = vadd.f32 %v1215, %v1301
  %v1303 = vpop.f32.mrb[0].mxu0
  %1304 = vmatprep.mubr.bf16.mxu0 0
  %1305 = vmatmul.mubr.bf16.gmra.mrb[0].mxu0 %v1189
  %v1306 = vpop.f32.mrb[0].mxu0
  %v1307 = vadd.f32 %v1215, %v1306
  %v1308 = vpop.f32.mrb[0].mxu0
  %v1309 = vpop.f32.mrb[0].mxu0
  %v1310 = vadd.f32 %v1215, %v1309
  %v1311 = vpop.f32.mrb[0].mxu0
  %1312 = vmatprep.mubr.bf16.mxu0 0
  %1313 = vmatmul.mubr.bf16.gmra.mrb[0].mxu0 %v1190
  %v1314 = vpop.f32.mrb[0].mxu0
  %v1315 = vadd.f32 %v1215, %v1314
  %v1316 = vpop.f32.mrb[0].mxu0
  %v1317 = vpop.f32.mrb[0].mxu0
  %v1318 = vadd.f32 %v1215, %v1317
  %v1319 = vpop.f32.mrb[0].mxu0
  %1320 = vmatprep.mubr.bf16.mxu0 0
  %1321 = vmatmul.mubr.bf16.gmra.mrb[0].mxu0 %v1191
  %v1322 = vpop.f32.mrb[0].mxu0
  %v1323 = vadd.f32 %v1215, %v1322
  %v1324 = vpop.f32.mrb[0].mxu0
  %v1325 = vpop.f32.mrb[0].mxu0
  %v1326 = vadd.f32 %v1215, %v1325
  %v1327 = vpop.f32.mrb[0].mxu0
  %1328 = vmatprep.mubr.bf16.mxu0 0
  %1329 = vmatmul.mubr.bf16.gmra.mrb[0].mxu0 %v1192
  %v1330 = vpop.f32.mrb[0].mxu0
  %v1331 = vadd.f32 %v1215, %v1330
  %v1332 = vpop.f32.mrb[0].mxu0
  %v1333 = vpop.f32.mrb[0].mxu0
  %v1334 = vadd.f32 %v1215, %v1333
  %v1335 = vpop.f32.mrb[0].mxu0
  %1336 = vmatprep.mubr.bf16.mxu0 0
  %1337 = vmatmul.mubr.bf16.gmra.mrb[0].mxu0 %v1193
  %v1338 = vpop.f32.mrb[0].mxu0
  %v1339 = vadd.f32 %v1215, %v1338
  %v1340 = vpop.f32.mrb[0].mxu0
  %v1341 = vpop.f32.mrb[0].mxu0
  %v1342 = vadd.f32 %v1215, %v1341
  %v1343 = vpop.f32.mrb[0].mxu0
  %1344 = vmatprep.mubr.bf16.mxu0 0
  %1345 = vmatmul.mubr.bf16.gmra.mrb[0].mxu0 %v1194
  %v1346 = vpop.f32.mrb[0].mxu0
  %v1347 = vadd.f32 %v1215, %v1346
  %v1348 = vpop.f32.mrb[0].mxu0
  %v1349 = vpop.f32.mrb[0].mxu0
  %v1350 = vadd.f32 %v1215, %v1349
  %v1351 = vpop.f32.mrb[0].mxu0
  %1352 = vmatprep.mubr.bf16.mxu0 0
  %1353 = vmatmul.mubr.bf16.gmra.mrb[0].mxu0 %v1195
  %v1354 = vpop.f32.mrb[0].mxu0
  %v1355 = vadd.f32 %v1215, %v1354
  %v1356 = vpop.f32.mrb[0].mxu0
  %v1357 = vpop.f32.mrb[0].mxu0
  %v1358 = vadd.f32 %v1215, %v1357
  %v1359 = vpop.f32.mrb[0].mxu0
  %1360 = vdwg.mxu0
  %v1361 = vmax.f32 %v1299, 0.0
  %v1362 = vmax.f32 %v1302, 0.0
  %v1363 = vmax.f32 %v1307, 0.0
  %v1364 = vmax.f32 %v1310, 0.0
  %v1365 = vmax.f32 %v1315, 0.0
  %v1366 = vmax.f32 %v1318, 0.0
  %v1367 = vmax.f32 %v1323, 0.0
  %v1368 = vmax.f32 %v1326, 0.0
  %v1369 = vmax.f32 %v1331, 0.0
  %v1370 = vmax.f32 %v1334, 0.0
  %v1371 = vmax.f32 %v1339, 0.0
  %v1372 = vmax.f32 %v1342, 0.0
  %v1373 = vmax.f32 %v1347, 0.0
  %v1374 = vmax.f32 %v1350, 0.0
  %v1375 = vmax.f32 %v1355, 0.0
  %v1376 = vmax.f32 %v1358, 0.0
  %v1377 = vpack.c.bf16 %v1362, %v1361
  %v1378 = vpack.c.bf16 %v1364, %v1363
  %v1379 = vpack.c.bf16 %v1366, %v1365
  %v1380 = vpack.c.bf16 %v1368, %v1367
  %v1381 = vpack.c.bf16 %v1370, %v1369
  %v1382 = vpack.c.bf16 %v1372, %v1371
  %v1383 = vpack.c.bf16 %v1374, %v1373
  %v1384 = vpack.c.bf16 %v1376, %v1375
  %v1385 = vld [vmem:[%s1 + $0x1c8] sm:$0xf]
  %v1386 = vld [vmem:[%s1 + $0x1cc] sm:$0xf]
  %v1387 = vld [vmem:[%s1 + $0x1d0] sm:$0xf]
  %v1388 = vld [vmem:[%s1 + $0x1d4] sm:$0xf]
  %v1389 = vld [vmem:[%s1 + $0x1d8] sm:$0xf]
  %v1390 = vld [vmem:[%s1 + $0x1dc] sm:$0xf]
  %v1391 = vld [vmem:[%s1 + $0x1e0] sm:$0xf]
  %v1392 = vld [vmem:[%s1 + $0x1e4] sm:$0xf]
  %v1393 = vld [vmem:[%s1 + $0x1e8] sm:$0xf]
  %v1394 = vld [vmem:[%s1 + $0x1ec] sm:$0xf]
  %v1395 = vld [vmem:[%s1 + $0x1f0] sm:$0xf]
  %v1396 = vld [vmem:[%s1 + $0x1f4] sm:$0xf]
  %v1397 = vld [vmem:[%s1 + $0x1f8] sm:$0xf]
  %v1398 = vld [vmem:[%s1 + $0x1fc] sm:$0xf]
  %v1399 = vld [vmem:[%s1 + $0x200] sm:$0xf]
  %v1400 = vld [vmem:[%s1 + $0x204] sm:$0xf]
  %v1401 = vlaneseq
  %v1402 = vshrl.u32 %v1401, 7
  %v1403 = vsub.s32 2, %v1402
  %v1404 = vrot.slane %v18, %v1403
  %v1421 = vunpack.c.l.b16 %v1385
  %v1422 = vunpack.c.l.b16 %v1386
  %v1423 = vunpack.c.l.b16 %v1387
  %v1424 = vunpack.c.l.b16 %v1388
  %v1425 = vunpack.c.l.b16 %v1389
  %v1426 = vunpack.c.l.b16 %v1390
  %v1427 = vunpack.c.l.b16 %v1391
  %v1428 = vunpack.c.l.b16 %v1392
  %v1429 = vunpack.c.l.b16 %v1393
  %v1430 = vunpack.c.l.b16 %v1394
  %v1431 = vunpack.c.l.b16 %v1395
  %v1432 = vunpack.c.l.b16 %v1396
  %v1433 = vunpack.c.l.b16 %v1397
  %v1434 = vunpack.c.l.b16 %v1398
  %v1435 = vunpack.c.l.b16 %v1399
  %v1436 = vunpack.c.l.b16 %v1400
  %v1437 = vpack.c.b16 %v1422, %v1421
  %v1438 = vpack.c.b16 %v1424, %v1423
  %v1439 = vpack.c.b16 %v1426, %v1425
  %v1440 = vpack.c.b16 %v1428, %v1427
  %v1441 = vpack.c.b16 %v1430, %v1429
  %v1442 = vpack.c.b16 %v1432, %v1431
  %v1443 = vpack.c.b16 %v1434, %v1433
  %v1444 = vpack.c.b16 %v1436, %v1435
  %1453 = vmatprep.subr.bf16.mxu0 0
  %1454 = vmatpush1.bf16.msra.mxu0 %v1437
  %1455 = vmatprep.subr.bf16.mxu0 0
  %1456 = vmatpush1.bf16.msra.mxu0 %v1438
  %1457 = vmatprep.subr.bf16.mxu0 0
  %1458 = vmatpush1.bf16.msra.mxu0 %v1439
  %1459 = vmatprep.subr.bf16.mxu0 0
  %1460 = vmatpush1.bf16.msra.mxu0 %v1440
  %1461 = vmatprep.subr.bf16.mxu0 0
  %1462 = vmatpush1.bf16.msra.mxu0 %v1441
  %1463 = vmatprep.subr.bf16.mxu0 0
  %1464 = vmatpush1.bf16.msra.mxu0 %v1442
  %1465 = vmatprep.subr.bf16.mxu0 0
  %1466 = vmatpush1.bf16.msra.mxu0 %v1443
  %1467 = vmatprep.subr.bf16.mxu0 0
  %1468 = vmatpush1.bf16.msra.mxu0 %v1444
  %1469 = vmatprep.subr.bf16.mxu0 0
  %1470 = vmatpush1.bf16.msra.mxu0 0
  %1471 = vmatprep.subr.bf16.mxu0 0
  %1472 = vmatpush1.bf16.msra.mxu0 0
  %1473 = vmatprep.subr.bf16.mxu0 0
  %1474 = vmatpush1.bf16.msra.mxu0 0
  %1475 = vmatprep.subr.bf16.mxu0 0
  %1476 = vmatpush1.bf16.msra.mxu0 0
  %1477 = vmatprep.subr.bf16.mxu0 0
  %1478 = vmatpush1.bf16.msra.mxu0 0
  %1479 = vmatprep.subr.bf16.mxu0 0
  %1480 = vmatpush1.bf16.msra.mxu0 0
  %1481 = vmatprep.subr.bf16.mxu0 0
  %1482 = vmatpush1.bf16.msra.mxu0 0
  %1483 = vmatprep.subr.bf16.mxu0 0
  %1484 = vmatpush1.bf16.msra.mxu0 0
  %1485 = vmatprep.mubr.bf16.mxu0 0
  %1486 = vmatmul.mubr.bf16.gmra.mrb[0].mxu0 %v1377
  %v1487 = vpop.f32.mrb[0].mxu0
  %v1488 = vadd.f32 %v1404, %v1487
  %v1489 = vpop.f32.mrb[0].mxu0
  %v1490 = vpop.f32.mrb[0].mxu0
  %v1491 = vadd.f32 %v1404, %v1490
  %v1492 = vpop.f32.mrb[0].mxu0
  %1493 = vmatprep.mubr.bf16.mxu0 0
  %1494 = vmatmul.mubr.bf16.gmra.mrb[0].mxu0 %v1378
  %v1495 = vpop.f32.mrb[0].mxu0
  %v1496 = vadd.f32 %v1404, %v1495
  %v1497 = vpop.f32.mrb[0].mxu0
  %v1498 = vpop.f32.mrb[0].mxu0
  %v1499 = vadd.f32 %v1404, %v1498
  %v1500 = vpop.f32.mrb[0].mxu0
  %1501 = vmatprep.mubr.bf16.mxu0 0
  %1502 = vmatmul.mubr.bf16.gmra.mrb[0].mxu0 %v1379
  %v1503 = vpop.f32.mrb[0].mxu0
  %v1504 = vadd.f32 %v1404, %v1503
  %v1505 = vpop.f32.mrb[0].mxu0
  %v1506 = vpop.f32.mrb[0].mxu0
  %v1507 = vadd.f32 %v1404, %v1506
  %v1508 = vpop.f32.mrb[0].mxu0
  %1509 = vmatprep.mubr.bf16.mxu0 0
  %1510 = vmatmul.mubr.bf16.gmra.mrb[0].mxu0 %v1380
  %v1511 = vpop.f32.mrb[0].mxu0
  %v1512 = vadd.f32 %v1404, %v1511
  %v1513 = vpop.f32.mrb[0].mxu0
  %v1514 = vpop.f32.mrb[0].mxu0
  %v1515 = vadd.f32 %v1404, %v1514
  %v1516 = vpop.f32.mrb[0].mxu0
  %1517 = vmatprep.mubr.bf16.mxu0 0
  %1518 = vmatmul.mubr.bf16.gmra.mrb[0].mxu0 %v1381
  %v1519 = vpop.f32.mrb[0].mxu0
  %v1520 = vadd.f32 %v1404, %v1519
  %v1521 = vpop.f32.mrb[0].mxu0
  %v1522 = vpop.f32.mrb[0].mxu0
  %v1523 = vadd.f32 %v1404, %v1522
  %v1524 = vpop.f32.mrb[0].mxu0
  %1525 = vmatprep.mubr.bf16.mxu0 0
  %1526 = vmatmul.mubr.bf16.gmra.mrb[0].mxu0 %v1382
  %v1527 = vpop.f32.mrb[0].mxu0
  %v1528 = vadd.f32 %v1404, %v1527
  %v1529 = vpop.f32.mrb[0].mxu0
  %v1530 = vpop.f32.mrb[0].mxu0
  %v1531 = vadd.f32 %v1404, %v1530
  %v1532 = vpop.f32.mrb[0].mxu0
  %1533 = vmatprep.mubr.bf16.mxu0 0
  %1534 = vmatmul.mubr.bf16.gmra.mrb[0].mxu0 %v1383
  %v1535 = vpop.f32.mrb[0].mxu0
  %v1536 = vadd.f32 %v1404, %v1535
  %v1537 = vpop.f32.mrb[0].mxu0
  %v1538 = vpop.f32.mrb[0].mxu0
  %v1539 = vadd.f32 %v1404, %v1538
  %v1540 = vpop.f32.mrb[0].mxu0
  %1541 = vmatprep.mubr.bf16.mxu0 0
  %1542 = vmatmul.mubr.bf16.gmra.mrb[0].mxu0 %v1384
  %v1543 = vpop.f32.mrb[0].mxu0
  %v1544 = vadd.f32 %v1404, %v1543
  %v1545 = vpop.f32.mrb[0].mxu0
  %v1546 = vpop.f32.mrb[0].mxu0
  %v1547 = vadd.f32 %v1404, %v1546
  %v1548 = vpop.f32.mrb[0].mxu0
  %1549 = vdwg.mxu0
  %v1550 = vld [vmem:[%s3] sm:$0xff]
  %v1551 = vld [vmem:[%s3 + $0x8] sm:$0xff]
  %v1552 = vld [vmem:[%s3 + $0x10] sm:$0xff]
  %v1553 = vld [vmem:[%s3 + $0x18] sm:$0xff]
  %v1554 = vld [vmem:[%s3 + $0x20] sm:$0xff]
  %v1555 = vld [vmem:[%s3 + $0x28] sm:$0xff]
  %v1556 = vld [vmem:[%s3 + $0x30] sm:$0xff]
  %v1557 = vld [vmem:[%s3 + $0x38] sm:$0xff]
  %v1558 = vld [vmem:[%s3 + $0x40] sm:$0xff]
  %v1559 = vld [vmem:[%s3 + $0x48] sm:$0xff]
  %v1560 = vld [vmem:[%s3 + $0x50] sm:$0xff]
  %v1561 = vld [vmem:[%s3 + $0x58] sm:$0xff]
  %v1562 = vld [vmem:[%s3 + $0x60] sm:$0xff]
  %v1563 = vld [vmem:[%s3 + $0x68] sm:$0xff]
  %v1564 = vld [vmem:[%s3 + $0x70] sm:$0xff]
  %v1565 = vld [vmem:[%s3 + $0x78] sm:$0xff]
  %vm1566 = vcmask 23552
  %v1567 = vsel %vm1566, %v1488, -inf
  %1568 = vmax.xlane.f32.xlu0 %v1567
  %v1569 = vpop.xlane.xlu0 %1568
  %v1570 = vsel %vm1566, %v1491, -inf
  %1571 = vmax.xlane.f32.xlu0 %v1570
  %v1572 = vpop.xlane.xlu0 %1571
  %v1573 = vsel %vm1566, %v1496, -inf
  %1574 = vmax.xlane.f32.xlu0 %v1573
  %v1575 = vpop.xlane.xlu0 %1574
  %v1576 = vsel %vm1566, %v1499, -inf
  %1577 = vmax.xlane.f32.xlu0 %v1576
  %v1578 = vpop.xlane.xlu0 %1577
  %v1579 = vsel %vm1566, %v1504, -inf
  %1580 = vmax.xlane.f32.xlu0 %v1579
  %v1581 = vpop.xlane.xlu0 %1580
  %v1582 = vsel %vm1566, %v1507, -inf
  %1583 = vmax.xlane.f32.xlu0 %v1582
  %v1584 = vpop.xlane.xlu0 %1583
  %v1585 = vsel %vm1566, %v1512, -inf
  %1586 = vmax.xlane.f32.xlu0 %v1585
  %v1587 = vpop.xlane.xlu0 %1586
  %v1588 = vsel %vm1566, %v1515, -inf
  %1589 = vmax.xlane.f32.xlu0 %v1588
  %v1590 = vpop.xlane.xlu0 %1589
  %v1591 = vsel %vm1566, %v1520, -inf
  %1592 = vmax.xlane.f32.xlu0 %v1591
  %v1593 = vpop.xlane.xlu0 %1592
  %v1594 = vsel %vm1566, %v1523, -inf
  %1595 = vmax.xlane.f32.xlu0 %v1594
  %v1596 = vpop.xlane.xlu0 %1595
  %v1597 = vsel %vm1566, %v1528, -inf
  %1598 = vmax.xlane.f32.xlu0 %v1597
  %v1599 = vpop.xlane.xlu0 %1598
  %v1600 = vsel %vm1566, %v1531, -inf
  %1601 = vmax.xlane.f32.xlu0 %v1600
  %v1602 = vpop.xlane.xlu0 %1601
  %v1603 = vsel %vm1566, %v1536, -inf
  %1604 = vmax.xlane.f32.xlu0 %v1603
  %v1605 = vpop.xlane.xlu0 %1604
  %v1606 = vsel %vm1566, %v1539, -inf
  %1607 = vmax.xlane.f32.xlu0 %v1606
  %v1608 = vpop.xlane.xlu0 %1607
  %v1609 = vsel %vm1566, %v1544, -inf
  %1610 = vmax.xlane.f32.xlu0 %v1609
  %v1611 = vpop.xlane.xlu0 %1610
  %v1612 = vsel %vm1566, %v1547, -inf
  %1613 = vmax.xlane.f32.xlu0 %v1612
  %v1614 = vpop.xlane.xlu0 %1613
  %v1615 = vsub.f32 %v1488, %v1569
  %v1616 = vsub.f32 %v1491, %v1572
  %v1617 = vsub.f32 %v1496, %v1575
  %v1618 = vsub.f32 %v1499, %v1578
  %v1619 = vsub.f32 %v1504, %v1581
  %v1620 = vsub.f32 %v1507, %v1584
  %v1621 = vsub.f32 %v1512, %v1587
  %v1622 = vsub.f32 %v1515, %v1590
  %v1623 = vsub.f32 %v1520, %v1593
  %v1624 = vsub.f32 %v1523, %v1596
  %v1625 = vsub.f32 %v1528, %v1599
  %v1626 = vsub.f32 %v1531, %v1602
  %v1627 = vsub.f32 %v1536, %v1605
  %v1628 = vsub.f32 %v1539, %v1608
  %v1629 = vsub.f32 %v1544, %v1611
  %v1630 = vsub.f32 %v1547, %v1614
  %v1631 = vmul.f32 %v1615, 1.442695
  %v1632 = vpow.pop %v1631
  %v1633 = vmul.f32 %v1616, 1.442695
  %v1634 = vpow.pop %v1633
  %v1635 = vmul.f32 %v1617, 1.442695
  %v1636 = vpow.pop %v1635
  %v1637 = vmul.f32 %v1618, 1.442695
  %v1638 = vpow.pop %v1637
  %v1639 = vmul.f32 %v1619, 1.442695
  %v1640 = vpow.pop %v1639
  %v1641 = vmul.f32 %v1620, 1.442695
  %v1642 = vpow.pop %v1641
  %v1643 = vmul.f32 %v1621, 1.442695
  %v1644 = vpow.pop %v1643
  %v1645 = vmul.f32 %v1622, 1.442695
  %v1646 = vpow.pop %v1645
  %v1647 = vmul.f32 %v1623, 1.442695
  %v1648 = vpow.pop %v1647
  %v1649 = vmul.f32 %v1624, 1.442695
  %v1650 = vpow.pop %v1649
  %v1651 = vmul.f32 %v1625, 1.442695
  %v1652 = vpow.pop %v1651
  %v1653 = vmul.f32 %v1626, 1.442695
  %v1654 = vpow.pop %v1653
  %v1655 = vmul.f32 %v1627, 1.442695
  %v1656 = vpow.pop %v1655
  %v1657 = vmul.f32 %v1628, 1.442695
  %v1658 = vpow.pop %v1657
  %v1659 = vmul.f32 %v1629, 1.442695
  %v1660 = vpow.pop %v1659
  %v1661 = vmul.f32 %v1630, 1.442695
  %v1662 = vpow.pop %v1661
  %v1663 = vsel %vm1566, %v1632, 0.0
  %1664 = vadd.xlane.f32.xlu0 %v1663
  %v1665 = vpop.xlane.xlu0 %1664
  %v1666 = vsel %vm1566, %v1634, 0.0
  %1667 = vadd.xlane.f32.xlu0 %v1666
  %v1668 = vpop.xlane.xlu0 %1667
  %v1669 = vsel %vm1566, %v1636, 0.0
  %1670 = vadd.xlane.f32.xlu0 %v1669
  %v1671 = vpop.xlane.xlu0 %1670
  %v1672 = vsel %vm1566, %v1638, 0.0
  %1673 = vadd.xlane.f32.xlu0 %v1672
  %v1674 = vpop.xlane.xlu0 %1673
  %v1675 = vsel %vm1566, %v1640, 0.0
  %1676 = vadd.xlane.f32.xlu0 %v1675
  %v1677 = vpop.xlane.xlu0 %1676
  %v1678 = vsel %vm1566, %v1642, 0.0
  %1679 = vadd.xlane.f32.xlu0 %v1678
  %v1680 = vpop.xlane.xlu0 %1679
  %v1681 = vsel %vm1566, %v1644, 0.0
  %1682 = vadd.xlane.f32.xlu0 %v1681
  %v1683 = vpop.xlane.xlu0 %1682
  %v1684 = vsel %vm1566, %v1646, 0.0
  %1685 = vadd.xlane.f32.xlu0 %v1684
  %v1686 = vpop.xlane.xlu0 %1685
  %v1687 = vsel %vm1566, %v1648, 0.0
  %1688 = vadd.xlane.f32.xlu0 %v1687
  %v1689 = vpop.xlane.xlu0 %1688
  %v1690 = vsel %vm1566, %v1650, 0.0
  %1691 = vadd.xlane.f32.xlu0 %v1690
  %v1692 = vpop.xlane.xlu0 %1691
  %v1693 = vsel %vm1566, %v1652, 0.0
  %1694 = vadd.xlane.f32.xlu0 %v1693
  %v1695 = vpop.xlane.xlu0 %1694
  %v1696 = vsel %vm1566, %v1654, 0.0
  %1697 = vadd.xlane.f32.xlu0 %v1696
  %v1698 = vpop.xlane.xlu0 %1697
  %v1699 = vsel %vm1566, %v1656, 0.0
  %1700 = vadd.xlane.f32.xlu0 %v1699
  %v1701 = vpop.xlane.xlu0 %1700
  %v1702 = vsel %vm1566, %v1658, 0.0
  %1703 = vadd.xlane.f32.xlu0 %v1702
  %v1704 = vpop.xlane.xlu0 %1703
  %v1705 = vsel %vm1566, %v1660, 0.0
  %1706 = vadd.xlane.f32.xlu0 %v1705
  %v1707 = vpop.xlane.xlu0 %1706
  %v1708 = vsel %vm1566, %v1662, 0.0
  %1709 = vadd.xlane.f32.xlu0 %v1708
  %v1710 = vpop.xlane.xlu0 %1709
  %v1711 = vlog2.pop %v1665
  %v1712 = vmul.f32 %v1711, 0.6931472
  %v1713 = vlog2.pop %v1668
  %v1714 = vmul.f32 %v1713, 0.6931472
  %v1715 = vlog2.pop %v1671
  %v1716 = vmul.f32 %v1715, 0.6931472
  %v1717 = vlog2.pop %v1674
  %v1718 = vmul.f32 %v1717, 0.6931472
  %v1719 = vlog2.pop %v1677
  %v1720 = vmul.f32 %v1719, 0.6931472
  %v1721 = vlog2.pop %v1680
  %v1722 = vmul.f32 %v1721, 0.6931472
  %v1723 = vlog2.pop %v1683
  %v1724 = vmul.f32 %v1723, 0.6931472
  %v1725 = vlog2.pop %v1686
  %v1726 = vmul.f32 %v1725, 0.6931472
  %v1727 = vlog2.pop %v1689
  %v1728 = vmul.f32 %v1727, 0.6931472
  %v1729 = vlog2.pop %v1692
  %v1730 = vmul.f32 %v1729, 0.6931472
  %v1731 = vlog2.pop %v1695
  %v1732 = vmul.f32 %v1731, 0.6931472
  %v1733 = vlog2.pop %v1698
  %v1734 = vmul.f32 %v1733, 0.6931472
  %v1735 = vlog2.pop %v1701
  %v1736 = vmul.f32 %v1735, 0.6931472
  %v1737 = vlog2.pop %v1704
  %v1738 = vmul.f32 %v1737, 0.6931472
  %v1739 = vlog2.pop %v1707
  %v1740 = vmul.f32 %v1739, 0.6931472
  %v1741 = vlog2.pop %v1710
  %v1742 = vmul.f32 %v1741, 0.6931472
  %v1743 = vmul.f32 %v1615, %v1550
  %v1744 = vmul.f32 %v1616, %v1551
  %v1745 = vmul.f32 %v1617, %v1552
  %v1746 = vmul.f32 %v1618, %v1553
  %v1747 = vmul.f32 %v1619, %v1554
  %v1748 = vmul.f32 %v1620, %v1555
  %v1749 = vmul.f32 %v1621, %v1556
  %v1750 = vmul.f32 %v1622, %v1557
  %v1751 = vmul.f32 %v1623, %v1558
  %v1752 = vmul.f32 %v1624, %v1559
  %v1753 = vmul.f32 %v1625, %v1560
  %v1754 = vmul.f32 %v1626, %v1561
  %v1755 = vmul.f32 %v1627, %v1562
  %v1756 = vmul.f32 %v1628, %v1563
  %v1757 = vmul.f32 %v1629, %v1564
  %v1758 = vmul.f32 %v1630, %v1565
  %v1759 = vsel %vm1566, %v1743, 0.0
  %1760 = vadd.xlane.f32.xlu0 %v1759
  %v1761 = vpop.xlane.xlu0 %1760
  %v1762 = vsel %vm1566, %v1744, 0.0
  %1763 = vadd.xlane.f32.xlu0 %v1762
  %v1764 = vpop.xlane.xlu0 %1763
  %v1765 = vsel %vm1566, %v1745, 0.0
  %1766 = vadd.xlane.f32.xlu0 %v1765
  %v1767 = vpop.xlane.xlu0 %1766
  %v1768 = vsel %vm1566, %v1746, 0.0
  %1769 = vadd.xlane.f32.xlu0 %v1768
  %v1770 = vpop.xlane.xlu0 %1769
  %v1771 = vsel %vm1566, %v1747, 0.0
  %1772 = vadd.xlane.f32.xlu0 %v1771
  %v1773 = vpop.xlane.xlu0 %1772
  %v1774 = vsel %vm1566, %v1748, 0.0
  %1775 = vadd.xlane.f32.xlu0 %v1774
  %v1776 = vpop.xlane.xlu0 %1775
  %v1777 = vsel %vm1566, %v1749, 0.0
  %1778 = vadd.xlane.f32.xlu0 %v1777
  %v1779 = vpop.xlane.xlu0 %1778
  %v1780 = vsel %vm1566, %v1750, 0.0
  %1781 = vadd.xlane.f32.xlu0 %v1780
  %v1782 = vpop.xlane.xlu0 %1781
  %v1783 = vsel %vm1566, %v1751, 0.0
  %1784 = vadd.xlane.f32.xlu0 %v1783
  %v1785 = vpop.xlane.xlu0 %1784
  %v1786 = vsel %vm1566, %v1752, 0.0
  %1787 = vadd.xlane.f32.xlu0 %v1786
  %v1788 = vpop.xlane.xlu0 %1787
  %v1789 = vsel %vm1566, %v1753, 0.0
  %1790 = vadd.xlane.f32.xlu0 %v1789
  %v1791 = vpop.xlane.xlu0 %1790
  %v1792 = vsel %vm1566, %v1754, 0.0
  %1793 = vadd.xlane.f32.xlu0 %v1792
  %v1794 = vpop.xlane.xlu0 %1793
  %v1795 = vsel %vm1566, %v1755, 0.0
  %1796 = vadd.xlane.f32.xlu0 %v1795
  %v1797 = vpop.xlane.xlu0 %1796
  %v1798 = vsel %vm1566, %v1756, 0.0
  %1799 = vadd.xlane.f32.xlu0 %v1798
  %v1800 = vpop.xlane.xlu0 %1799
  %v1801 = vsel %vm1566, %v1757, 0.0
  %1802 = vadd.xlane.f32.xlu0 %v1801
  %v1803 = vpop.xlane.xlu0 %1802
  %v1804 = vsel %vm1566, %v1758, 0.0
  %1805 = vadd.xlane.f32.xlu0 %v1804
  %v1806 = vpop.xlane.xlu0 %1805
  %v1807 = vsub.f32 %v1712, %v1761
  %v1808 = vsub.f32 %v1714, %v1764
  %v1809 = vsub.f32 %v1716, %v1767
  %v1810 = vsub.f32 %v1718, %v1770
  %v1811 = vsub.f32 %v1720, %v1773
  %v1812 = vsub.f32 %v1722, %v1776
  %v1813 = vsub.f32 %v1724, %v1779
  %v1814 = vsub.f32 %v1726, %v1782
  %v1815 = vsub.f32 %v1728, %v1785
  %v1816 = vsub.f32 %v1730, %v1788
  %v1817 = vsub.f32 %v1732, %v1791
  %v1818 = vsub.f32 %v1734, %v1794
  %v1819 = vsub.f32 %v1736, %v1797
  %v1820 = vsub.f32 %v1738, %v1800
  %v1821 = vsub.f32 %v1740, %v1803
  %v1822 = vsub.f32 %v1742, %v1806
  %vm1823 = vcmask 7168
  %v1824 = vsel %vm1823, %v1807, 0.0
  %v1825 = vsel %vm1823, %v1808, 0.0
  %v1826 = vadd.f32 %v1824, %v1825
  %v1827 = vsel %vm1823, %v1809, 0.0
  %v1828 = vadd.f32 %v1826, %v1827
  %v1829 = vsel %vm1823, %v1810, 0.0
  %v1830 = vadd.f32 %v1828, %v1829
  %v1831 = vsel %vm1823, %v1811, 0.0
  %v1832 = vadd.f32 %v1830, %v1831
  %v1833 = vsel %vm1823, %v1812, 0.0
  %v1834 = vadd.f32 %v1832, %v1833
  %v1835 = vsel %vm1823, %v1813, 0.0
  %v1836 = vadd.f32 %v1834, %v1835
  %v1837 = vsel %vm1823, %v1814, 0.0
  %v1838 = vadd.f32 %v1836, %v1837
  %v1839 = vsel %vm1823, %v1815, 0.0
  %v1840 = vadd.f32 %v1838, %v1839
  %v1841 = vsel %vm1823, %v1816, 0.0
  %v1842 = vadd.f32 %v1840, %v1841
  %v1843 = vsel %vm1823, %v1817, 0.0
  %v1844 = vadd.f32 %v1842, %v1843
  %v1845 = vsel %vm1823, %v1818, 0.0
  %v1846 = vadd.f32 %v1844, %v1845
  %v1847 = vsel %vm1823, %v1819, 0.0
  %v1848 = vadd.f32 %v1846, %v1847
  %v1849 = vsel %vm1823, %v1820, 0.0
  %v1850 = vadd.f32 %v1848, %v1849
  %v1851 = vsel %vm1823, %v1821, 0.0
  %v1852 = vadd.f32 %v1850, %v1851
  %v1853 = vsel %vm1823, %v1822, 0.0
  %v1854 = vadd.f32 %v1852, %v1853
  %1855 = vadd.xlane.f32.xlu0 %v1854
  %v1856 = vpop.xlane.xlu0 %1855
  %v1857 = vrot.slane %v1856, 4
  %v1858 = vadd.f32 %v1856, %v1857
  %v1859 = vrot.slane %v1858, 2
  %v1860 = vadd.f32 %v1858, %v1859
  %v1861 = vrot.slane %v1860, 1
  %v1862 = vadd.f32 %v1860, %v1861
  %s1863 = vtos %v1862
  %v1864 = vrcp.pop 128.0
  %s1865 = vtos %v1864
  %s1866 = smul.f32 %s1863, %s1865
  %1868 = vset.pattern.permute.xlu0 0
  %1869 = vperm.xlu0 %1868, %v1550
  %v1870 = vpop.permute.xlu0 %1869
  %1873 = vset.pattern.permute.xlu0 0
  %1874 = vperm.xlu0 %1873, %v1551
  %v1875 = vpop.permute.xlu0 %1874
  %1878 = vset.pattern.permute.xlu0 0
  %1879 = vperm.xlu0 %1878, %v1552
  %v1880 = vpop.permute.xlu0 %1879
  %1883 = vset.pattern.permute.xlu0 0
  %1884 = vperm.xlu0 %1883, %v1553
  %v1885 = vpop.permute.xlu0 %1884
  %1888 = vset.pattern.permute.xlu0 0
  %1889 = vperm.xlu0 %1888, %v1554
  %v1890 = vpop.permute.xlu0 %1889
  %1893 = vset.pattern.permute.xlu0 0
  %1894 = vperm.xlu0 %1893, %v1555
  %v1895 = vpop.permute.xlu0 %1894
  %1898 = vset.pattern.permute.xlu0 0
  %1899 = vperm.xlu0 %1898, %v1556
  %v1900 = vpop.permute.xlu0 %1899
  %1903 = vset.pattern.permute.xlu0 0
  %1904 = vperm.xlu0 %1903, %v1557
  %v1905 = vpop.permute.xlu0 %1904
  %1908 = vset.pattern.permute.xlu0 0
  %1909 = vperm.xlu0 %1908, %v1558
  %v1910 = vpop.permute.xlu0 %1909
  %1913 = vset.pattern.permute.xlu0 0
  %1914 = vperm.xlu0 %1913, %v1559
  %v1915 = vpop.permute.xlu0 %1914
  %1918 = vset.pattern.permute.xlu0 0
  %1919 = vperm.xlu0 %1918, %v1560
  %v1920 = vpop.permute.xlu0 %1919
  %1923 = vset.pattern.permute.xlu0 0
  %1924 = vperm.xlu0 %1923, %v1561
  %v1925 = vpop.permute.xlu0 %1924
  %1928 = vset.pattern.permute.xlu0 0
  %1929 = vperm.xlu0 %1928, %v1562
  %v1930 = vpop.permute.xlu0 %1929
  %1933 = vset.pattern.permute.xlu0 0
  %1934 = vperm.xlu0 %1933, %v1563
  %v1935 = vpop.permute.xlu0 %1934
  %1938 = vset.pattern.permute.xlu0 0
  %1939 = vperm.xlu0 %1938, %v1564
  %v1940 = vpop.permute.xlu0 %1939
  %1943 = vset.pattern.permute.xlu0 0
  %1944 = vperm.xlu0 %1943, %v1565
  %v1945 = vpop.permute.xlu0 %1944
  %v1947 = vmul.f32 %v1870, %v1488
  %v1948 = vmul.f32 %v1875, %v1491
  %v1949 = vmul.f32 %v1880, %v1496
  %v1950 = vmul.f32 %v1885, %v1499
  %v1951 = vmul.f32 %v1890, %v1504
  %v1952 = vmul.f32 %v1895, %v1507
  %v1953 = vmul.f32 %v1900, %v1512
  %v1954 = vmul.f32 %v1905, %v1515
  %v1955 = vmul.f32 %v1910, %v1520
  %v1956 = vmul.f32 %v1915, %v1523
  %v1957 = vmul.f32 %v1920, %v1528
  %v1958 = vmul.f32 %v1925, %v1531
  %v1959 = vmul.f32 %v1930, %v1536
  %v1960 = vmul.f32 %v1935, %v1539
  %v1961 = vmul.f32 %v1940, %v1544
  %v1962 = vmul.f32 %v1945, %v1547
  %v1963 = vadd.f32 %v1947, 0.0
  %v1964 = vadd.f32 %v1948, 0.0
  %v1965 = vadd.f32 %v1949, 0.0
  %v1966 = vadd.f32 %v1950, 0.0
  %v1967 = vadd.f32 %v1951, 0.0
  %v1968 = vadd.f32 %v1952, 0.0
  %v1969 = vadd.f32 %v1953, 0.0
  %v1970 = vadd.f32 %v1954, 0.0
  %v1971 = vadd.f32 %v1955, 0.0
  %v1972 = vadd.f32 %v1956, 0.0
  %v1973 = vadd.f32 %v1957, 0.0
  %v1974 = vadd.f32 %v1958, 0.0
  %v1975 = vadd.f32 %v1959, 0.0
  %v1976 = vadd.f32 %v1960, 0.0
  %v1977 = vadd.f32 %v1961, 0.0
  %v1978 = vadd.f32 %v1962, 0.0
  %1979 = vset.pattern.permute.xlu0 1
  %1980 = vperm.xlu0 %1979, %v1550
  %v1981 = vpop.permute.xlu0 %1980
  %1983 = vset.pattern.permute.xlu0 1
  %1984 = vperm.xlu0 %1983, %v1551
  %v1985 = vpop.permute.xlu0 %1984
  %1987 = vset.pattern.permute.xlu0 1
  %1988 = vperm.xlu0 %1987, %v1552
  %v1989 = vpop.permute.xlu0 %1988
  %1991 = vset.pattern.permute.xlu0 1
  %1992 = vperm.xlu0 %1991, %v1553
  %v1993 = vpop.permute.xlu0 %1992
  %1995 = vset.pattern.permute.xlu0 1
  %1996 = vperm.xlu0 %1995, %v1554
  %v1997 = vpop.permute.xlu0 %1996
  %1999 = vset.pattern.permute.xlu0 1
  %2000 = vperm.xlu0 %1999, %v1555
  %v2001 = vpop.permute.xlu0 %2000
  %2003 = vset.pattern.permute.xlu0 1
  %2004 = vperm.xlu0 %2003, %v1556
  %v2005 = vpop.permute.xlu0 %2004
  %2007 = vset.pattern.permute.xlu0 1
  %2008 = vperm.xlu0 %2007, %v1557
  %v2009 = vpop.permute.xlu0 %2008
  %2011 = vset.pattern.permute.xlu0 1
  %2012 = vperm.xlu0 %2011, %v1558
  %v2013 = vpop.permute.xlu0 %2012
  %2015 = vset.pattern.permute.xlu0 1
  %2016 = vperm.xlu0 %2015, %v1559
  %v2017 = vpop.permute.xlu0 %2016
  %2019 = vset.pattern.permute.xlu0 1
  %2020 = vperm.xlu0 %2019, %v1560
  %v2021 = vpop.permute.xlu0 %2020
  %2023 = vset.pattern.permute.xlu0 1
  %2024 = vperm.xlu0 %2023, %v1561
  %v2025 = vpop.permute.xlu0 %2024
  %2027 = vset.pattern.permute.xlu0 1
  %2028 = vperm.xlu0 %2027, %v1562
  %v2029 = vpop.permute.xlu0 %2028
  %2031 = vset.pattern.permute.xlu0 1
  %2032 = vperm.xlu0 %2031, %v1563
  %v2033 = vpop.permute.xlu0 %2032
  %2035 = vset.pattern.permute.xlu0 1
  %2036 = vperm.xlu0 %2035, %v1564
  %v2037 = vpop.permute.xlu0 %2036
  %2039 = vset.pattern.permute.xlu0 1
  %2040 = vperm.xlu0 %2039, %v1565
  %v2041 = vpop.permute.xlu0 %2040
  %v2043 = vmul.f32 %v1981, %v1488
  %v2044 = vmul.f32 %v1985, %v1491
  %v2045 = vmul.f32 %v1989, %v1496
  %v2046 = vmul.f32 %v1993, %v1499
  %v2047 = vmul.f32 %v1997, %v1504
  %v2048 = vmul.f32 %v2001, %v1507
  %v2049 = vmul.f32 %v2005, %v1512
  %v2050 = vmul.f32 %v2009, %v1515
  %v2051 = vmul.f32 %v2013, %v1520
  %v2052 = vmul.f32 %v2017, %v1523
  %v2053 = vmul.f32 %v2021, %v1528
  %v2054 = vmul.f32 %v2025, %v1531
  %v2055 = vmul.f32 %v2029, %v1536
  %v2056 = vmul.f32 %v2033, %v1539
  %v2057 = vmul.f32 %v2037, %v1544
  %v2058 = vmul.f32 %v2041, %v1547
  %2075 = vrot.lane.b32.xlu0 %v2043, 124
  %v2076 = vpop.permute.xlu0 %2075
  %2077 = vrot.lane.b32.xlu0 %v2044, 124
  %v2078 = vpop.permute.xlu0 %2077
  %2079 = vrot.lane.b32.xlu0 %v2045, 124
  %v2080 = vpop.permute.xlu0 %2079
  %2081 = vrot.lane.b32.xlu0 %v2046, 124
  %v2082 = vpop.permute.xlu0 %2081
  %2083 = vrot.lane.b32.xlu0 %v2047, 124
  %v2084 = vpop.permute.xlu0 %2083
  %2085 = vrot.lane.b32.xlu0 %v2048, 124
  %v2086 = vpop.permute.xlu0 %2085
  %2087 = vrot.lane.b32.xlu0 %v2049, 124
  %v2088 = vpop.permute.xlu0 %2087
  %2089 = vrot.lane.b32.xlu0 %v2050, 124
  %v2090 = vpop.permute.xlu0 %2089
  %2091 = vrot.lane.b32.xlu0 %v2051, 124
  %v2092 = vpop.permute.xlu0 %2091
  %2093 = vrot.lane.b32.xlu0 %v2052, 124
  %v2094 = vpop.permute.xlu0 %2093
  %2095 = vrot.lane.b32.xlu0 %v2053, 124
  %v2096 = vpop.permute.xlu0 %2095
  %2097 = vrot.lane.b32.xlu0 %v2054, 124
  %v2098 = vpop.permute.xlu0 %2097
  %2099 = vrot.lane.b32.xlu0 %v2055, 124
  %v2100 = vpop.permute.xlu0 %2099
  %2101 = vrot.lane.b32.xlu0 %v2056, 124
  %v2102 = vpop.permute.xlu0 %2101
  %2103 = vrot.lane.b32.xlu0 %v2057, 124
  %v2104 = vpop.permute.xlu0 %2103
  %2105 = vrot.lane.b32.xlu0 %v2058, 124
  %v2106 = vpop.permute.xlu0 %2105
  %v2123 = vadd.f32 %v1963, %v2076
  %v2124 = vadd.f32 %v1964, %v2078
  %v2125 = vadd.f32 %v1965, %v2080
  %v2126 = vadd.f32 %v1966, %v2082
  %v2127 = vadd.f32 %v1967, %v2084
  %v2128 = vadd.f32 %v1968, %v2086
  %v2129 = vadd.f32 %v1969, %v2088
  %v2130 = vadd.f32 %v1970, %v2090
  %v2131 = vadd.f32 %v1971, %v2092
  %v2132 = vadd.f32 %v1972, %v2094
  %v2133 = vadd.f32 %v1973, %v2096
  %v2134 = vadd.f32 %v1974, %v2098
  %v2135 = vadd.f32 %v1975, %v2100
  %v2136 = vadd.f32 %v1976, %v2102
  %v2137 = vadd.f32 %v1977, %v2104
  %v2138 = vadd.f32 %v1978, %v2106
  %2139 = vset.pattern.permute.xlu0 2
  %2140 = vperm.xlu0 %2139, %v1550
  %v2141 = vpop.permute.xlu0 %2140
  %2143 = vset.pattern.permute.xlu0 2
  %2144 = vperm.xlu0 %2143, %v1551
  %v2145 = vpop.permute.xlu0 %2144
  %2147 = vset.pattern.permute.xlu0 2
  %2148 = vperm.xlu0 %2147, %v1552
  %v2149 = vpop.permute.xlu0 %2148
  %2151 = vset.pattern.permute.xlu0 2
  %2152 = vperm.xlu0 %2151, %v1553
  %v2153 = vpop.permute.xlu0 %2152
  %2155 = vset.pattern.permute.xlu0 2
  %2156 = vperm.xlu0 %2155, %v1554
  %v2157 = vpop.permute.xlu0 %2156
  %2159 = vset.pattern.permute.xlu0 2
  %2160 = vperm.xlu0 %2159, %v1555
  %v2161 = vpop.permute.xlu0 %2160
  %2163 = vset.pattern.permute.xlu0 2
  %2164 = vperm.xlu0 %2163, %v1556
  %v2165 = vpop.permute.xlu0 %2164
  %2167 = vset.pattern.permute.xlu0 2
  %2168 = vperm.xlu0 %2167, %v1557
  %v2169 = vpop.permute.xlu0 %2168
  %2171 = vset.pattern.permute.xlu0 2
  %2172 = vperm.xlu0 %2171, %v1558
  %v2173 = vpop.permute.xlu0 %2172
  %2175 = vset.pattern.permute.xlu0 2
  %2176 = vperm.xlu0 %2175, %v1559
  %v2177 = vpop.permute.xlu0 %2176
  %2179 = vset.pattern.permute.xlu0 2
  %2180 = vperm.xlu0 %2179, %v1560
  %v2181 = vpop.permute.xlu0 %2180
  %2183 = vset.pattern.permute.xlu0 2
  %2184 = vperm.xlu0 %2183, %v1561
  %v2185 = vpop.permute.xlu0 %2184
  %2187 = vset.pattern.permute.xlu0 2
  %2188 = vperm.xlu0 %2187, %v1562
  %v2189 = vpop.permute.xlu0 %2188
  %2191 = vset.pattern.permute.xlu0 2
  %2192 = vperm.xlu0 %2191, %v1563
  %v2193 = vpop.permute.xlu0 %2192
  %2195 = vset.pattern.permute.xlu0 2
  %2196 = vperm.xlu0 %2195, %v1564
  %v2197 = vpop.permute.xlu0 %2196
  %2199 = vset.pattern.permute.xlu0 2
  %2200 = vperm.xlu0 %2199, %v1565
  %v2201 = vpop.permute.xlu0 %2200
  %v2203 = vmul.f32 %v2141, %v1488
  %v2204 = vmul.f32 %v2145, %v1491
  %v2205 = vmul.f32 %v2149, %v1496
  %v2206 = vmul.f32 %v2153, %v1499
  %v2207 = vmul.f32 %v2157, %v1504
  %v2208 = vmul.f32 %v2161, %v1507
  %v2209 = vmul.f32 %v2165, %v1512
  %v2210 = vmul.f32 %v2169, %v1515
  %v2211 = vmul.f32 %v2173, %v1520
  %v2212 = vmul.f32 %v2177, %v1523
  %v2213 = vmul.f32 %v2181, %v1528
  %v2214 = vmul.f32 %v2185, %v1531
  %v2215 = vmul.f32 %v2189, %v1536
  %v2216 = vmul.f32 %v2193, %v1539
  %v2217 = vmul.f32 %v2197, %v1544
  %v2218 = vmul.f32 %v2201, %v1547
  %2235 = vrot.lane.b32.xlu0 %v2203, 120
  %v2236 = vpop.permute.xlu0 %2235
  %2237 = vrot.lane.b32.xlu0 %v2204, 120
  %v2238 = vpop.permute.xlu0 %2237
  %2239 = vrot.lane.b32.xlu0 %v2205, 120
  %v2240 = vpop.permute.xlu0 %2239
  %2241 = vrot.lane.b32.xlu0 %v2206, 120
  %v2242 = vpop.permute.xlu0 %2241
  %2243 = vrot.lane.b32.xlu0 %v2207, 120
  %v2244 = vpop.permute.xlu0 %2243
  %2245 = vrot.lane.b32.xlu0 %v2208, 120
  %v2246 = vpop.permute.xlu0 %2245
  %2247 = vrot.lane.b32.xlu0 %v2209, 120
  %v2248 = vpop.permute.xlu0 %2247
  %2249 = vrot.lane.b32.xlu0 %v2210, 120
  %v2250 = vpop.permute.xlu0 %2249
  %2251 = vrot.lane.b32.xlu0 %v2211, 120
  %v2252 = vpop.permute.xlu0 %2251
  %2253 = vrot.lane.b32.xlu0 %v2212, 120
  %v2254 = vpop.permute.xlu0 %2253
  %2255 = vrot.lane.b32.xlu0 %v2213, 120
  %v2256 = vpop.permute.xlu0 %2255
  %2257 = vrot.lane.b32.xlu0 %v2214, 120
  %v2258 = vpop.permute.xlu0 %2257
  %2259 = vrot.lane.b32.xlu0 %v2215, 120
  %v2260 = vpop.permute.xlu0 %2259
  %2261 = vrot.lane.b32.xlu0 %v2216, 120
  %v2262 = vpop.permute.xlu0 %2261
  %2263 = vrot.lane.b32.xlu0 %v2217, 120
  %v2264 = vpop.permute.xlu0 %2263
  %2265 = vrot.lane.b32.xlu0 %v2218, 120
  %v2266 = vpop.permute.xlu0 %2265
  %v2283 = vadd.f32 %v2123, %v2236
  %v2284 = vadd.f32 %v2124, %v2238
  %v2285 = vadd.f32 %v2125, %v2240
  %v2286 = vadd.f32 %v2126, %v2242
  %v2287 = vadd.f32 %v2127, %v2244
  %v2288 = vadd.f32 %v2128, %v2246
  %v2289 = vadd.f32 %v2129, %v2248
  %v2290 = vadd.f32 %v2130, %v2250
  %v2291 = vadd.f32 %v2131, %v2252
  %v2292 = vadd.f32 %v2132, %v2254
  %v2293 = vadd.f32 %v2133, %v2256
  %v2294 = vadd.f32 %v2134, %v2258
  %v2295 = vadd.f32 %v2135, %v2260
  %v2296 = vadd.f32 %v2136, %v2262
  %v2297 = vadd.f32 %v2137, %v2264
  %v2298 = vadd.f32 %v2138, %v2266
  %v2299 = vsub.f32 %v2283, %v1550
  %v2300 = vsub.f32 %v2284, %v1551
  %v2301 = vsub.f32 %v2285, %v1552
  %v2302 = vsub.f32 %v2286, %v1553
  %v2303 = vsub.f32 %v2287, %v1554
  %v2304 = vsub.f32 %v2288, %v1555
  %v2305 = vsub.f32 %v2289, %v1556
  %v2306 = vsub.f32 %v2290, %v1557
  %v2307 = vsub.f32 %v2291, %v1558
  %v2308 = vsub.f32 %v2292, %v1559
  %v2309 = vsub.f32 %v2293, %v1560
  %v2310 = vsub.f32 %v2294, %v1561
  %v2311 = vsub.f32 %v2295, %v1562
  %v2312 = vsub.f32 %v2296, %v1563
  %v2313 = vsub.f32 %v2297, %v1564
  %v2314 = vsub.f32 %v2298, %v1565
  %2315 = vset.pattern.permute.xlu0 7
  %2316 = vperm.xlu0 %2315, %v1550
  %v2317 = vpop.permute.xlu0 %2316
  %2319 = vset.pattern.permute.xlu0 7
  %2320 = vperm.xlu0 %2319, %v1551
  %v2321 = vpop.permute.xlu0 %2320
  %2323 = vset.pattern.permute.xlu0 7
  %2324 = vperm.xlu0 %2323, %v1552
  %v2325 = vpop.permute.xlu0 %2324
  %2327 = vset.pattern.permute.xlu0 7
  %2328 = vperm.xlu0 %2327, %v1553
  %v2329 = vpop.permute.xlu0 %2328
  %2331 = vset.pattern.permute.xlu0 7
  %2332 = vperm.xlu0 %2331, %v1554
  %v2333 = vpop.permute.xlu0 %2332
  %2335 = vset.pattern.permute.xlu0 7
  %2336 = vperm.xlu0 %2335, %v1555
  %v2337 = vpop.permute.xlu0 %2336
  %2339 = vset.pattern.permute.xlu0 7
  %2340 = vperm.xlu0 %2339, %v1556
  %v2341 = vpop.permute.xlu0 %2340
  %2343 = vset.pattern.permute.xlu0 7
  %2344 = vperm.xlu0 %2343, %v1557
  %v2345 = vpop.permute.xlu0 %2344
  %2347 = vset.pattern.permute.xlu0 7
  %2348 = vperm.xlu0 %2347, %v1558
  %v2349 = vpop.permute.xlu0 %2348
  %2351 = vset.pattern.permute.xlu0 7
  %2352 = vperm.xlu0 %2351, %v1559
  %v2353 = vpop.permute.xlu0 %2352
  %2355 = vset.pattern.permute.xlu0 7
  %2356 = vperm.xlu0 %2355, %v1560
  %v2357 = vpop.permute.xlu0 %2356
  %2359 = vset.pattern.permute.xlu0 7
  %2360 = vperm.xlu0 %2359, %v1561
  %v2361 = vpop.permute.xlu0 %2360
  %2363 = vset.pattern.permute.xlu0 7
  %2364 = vperm.xlu0 %2363, %v1562
  %v2365 = vpop.permute.xlu0 %2364
  %2367 = vset.pattern.permute.xlu0 7
  %2368 = vperm.xlu0 %2367, %v1563
  %v2369 = vpop.permute.xlu0 %2368
  %2371 = vset.pattern.permute.xlu0 7
  %2372 = vperm.xlu0 %2371, %v1564
  %v2373 = vpop.permute.xlu0 %2372
  %2375 = vset.pattern.permute.xlu0 7
  %2376 = vperm.xlu0 %2375, %v1565
  %v2377 = vpop.permute.xlu0 %2376
  %v2379 = vmul.f32 %v2317, %v2299
  %v2380 = vmul.f32 %v2321, %v2300
  %v2381 = vmul.f32 %v2325, %v2301
  %v2382 = vmul.f32 %v2329, %v2302
  %v2383 = vmul.f32 %v2333, %v2303
  %v2384 = vmul.f32 %v2337, %v2304
  %v2385 = vmul.f32 %v2341, %v2305
  %v2386 = vmul.f32 %v2345, %v2306
  %v2387 = vmul.f32 %v2349, %v2307
  %v2388 = vmul.f32 %v2353, %v2308
  %v2389 = vmul.f32 %v2357, %v2309
  %v2390 = vmul.f32 %v2361, %v2310
  %v2391 = vmul.f32 %v2365, %v2311
  %v2392 = vmul.f32 %v2369, %v2312
  %v2393 = vmul.f32 %v2373, %v2313
  %v2394 = vmul.f32 %v2377, %v2314
  %v2395 = vand.u32 2147483647, %v2379
  %v2396 = vand.u32 2147483647, %v2380
  %v2397 = vand.u32 2147483647, %v2381
  %v2398 = vand.u32 2147483647, %v2382
  %v2399 = vand.u32 2147483647, %v2383
  %v2400 = vand.u32 2147483647, %v2384
  %v2401 = vand.u32 2147483647, %v2385
  %v2402 = vand.u32 2147483647, %v2386
  %v2403 = vand.u32 2147483647, %v2387
  %v2404 = vand.u32 2147483647, %v2388
  %v2405 = vand.u32 2147483647, %v2389
  %v2406 = vand.u32 2147483647, %v2390
  %v2407 = vand.u32 2147483647, %v2391
  %v2408 = vand.u32 2147483647, %v2392
  %v2409 = vand.u32 2147483647, %v2393
  %v2410 = vand.u32 2147483647, %v2394
  %vm2411 = vcmp.lt.f32.partialorder %v2395, 1.0
  %vm2412 = vcmp.lt.f32.partialorder %v2396, 1.0
  %vm2413 = vcmp.lt.f32.partialorder %v2397, 1.0
  %vm2414 = vcmp.lt.f32.partialorder %v2398, 1.0
  %vm2415 = vcmp.lt.f32.partialorder %v2399, 1.0
  %vm2416 = vcmp.lt.f32.partialorder %v2400, 1.0
  %vm2417 = vcmp.lt.f32.partialorder %v2401, 1.0
  %vm2418 = vcmp.lt.f32.partialorder %v2402, 1.0
  %vm2419 = vcmp.lt.f32.partialorder %v2403, 1.0
  %vm2420 = vcmp.lt.f32.partialorder %v2404, 1.0
  %vm2421 = vcmp.lt.f32.partialorder %v2405, 1.0
  %vm2422 = vcmp.lt.f32.partialorder %v2406, 1.0
  %vm2423 = vcmp.lt.f32.partialorder %v2407, 1.0
  %vm2424 = vcmp.lt.f32.partialorder %v2408, 1.0
  %vm2425 = vcmp.lt.f32.partialorder %v2409, 1.0
  %vm2426 = vcmp.lt.f32.partialorder %v2410, 1.0
  %v2427 = vsel %vm2411, 1, 0
  %v2428 = vsel %vm2412, 1, 0
  %v2429 = vsel %vm2413, 1, 0
  %v2430 = vsel %vm2414, 1, 0
  %v2431 = vsel %vm2415, 1, 0
  %v2432 = vsel %vm2416, 1, 0
  %v2433 = vsel %vm2417, 1, 0
  %v2434 = vsel %vm2418, 1, 0
  %v2435 = vsel %vm2419, 1, 0
  %v2436 = vsel %vm2420, 1, 0
  %v2437 = vsel %vm2421, 1, 0
  %v2438 = vsel %vm2422, 1, 0
  %v2439 = vsel %vm2423, 1, 0
  %v2440 = vsel %vm2424, 1, 0
  %v2441 = vsel %vm2425, 1, 0
  %v2442 = vsel %vm2426, 1, 0
  %v2443 = vcvt.s32.f32 %v2427
  %v2444 = vcvt.s32.f32 %v2428
  %v2445 = vcvt.s32.f32 %v2429
  %v2446 = vcvt.s32.f32 %v2430
  %v2447 = vcvt.s32.f32 %v2431
  %v2448 = vcvt.s32.f32 %v2432
  %v2449 = vcvt.s32.f32 %v2433
  %v2450 = vcvt.s32.f32 %v2434
  %v2451 = vcvt.s32.f32 %v2435
  %v2452 = vcvt.s32.f32 %v2436
  %v2453 = vcvt.s32.f32 %v2437
  %v2454 = vcvt.s32.f32 %v2438
  %v2455 = vcvt.s32.f32 %v2439
  %v2456 = vcvt.s32.f32 %v2440
  %v2457 = vcvt.s32.f32 %v2441
  %v2458 = vcvt.s32.f32 %v2442
  %v2459 = vmul.f32 %v2443, 0.5
  %v2460 = vmul.f32 %v2444, 0.5
  %v2461 = vmul.f32 %v2445, 0.5
  %v2462 = vmul.f32 %v2446, 0.5
  %v2463 = vmul.f32 %v2447, 0.5
  %v2464 = vmul.f32 %v2448, 0.5
  %v2465 = vmul.f32 %v2449, 0.5
  %v2466 = vmul.f32 %v2450, 0.5
  %v2467 = vmul.f32 %v2451, 0.5
  %v2468 = vmul.f32 %v2452, 0.5
  %v2469 = vmul.f32 %v2453, 0.5
  %v2470 = vmul.f32 %v2454, 0.5
  %v2471 = vmul.f32 %v2455, 0.5
  %v2472 = vmul.f32 %v2456, 0.5
  %v2473 = vmul.f32 %v2457, 0.5
  %v2474 = vmul.f32 %v2458, 0.5
  %v2475 = vmul.f32 %v2459, %v2379
  %v2476 = vmul.f32 %v2460, %v2380
  %v2477 = vmul.f32 %v2461, %v2381
  %v2478 = vmul.f32 %v2462, %v2382
  %v2479 = vmul.f32 %v2463, %v2383
  %v2480 = vmul.f32 %v2464, %v2384
  %v2481 = vmul.f32 %v2465, %v2385
  %v2482 = vmul.f32 %v2466, %v2386
  %v2483 = vmul.f32 %v2467, %v2387
  %v2484 = vmul.f32 %v2468, %v2388
  %v2485 = vmul.f32 %v2469, %v2389
  %v2486 = vmul.f32 %v2470, %v2390
  %v2487 = vmul.f32 %v2471, %v2391
  %v2488 = vmul.f32 %v2472, %v2392
  %v2489 = vmul.f32 %v2473, %v2393
  %v2490 = vmul.f32 %v2474, %v2394
  %v2491 = vmul.f32 %v2475, %v2379
  %v2492 = vmul.f32 %v2476, %v2380
  %v2493 = vmul.f32 %v2477, %v2381
  %v2494 = vmul.f32 %v2478, %v2382
  %v2495 = vmul.f32 %v2479, %v2383
  %v2496 = vmul.f32 %v2480, %v2384
  %v2497 = vmul.f32 %v2481, %v2385
  %v2498 = vmul.f32 %v2482, %v2386
  %v2499 = vmul.f32 %v2483, %v2387
  %v2500 = vmul.f32 %v2484, %v2388
  %v2501 = vmul.f32 %v2485, %v2389
  %v2502 = vmul.f32 %v2486, %v2390
  %v2503 = vmul.f32 %v2487, %v2391
  %v2504 = vmul.f32 %v2488, %v2392
  %v2505 = vmul.f32 %v2489, %v2393
  %v2506 = vmul.f32 %v2490, %v2394
  %v2507 = vsub.f32 1.0, %v2443
  %v2508 = vsub.f32 1.0, %v2444
  %v2509 = vsub.f32 1.0, %v2445
  %v2510 = vsub.f32 1.0, %v2446
  %v2511 = vsub.f32 1.0, %v2447
  %v2512 = vsub.f32 1.0, %v2448
  %v2513 = vsub.f32 1.0, %v2449
  %v2514 = vsub.f32 1.0, %v2450
  %v2515 = vsub.f32 1.0, %v2451
  %v2516 = vsub.f32 1.0, %v2452
  %v2517 = vsub.f32 1.0, %v2453
  %v2518 = vsub.f32 1.0, %v2454
  %v2519 = vsub.f32 1.0, %v2455
  %v2520 = vsub.f32 1.0, %v2456
  %v2521 = vsub.f32 1.0, %v2457
  %v2522 = vsub.f32 1.0, %v2458
  %v2523 = vsub.f32 %v2395, 0.5
  %v2524 = vsub.f32 %v2396, 0.5
  %v2525 = vsub.f32 %v2397, 0.5
  %v2526 = vsub.f32 %v2398, 0.5
  %v2527 = vsub.f32 %v2399, 0.5
  %v2528 = vsub.f32 %v2400, 0.5
  %v2529 = vsub.f32 %v2401, 0.5
  %v2530 = vsub.f32 %v2402, 0.5
  %v2531 = vsub.f32 %v2403, 0.5
  %v2532 = vsub.f32 %v2404, 0.5
  %v2533 = vsub.f32 %v2405, 0.5
  %v2534 = vsub.f32 %v2406, 0.5
  %v2535 = vsub.f32 %v2407, 0.5
  %v2536 = vsub.f32 %v2408, 0.5
  %v2537 = vsub.f32 %v2409, 0.5
  %v2538 = vsub.f32 %v2410, 0.5
  %v2539 = vmul.f32 %v2507, %v2523
  %v2540 = vmul.f32 %v2508, %v2524
  %v2541 = vmul.f32 %v2509, %v2525
  %v2542 = vmul.f32 %v2510, %v2526
  %v2543 = vmul.f32 %v2511, %v2527
  %v2544 = vmul.f32 %v2512, %v2528
  %v2545 = vmul.f32 %v2513, %v2529
  %v2546 = vmul.f32 %v2514, %v2530
  %v2547 = vmul.f32 %v2515, %v2531
  %v2548 = vmul.f32 %v2516, %v2532
  %v2549 = vmul.f32 %v2517, %v2533
  %v2550 = vmul.f32 %v2518, %v2534
  %v2551 = vmul.f32 %v2519, %v2535
  %v2552 = vmul.f32 %v2520, %v2536
  %v2553 = vmul.f32 %v2521, %v2537
  %v2554 = vmul.f32 %v2522, %v2538
  %v2555 = vadd.f32 %v2491, %v2539
  %v2556 = vadd.f32 %v2492, %v2540
  %v2557 = vadd.f32 %v2493, %v2541
  %v2558 = vadd.f32 %v2494, %v2542
  %v2559 = vadd.f32 %v2495, %v2543
  %v2560 = vadd.f32 %v2496, %v2544
  %v2561 = vadd.f32 %v2497, %v2545
  %v2562 = vadd.f32 %v2498, %v2546
  %v2563 = vadd.f32 %v2499, %v2547
  %v2564 = vadd.f32 %v2500, %v2548
  %v2565 = vadd.f32 %v2501, %v2549
  %v2566 = vadd.f32 %v2502, %v2550
  %v2567 = vadd.f32 %v2503, %v2551
  %v2568 = vadd.f32 %v2504, %v2552
  %v2569 = vadd.f32 %v2505, %v2553
  %v2570 = vadd.f32 %v2506, %v2554
  %2587 = vrot.lane.b32.xlu0 %v2555, 125
  %v2588 = vpop.permute.xlu0 %2587
  %2589 = vrot.lane.b32.xlu0 %v2556, 125
  %v2590 = vpop.permute.xlu0 %2589
  %2591 = vrot.lane.b32.xlu0 %v2557, 125
  %v2592 = vpop.permute.xlu0 %2591
  %2593 = vrot.lane.b32.xlu0 %v2558, 125
  %v2594 = vpop.permute.xlu0 %2593
  %2595 = vrot.lane.b32.xlu0 %v2559, 125
  %v2596 = vpop.permute.xlu0 %2595
  %2597 = vrot.lane.b32.xlu0 %v2560, 125
  %v2598 = vpop.permute.xlu0 %2597
  %2599 = vrot.lane.b32.xlu0 %v2561, 125
  %v2600 = vpop.permute.xlu0 %2599
  %2601 = vrot.lane.b32.xlu0 %v2562, 125
  %v2602 = vpop.permute.xlu0 %2601
  %2603 = vrot.lane.b32.xlu0 %v2563, 125
  %v2604 = vpop.permute.xlu0 %2603
  %2605 = vrot.lane.b32.xlu0 %v2564, 125
  %v2606 = vpop.permute.xlu0 %2605
  %2607 = vrot.lane.b32.xlu0 %v2565, 125
  %v2608 = vpop.permute.xlu0 %2607
  %2609 = vrot.lane.b32.xlu0 %v2566, 125
  %v2610 = vpop.permute.xlu0 %2609
  %2611 = vrot.lane.b32.xlu0 %v2567, 125
  %v2612 = vpop.permute.xlu0 %2611
  %2613 = vrot.lane.b32.xlu0 %v2568, 125
  %v2614 = vpop.permute.xlu0 %2613
  %2615 = vrot.lane.b32.xlu0 %v2569, 125
  %v2616 = vpop.permute.xlu0 %2615
  %2617 = vrot.lane.b32.xlu0 %v2570, 125
  %v2618 = vpop.permute.xlu0 %2617
  %vm2635 = vcmask 31744
  %v2636 = vsel %vm2635, %v2588, 0.0
  %v2637 = vsel %vm2635, %v2590, 0.0
  %v2638 = vadd.f32 %v2636, %v2637
  %v2639 = vsel %vm2635, %v2592, 0.0
  %v2640 = vadd.f32 %v2638, %v2639
  %v2641 = vsel %vm2635, %v2594, 0.0
  %v2642 = vadd.f32 %v2640, %v2641
  %v2643 = vsel %vm2635, %v2596, 0.0
  %v2644 = vadd.f32 %v2642, %v2643
  %v2645 = vsel %vm2635, %v2598, 0.0
  %v2646 = vadd.f32 %v2644, %v2645
  %v2647 = vsel %vm2635, %v2600, 0.0
  %v2648 = vadd.f32 %v2646, %v2647
  %v2649 = vsel %vm2635, %v2602, 0.0
  %v2650 = vadd.f32 %v2648, %v2649
  %v2651 = vsel %vm2635, %v2604, 0.0
  %v2652 = vadd.f32 %v2650, %v2651
  %v2653 = vsel %vm2635, %v2606, 0.0
  %v2654 = vadd.f32 %v2652, %v2653
  %v2655 = vsel %vm2635, %v2608, 0.0
  %v2656 = vadd.f32 %v2654, %v2655
  %v2657 = vsel %vm2635, %v2610, 0.0
  %v2658 = vadd.f32 %v2656, %v2657
  %v2659 = vsel %vm2635, %v2612, 0.0
  %v2660 = vadd.f32 %v2658, %v2659
  %v2661 = vsel %vm2635, %v2614, 0.0
  %v2662 = vadd.f32 %v2660, %v2661
  %v2663 = vsel %vm2635, %v2616, 0.0
  %v2664 = vadd.f32 %v2662, %v2663
  %v2665 = vsel %vm2635, %v2618, 0.0
  %v2666 = vadd.f32 %v2664, %v2665
  %2667 = vadd.xlane.f32.xlu0 %v2666
  %v2668 = vpop.xlane.xlu0 %2667
  %v2669 = vrot.slane %v2668, 4
  %v2670 = vadd.f32 %v2668, %v2669
  %v2671 = vrot.slane %v2670, 2
  %v2672 = vadd.f32 %v2670, %v2671
  %v2673 = vrot.slane %v2672, 1
  %v2674 = vadd.f32 %v2672, %v2673
  %s2675 = vtos %v2674
  %v2676 = vrcp.pop 128.0
  %s2677 = vtos %v2676
  %s2678 = smul.f32 %s2675, %s2677
  %v2679 = vlaneseq
  %v2680 = vand.u32 %v2679, 127
  %vm2681 = vcmp.eq.s32.totalorder %v2680, 0
  %v2682 = vstv %s2678
  %v2683 = vstv %s1866
  %v2684 = vsel %vm2681, %v2682, %v2683
  %vm2685 = vcmask 8192
  %2686 = vst.msk [vmem:[%s4] sm:$0x1] %vm2685, %v2684
  // Predicated region
  $region18: #{_faster_rcnn_forward.3} parent=0 // pred_check
    _
  $region19: #{_faster_rcnn_forward.3} parent=0 // pred_check_branch
    %2688 = sbr.rel (0) target = $region21
  $region20: #{_faster_rcnn_forward.3} parent=0 // pred_region
    _
  $region21: #{_faster_rcnn_forward.3} parent=0 // pred_fallthru
    _
  // Predicated region
  $region22: #{_faster_rcnn_forward.3} parent=0 // pred_check
    _
  $region23: #{_faster_rcnn_forward.3} parent=0 // pred_check_branch
    %2690 = sbr.rel (0) target = $region25
  $region24: #{_faster_rcnn_forward.3} parent=0 // pred_region
    _
  $region25: #{_faster_rcnn_forward.3} parent=0 // pred_fallthru
    _

</llo_original>
